<compile_context>
chip_gen: v7x
topology: tpu7x:2x2x1
jax: 0.10.0
libtpu: 0.0.40
codegen_flags: <defaults>
</compile_context>

<pallas_src>
import jax
import jax.numpy as jnp
from jax.experimental import pallas as pl
from jax.experimental.pallas import tpu as pltpu


def _fused_scale_matmul_kernel(scale_ref, x_ref, w_ref, o_ref, acc_ref):
    """acc(HW, tn) += ((x(HW, tk) * scale(1, tk)).astype(w)) @ w(tk, tn).

    scale_ref: (1, tk)   f32 per-input-channel scale slice (lane-major)
    x_ref:     (HW, tk)  f32 activations (HW on sublanes, Cin on lanes)
    w_ref:     (tk, tn)  (bf16) transposed 1x1-conv weight, Cout on lanes
    o_ref:     (HW, tn)  output block (caller dtype), written on last K step
    acc_ref:   (HW, tn)  f32 accumulator scratch, VMEM-resident across K
    """
    k = pl.program_id(1)

    @pl.when(k == 0)
    def _():
        acc_ref[...] = jnp.zeros_like(acc_ref)

    # Scale the small operand in f32 (sublane broadcast of (1, tk) over
    # (HW, tk)), then cast to the weight dtype for the MXU fast path.
    xs = (x_ref[...] * scale_ref[...]).astype(w_ref.dtype)
    acc_ref[...] += jnp.dot(xs, w_ref[...], preferred_element_type=jnp.float32)

    @pl.when(k == pl.num_programs(1) - 1)
    def _():
        o_ref[...] = acc_ref[...].astype(o_ref.dtype)


def _tensorcores_per_device():
    """Best-effort TensorCore count per device (megacore); falls back to 1.

    Uses pltpu.get_tpu_info() instead of device_kind string matching.  A wrong
    answer only changes the grid split (perf), never correctness.
    """
    try:
        info = pltpu.get_tpu_info()
        for name in ("num_cores", "num_cores_per_chip", "cores_per_chip",
                     "num_tensorcores", "tensorcores_per_chip"):
            v = getattr(info, name, None)
            if isinstance(v, int) and v >= 1:
                return v
    except Exception:
        pass
    try:
        v = getattr(jax.devices()[0], "num_cores", None)
        if isinstance(v, int) and v >= 1:
            return v
    except Exception:
        pass
    return 1


def fused_mul_conv1x1(x_nchw, scale_nc11, weight_oihw, *,
                      tk=None, cout_tiles=None, use_bf16=True):
    """x_nchw: (1, Cin, H, W); scale_nc11: (1, Cin, 1, 1); weight: (Cout, Cin, 1, 1)."""
    n, cin, h, w = x_nchw.shape
    cout = weight_oihw.shape[0]
    assert n == 1, "kernel written for batch=1 (as in the reference module)"
    hw = h * w

    # --- Cout (lane / N) split for megacore ---------------------------------
    if cout_tiles is None:
        cores = _tensorcores_per_device()
        # Cout is the lane dimension, so per-tile Cout must be a multiple of
        # 128 (or the full Cout).  640 -> 5 tiles of 128 on multi-core chips.
        if cores >= 2 and cout % 128 == 0 and cout // 128 >= 2:
            cout_tiles = cout // 128
        else:
            cout_tiles = 1
    assert cout % cout_tiles == 0
    tn = cout // cout_tiles
    assert tn == cout or tn % 128 == 0, "per-tile Cout must be lane-aligned"

    # --- K (Cin) tile --------------------------------------------------------
    if tk is None:
        if cout_tiles > 1:
            tk = cin                                   # few, larger steps/core
        else:
            tk = 1280 if cin % 1280 == 0 else cin      # 3 K steps for Cin=3840
    assert cin % tk == 0
    assert tk == cin or tk % 128 == 0, "K tile must be lane-aligned"

    # --- Glue (wrapper-side layout) ------------------------------------------
    # Weight: (Cout, Cin, 1, 1) -> (Cin, Cout); one-time parameter transpose.
    w_mat = weight_oihw.reshape(cout, cin).T
    if use_bf16:
        w_mat = w_mat.astype(jnp.bfloat16)
    # Activations: free view to (Cin, HW), then a cheap ~752 KB XLA transpose
    # so HW sits on sublanes and Cin on lanes.
    x_mat = x_nchw.reshape(cin, hw).T                   # (HW, Cin)
    scale_row = scale_nc11.reshape(1, cin).astype(jnp.float32)

    out_mat = pl.pallas_call(
        _fused_scale_matmul_kernel,
        out_shape=jax.ShapeDtypeStruct((hw, cout), x_nchw.dtype),
        grid_spec=pltpu.PrefetchScalarGridSpec(
            num_scalar_prefetch=0,
            grid=(cout // tn, cin // tk),
            in_specs=[
                pl.BlockSpec((1, tk), lambda j, k: (0, k)),    # scale (f32)
                pl.BlockSpec((hw, tk), lambda j, k: (0, k)),   # activations
                pl.BlockSpec((tk, tn), lambda j, k: (k, j)),   # weights
            ],
            out_specs=pl.BlockSpec((hw, tn), lambda j, k: (0, j)),
            scratch_shapes=[pltpu.VMEM((hw, tn), jnp.float32)],
        ),
        compiler_params=pltpu.CompilerParams(
            dimension_semantics=("parallel", "arbitrary"),
            vmem_limit_bytes=32 * 1024 * 1024,
        ),
    )(scale_row, x_mat, w_mat)

    # Small (160 KB) transpose back to NCHW.
    return out_mat.T.reshape(1, cout, h, w)


if __name__ == "__main__":
    key = jax.random.PRNGKey(0)
    k1, k2, k3 = jax.random.split(key, 3)

    # Shapes implied by the module's forward.
    CIN, COUT, H, W = 3840, 640, 7, 7

    x1011 = jax.random.normal(k1, (1, CIN, H, W), dtype=jnp.float32)
    x1016 = jax.random.normal(k2, (1, CIN, 1, 1), dtype=jnp.float32)
    # Deterministic synthetic conv weight (Conv2d(3840, 640, 1, bias=False)).
    conv_w = (jax.random.normal(k3, (COUT, CIN, 1, 1), dtype=jnp.float32)
              * (1.0 / jnp.sqrt(CIN)))

    fn = jax.jit(fused_mul_conv1x1)
    out = jax.block_until_ready(fn(x1011, x1016, conv_w))
    assert out.shape == (1, COUT, H, W)
    assert out.dtype == x1011.dtype

    # Reference 1: same bf16 quantization as the kernel's MXU path (tight).
    scaled = (x1016 * x1011).reshape(CIN, H * W)                   # (Cin, HW) f32
    w2d = conv_w.reshape(COUT, CIN)                                # (Cout, Cin)
    xs_bf = scaled.T.astype(jnp.bfloat16).astype(jnp.float32)      # (HW, Cin)
    w_bf = w2d.T.astype(jnp.bfloat16).astype(jnp.float32)          # (Cin, Cout)
    ref_bf = (xs_bf @ w_bf).T.reshape(1, COUT, H, W)
    assert jnp.allclose(out, ref_bf, atol=2e-3, rtol=2e-3)

    # Reference 2: full-f32 math of the original module (loose, bf16 error).
    ref_f32 = (w2d @ scaled).reshape(1, COUT, H, W)
    assert jnp.allclose(out, ref_f32, atol=5e-2, rtol=5e-2)

    print("KERNEL_OK")
</pallas_src>

<mosaic_0001>
module attributes {stable_mosaic.version = 11 : i64} {
  func.func @_fused_scale_matmul_kernel(%arg0: i32, %arg1: i32, %arg2: memref<1x1280xf32, #tpu.memory_space<vmem>>, %arg3: memref<49x1280xf32, #tpu.memory_space<vmem>>, %arg4: memref<1280x640xbf16, #tpu.memory_space<vmem>>, %arg5: memref<49x640xf32, #tpu.memory_space<vmem>>, %arg6: memref<49x640xf32, #tpu.memory_space<vmem>>) attributes {dimension_semantics = [#tpu.dimension_semantics<parallel>, #tpu.dimension_semantics<arbitrary>], iteration_bounds = array<i64: 1, 3>, scalar_prefetch = 0 : i64, scratch_operands = 1 : i64, tpu.core_type = #tpu.core_type<tc>, window_params = [{transform_indices = @transform_0, window_bounds = array<i64: 1, 1280>}, {transform_indices = @transform_1, window_bounds = array<i64: 49, 1280>}, {transform_indices = @transform_2, window_bounds = array<i64: 1280, 640>}, {transform_indices = @transform_3, window_bounds = array<i64: 49, 640>}]} {
    %c0_i32 = arith.constant 0 : i32
    %0 = arith.cmpi eq, %arg1, %c0_i32 : i32
    %1 = arith.extui %0 : i1 to i32
    %c0_i32_0 = arith.constant 0 : i32
    %2 = arith.cmpi ne, %1, %c0_i32_0 : i32
    scf.if %2 {
      %cst_11 = arith.constant 0.000000e+00 : f32
      %16 = vector.broadcast %cst_11 : f32 to vector<49x640xf32>
      %c0_12 = arith.constant 0 : index
      %c0_13 = arith.constant 0 : index
      %17 = vector.load %arg6[%c0_12, %c0_13] : memref<49x640xf32, #tpu.memory_space<vmem>>, vector<49x640xf32>
      tpu.vector_store %arg6[%c0_12, %c0_13], %16 {strides = array<i32>} : memref<49x640xf32, #tpu.memory_space<vmem>>, vector<49x640xf32>,
    } else {
    }
    %c0 = arith.constant 0 : index
    %c0_1 = arith.constant 0 : index
    %3 = vector.load %arg3[%c0, %c0_1] : memref<49x1280xf32, #tpu.memory_space<vmem>>, vector<49x1280xf32>
    %c0_2 = arith.constant 0 : index
    %c0_3 = arith.constant 0 : index
    %4 = vector.load %arg2[%c0_2, %c0_3] : memref<1x1280xf32, #tpu.memory_space<vmem>>, vector<1x1280xf32>
    %5 = vector.broadcast %4 : vector<1x1280xf32> to vector<49x1280xf32>
    %6 = arith.mulf %3, %5 : vector<49x1280xf32>
    %7 = arith.truncf %6 : vector<49x1280xf32> to vector<49x1280xbf16>
    %c0_4 = arith.constant 0 : index
    %c0_5 = arith.constant 0 : index
    %8 = vector.load %arg6[%c0_4, %c0_5] : memref<49x640xf32, #tpu.memory_space<vmem>>, vector<49x640xf32>
    %c0_6 = arith.constant 0 : index
    %c0_7 = arith.constant 0 : index
    %9 = vector.load %arg4[%c0_6, %c0_7] : memref<1280x640xbf16, #tpu.memory_space<vmem>>, vector<1280x640xbf16>
    %cst = arith.constant dense<0.000000e+00> : vector<49x640xf32>
    %10 = tpu.matmul %7, %9, %cst {dimension_numbers = #tpu.dot_dimension_numbers<[1], [0], [0], [1], [0, 0, 1, 1], [], []>} : vector<49x1280xbf16>, vector<1280x640xbf16>, vector<49x640xf32> -> vector<49x640xf32>
    %11 = arith.addf %8, %10 : vector<49x640xf32>
    %c0_8 = arith.constant 0 : index
    %c0_9 = arith.constant 0 : index
    %12 = vector.load %arg6[%c0_8, %c0_9] : memref<49x640xf32, #tpu.memory_space<vmem>>, vector<49x640xf32>
    tpu.vector_store %arg6[%c0_8, %c0_9], %11 {strides = array<i32>} : memref<49x640xf32, #tpu.memory_space<vmem>>, vector<49x640xf32>,
    %c2_i32 = arith.constant 2 : i32
    %13 = arith.cmpi eq, %arg1, %c2_i32 : i32
    %14 = arith.extui %13 : i1 to i32
    %c0_i32_10 = arith.constant 0 : i32
    %15 = arith.cmpi ne, %14, %c0_i32_10 : i32
    scf.if %15 {
      %c0_11 = arith.constant 0 : index
      %c0_12 = arith.constant 0 : index
      %16 = vector.load %arg6[%c0_11, %c0_12] : memref<49x640xf32, #tpu.memory_space<vmem>>, vector<49x640xf32>
      %c0_13 = arith.constant 0 : index
      %c0_14 = arith.constant 0 : index
      %17 = vector.load %arg5[%c0_13, %c0_14] : memref<49x640xf32, #tpu.memory_space<vmem>>, vector<49x640xf32>
      tpu.vector_store %arg5[%c0_13, %c0_14], %16 {strides = array<i32>} : memref<49x640xf32, #tpu.memory_space<vmem>>, vector<49x640xf32>,
    } else {
    }
    return
  }
  func.func @transform_0(%arg0: i32, %arg1: i32) -> (i32, i32) {
    %c0_i32 = arith.constant 0 : i32
    %c0_i32_0 = arith.constant 0 : i32
    return %c0_i32, %arg1 : i32, i32
  }
  func.func @transform_1(%arg0: i32, %arg1: i32) -> (i32, i32) {
    %c0_i32 = arith.constant 0 : i32
    %c0_i32_0 = arith.constant 0 : i32
    return %c0_i32, %arg1 : i32, i32
  }
  func.func @transform_2(%arg0: i32, %arg1: i32) -> (i32, i32) {
    %c0_i32 = arith.constant 0 : i32
    return %arg1, %arg0 : i32, i32
  }
  func.func @transform_3(%arg0: i32, %arg1: i32) -> (i32, i32) {
    %c0_i32 = arith.constant 0 : i32
    %c0_i32_0 = arith.constant 0 : i32
    return %c0_i32, %arg0 : i32, i32
  }
}

</mosaic_0001>

<llo_original>
// kernel: fused_mul_conv1x1.1
$region0: #{fused_mul_conv1x1.1}
  #allocation0 [shape = 'u32[]', space=smem, size = 0x4, offset = 0x4, fixed_abs, tag = 'smem constant byte address 0x4 - core index']
  #allocation1 [shape = 'u32[144,128]{1,0:T(1,128)}', space=vmem, size = 0x12000, scoped, tag = 'internal scratch']
  #allocation2 [shape = 'f32[49,640]{1,0:T(8,128)}', space=vmem, size = 0x23000, scoped, tag = 'scratch operand']
  %s0 = inlined_call_operand.vmem [shape: f32[1,3840], index: 0, kind: input, shape index: {}]
  %s1 = inlined_call_operand.vmem [shape: f32[49,3840], index: 1, kind: input, shape index: {}]
  %s2 = inlined_call_operand.vmem [shape: bf16[3840,640], index: 2, kind: input, shape index: {}]
  %s3 = inlined_call_operand.vmem [shape: f32[49,640], index: 3, kind: output, shape index: {}]
  %s4 = sld [smem:[#allocation0]]
  $region76: #{fused_mul_conv1x1.1} parent=0
    _
  %s6 = ssub.s32 1, %s4
  %s7 = scalar_select 0, %s6, %s4
  $region1: #{fused_mul_conv1x1.1} parent=0
    #allocation3 [shape = 'u8[573440]{0}', space=vmem, size = 0x8c000, scoped, tag = 'input window, operand 1']
    loop: start=0, step=1, limit=5
    $region2: #{fused_mul_conv1x1.1} parent=1 // loop_pre_header
      _
    $region3: #{fused_mul_conv1x1.1} parent=1 // loop_header
      %s9 = sphi 0, %s13
      %p10 = scmp.ge.s32.totalorder %s9, 5
      %s16 = sphi 0, %s28
      %s17 = sphi 0, %s24
      %s18 = sphi 0, %s16
      %s19 = sphi 0, %s17
      %s20 = sphi 0, %s18
      %s21 = sphi 0, %s19
      %s31 = sphi 0, %s33
      %s34 = sphi 0, %s31
      %s35 = sphi 0, %s34
      %s51 = sphi 0, %s35
      %s57 = sphi 0, %s59
      %s60 = sphi 0, %s57
      %s61 = sphi 0, %s60
      %s77 = sphi 0, %s61
      %s85 = sphi 0, %s87
      %s88 = sphi 0, %s85
      %s89 = sphi 0, %s88
      %s105 = sphi 0, %s89
      %s111 = sphi 0, %s113
      %s114 = sphi 0, %s111
      %s115 = sphi 0, %s114
      %s131 = sphi 0, %s115
    $region4: #{fused_mul_conv1x1.1} parent=1 // loop_header_branch
      %12 = sbr.rel (%p10) target = $region8
    $region5: #{fused_mul_conv1x1.1} parent=1 // loop_body
      %s14 = ssub.s32 %s9, 1
      %s15 = ssub.s32 %s9, 2
      %s22 = sadd.s32 1, %s17
      %p23 = scmp.ge.s32.totalorder %s22, 3
      %s24 = scalar_select %p23, 0, %s22
      %s25 = sadd.s32 1, %s16
      %s26 = scalar_select %p23, %s25, %s16
      %p27 = scmp.ge.s32.totalorder %s26, 1
      %s28 = scalar_select %p27, 0, %s26
      %s29 = ssub.s32 %s17, %s24
      %p30 = scmp.eq.s32.totalorder %s29, 0
      %s32 = sadd.s32 %s31, 1
      %s33 = scalar_select %p30, %s31, %s32
      %p36 = pneg %p30
      %p37 = scmp.eq.s32.totalorder %s9, 2
      %p38 = por %p36, %p37
      %p39 = scmp.ne.s32.totalorder %s31, %s34
      %p40 = scmp.eq.s32.totalorder %s9, 0
      %p41 = por %p39, %p40
      %p42 = scmp.ne.s32.totalorder %s31, %s34
      %p43 = scmp.eq.s32.totalorder %s14, 2
      %p44 = por %p42, %p43
      %p45 = scmp.ne.s32.totalorder %s34, %s35
      %p46 = scmp.eq.s32.totalorder %s14, 0
      %p47 = por %p45, %p46
      %p48 = scmp.ne.s32.totalorder %s34, %s35
      %p49 = scmp.eq.s32.totalorder %s15, 2
      %p50 = por %p48, %p49
      %p52 = scmp.ne.s32.totalorder %s35, %s51
      %p53 = scmp.eq.s32.totalorder %s15, 0
      %p54 = por %p52, %p53
      %s55 = ssub.s32 %s17, %s24
      %p56 = scmp.eq.s32.totalorder %s55, 0
      %s58 = sadd.s32 %s57, 1
      %s59 = scalar_select %p56, %s57, %s58
      %p62 = pneg %p56
      %p63 = scmp.eq.s32.totalorder %s9, 2
      %p64 = por %p62, %p63
      %p65 = scmp.ne.s32.totalorder %s57, %s60
      %p66 = scmp.eq.s32.totalorder %s9, 0
      %p67 = por %p65, %p66
      %p68 = scmp.ne.s32.totalorder %s57, %s60
      %p69 = scmp.eq.s32.totalorder %s14, 2
      %p70 = por %p68, %p69
      %p71 = scmp.ne.s32.totalorder %s60, %s61
      %p72 = scmp.eq.s32.totalorder %s14, 0
      %p73 = por %p71, %p72
      %p74 = scmp.ne.s32.totalorder %s60, %s61
      %p75 = scmp.eq.s32.totalorder %s15, 2
      %p76 = por %p74, %p75
      %p78 = scmp.ne.s32.totalorder %s61, %s77
      %p79 = scmp.eq.s32.totalorder %s15, 0
      %p80 = por %p78, %p79
      %s81 = ssub.s32 %s17, %s24
      %s82 = ssub.s32 %s16, %s28
      %s83 = sor.u32 %s81, %s82
      %p84 = scmp.eq.s32.totalorder %s83, 0
      %s86 = sadd.s32 %s85, 1
      %s87 = scalar_select %p84, %s85, %s86
      %p90 = pneg %p84
      %p91 = scmp.eq.s32.totalorder %s9, 2
      %p92 = por %p90, %p91
      %p93 = scmp.ne.s32.totalorder %s85, %s88
      %p94 = scmp.eq.s32.totalorder %s9, 0
      %p95 = por %p93, %p94
      %p96 = scmp.ne.s32.totalorder %s85, %s88
      %p97 = scmp.eq.s32.totalorder %s14, 2
      %p98 = por %p96, %p97
      %p99 = scmp.ne.s32.totalorder %s88, %s89
      %p100 = scmp.eq.s32.totalorder %s14, 0
      %p101 = por %p99, %p100
      %p102 = scmp.ne.s32.totalorder %s88, %s89
      %p103 = scmp.eq.s32.totalorder %s15, 2
      %p104 = por %p102, %p103
      %p106 = scmp.ne.s32.totalorder %s89, %s105
      %p107 = scmp.eq.s32.totalorder %s15, 0
      %p108 = por %p106, %p107
      %s109 = ssub.s32 %s16, %s28
      %p110 = scmp.eq.s32.totalorder %s109, 0
      %s112 = sadd.s32 %s111, 1
      %s113 = scalar_select %p110, %s111, %s112
      %p116 = pneg %p110
      %p117 = scmp.eq.s32.totalorder %s9, 2
      %p118 = por %p116, %p117
      %p119 = scmp.ne.s32.totalorder %s111, %s114
      %p120 = scmp.eq.s32.totalorder %s9, 0
      %p121 = por %p119, %p120
      %p122 = scmp.ne.s32.totalorder %s111, %s114
      %p123 = scmp.eq.s32.totalorder %s14, 2
      %p124 = por %p122, %p123
      %p125 = scmp.ne.s32.totalorder %s114, %s115
      %p126 = scmp.eq.s32.totalorder %s14, 0
      %p127 = por %p125, %p126
      %p128 = scmp.ne.s32.totalorder %s114, %s115
      %p129 = scmp.eq.s32.totalorder %s15, 2
      %p130 = por %p128, %p129
      %p132 = scmp.ne.s32.totalorder %s115, %s131
      %p133 = scmp.eq.s32.totalorder %s15, 0
      %p134 = por %p132, %p133
      %p135 = scmp.le.s32.totalorder 1, %s9
      %p136 = scmp.lt.s32.totalorder %s9, 4
      %p137 = pnand %p135, %p136
      %p138 = pneg %p137
      // Predicated region
      $region9: #{fused_mul_conv1x1.1} parent=5 // pred_check
        _
      $region10: #{fused_mul_conv1x1.1} parent=5 // pred_check_branch
        %140 = sbr.rel (%p137) target = $region12
      $region11: #{fused_mul_conv1x1.1} parent=5 // pred_region
        %s141 = ssub.s32 %s9, 1
      $region12: #{fused_mul_conv1x1.1} parent=5 // pred_fallthru
        _
      %p142 = scmp.lt.s32.totalorder %s9, 3
      // Predicated region
      $region13: #{fused_mul_conv1x1.1} parent=5 // pred_check
        %p143 = pneg %p142
      $region14: #{fused_mul_conv1x1.1} parent=5 // pred_check_branch
        %145 = sbr.rel (%p143) target = $region16
      $region15: #{fused_mul_conv1x1.1} parent=5 // pred_region
        // Predicated region
        $region17: #{fused_mul_conv1x1.1} parent=15 // pred_check
          %p146 = pneg %p41
        $region18: #{fused_mul_conv1x1.1} parent=15 // pred_check_branch
          %148 = sbr.rel (%p146) target = $region20
        $region19: #{fused_mul_conv1x1.1} parent=15 // pred_region
          %s149 = smul.u32 10, %s17
          %p150 = scmp.lt.s32.totalorder %s149, 29
          %s151 = scalar_select %p150, %s149, 29
          %s152 = scalar_lea.vmem %s0, %s151
          %s153 = smul.u32 10, %s17
        $region20: #{fused_mul_conv1x1.1} parent=15 // pred_fallthru
          _
        // Predicated region
        $region21: #{fused_mul_conv1x1.1} parent=15 // pred_check
          %p154 = pneg %p67
        $region22: #{fused_mul_conv1x1.1} parent=15 // pred_check_branch
          %156 = sbr.rel (%p154) target = $region24
        $region23: #{fused_mul_conv1x1.1} parent=15 // pred_region
          %s157 = sand.u32 %s57, 1
          %s158 = sand.u32 %s57, 1
          %s159 = smul.addr %s158, 560
          %s160 = scalar_lea.vmem [#allocation3], %s159
          %s161 = smul.u32 10, %s17
          %s162 = smul.addr %s161, 8
          %s163 = scalar_lea.vmem %s1, %s162
          // Predicated region
          $region25: #{fused_mul_conv1x1.1} parent=23 // pred_check
            _
          $region26: #{fused_mul_conv1x1.1} parent=23 // pred_check_branch
            %165 = sbr.rel (0) target = $region28
          $region27: #{fused_mul_conv1x1.1} parent=23 // pred_region
            // Predicated region
            $region29: #{fused_mul_conv1x1.1} parent=27 // pred_check
              _
            $region30: #{fused_mul_conv1x1.1} parent=27 // pred_check_branch
              %167 = sbr.rel (0) target = $region32
            $region31: #{fused_mul_conv1x1.1} parent=27 // pred_region
              loop: start=0, step=1, limit=1
              $region33: #{fused_mul_conv1x1.1} parent=31 // loop_pre_header
                _
              $region34: #{fused_mul_conv1x1.1} parent=31 // loop_header
                %s169 = sphi 0, %s173
                %p170 = scmp.ge.s32.totalorder %s169, 1
                %s174 = sphi %s163, %s163
                %s175 = sphi %s160, %s160
              $region35: #{fused_mul_conv1x1.1} parent=31 // loop_header_branch
                %172 = sbr.rel (%p170) target = $region39
              $region36: #{fused_mul_conv1x1.1} parent=31 // loop_body
                %v176 = vld [vmem:[%s174] sm:$0xff]
                %177 = vst [vmem:[%s175] sm:$0xff] %v176
                %v178 = vld [vmem:[%s174 + $0x8] sm:$0xff]
                %179 = vst [vmem:[%s175 + $0x8] sm:$0xff] %v178
                %v180 = vld [vmem:[%s174 + $0x10] sm:$0xff]
                %181 = vst [vmem:[%s175 + $0x10] sm:$0xff] %v180
                %v182 = vld [vmem:[%s174 + $0x18] sm:$0xff]
                %183 = vst [vmem:[%s175 + $0x18] sm:$0xff] %v182
                %v184 = vld [vmem:[%s174 + $0x20] sm:$0xff]
                %185 = vst [vmem:[%s175 + $0x20] sm:$0xff] %v184
                %v186 = vld [vmem:[%s174 + $0x28] sm:$0xff]
                %187 = vst [vmem:[%s175 + $0x28] sm:$0xff] %v186
                %v188 = vld [vmem:[%s174 + $0x30] sm:$0xff]
                %189 = vst [vmem:[%s175 + $0x30] sm:$0xff] %v188
                %v190 = vld [vmem:[%s174 + $0x38] sm:$0xff]
                %191 = vst [vmem:[%s175 + $0x38] sm:$0xff] %v190
                %v192 = vld [vmem:[%s174 + $0x40] sm:$0xff]
                %193 = vst [vmem:[%s175 + $0x40] sm:$0xff] %v192
                %v194 = vld [vmem:[%s174 + $0x48] sm:$0xff]
                %195 = vst [vmem:[%s175 + $0x48] sm:$0xff] %v194
                %v196 = vld [vmem:[%s174 + $0xf0] sm:$0xff]
                %197 = vst [vmem:[%s175 + $0x50] sm:$0xff] %v196
                %v198 = vld [vmem:[%s174 + $0xf8] sm:$0xff]
                %199 = vst [vmem:[%s175 + $0x58] sm:$0xff] %v198
                %v200 = vld [vmem:[%s174 + $0x100] sm:$0xff]
                %201 = vst [vmem:[%s175 + $0x60] sm:$0xff] %v200
                %v202 = vld [vmem:[%s174 + $0x108] sm:$0xff]
                %203 = vst [vmem:[%s175 + $0x68] sm:$0xff] %v202
                %v204 = vld [vmem:[%s174 + $0x110] sm:$0xff]
                %205 = vst [vmem:[%s175 + $0x70] sm:$0xff] %v204
                %v206 = vld [vmem:[%s174 + $0x118] sm:$0xff]
                %207 = vst [vmem:[%s175 + $0x78] sm:$0xff] %v206
                %v208 = vld [vmem:[%s174 + $0x120] sm:$0xff]
                %209 = vst [vmem:[%s175 + $0x80] sm:$0xff] %v208
                %v210 = vld [vmem:[%s174 + $0x128] sm:$0xff]
                %211 = vst [vmem:[%s175 + $0x88] sm:$0xff] %v210
                %v212 = vld [vmem:[%s174 + $0x130] sm:$0xff]
                %213 = vst [vmem:[%s175 + $0x90] sm:$0xff] %v212
                %v214 = vld [vmem:[%s174 + $0x138] sm:$0xff]
                %215 = vst [vmem:[%s175 + $0x98] sm:$0xff] %v214
                %v216 = vld [vmem:[%s174 + $0x1e0] sm:$0xff]
                %217 = vst [vmem:[%s175 + $0xa0] sm:$0xff] %v216
                %v218 = vld [vmem:[%s174 + $0x1e8] sm:$0xff]
                %219 = vst [vmem:[%s175 + $0xa8] sm:$0xff] %v218
                %v220 = vld [vmem:[%s174 + $0x1f0] sm:$0xff]
                %221 = vst [vmem:[%s175 + $0xb0] sm:$0xff] %v220
                %v222 = vld [vmem:[%s174 + $0x1f8] sm:$0xff]
                %223 = vst [vmem:[%s175 + $0xb8] sm:$0xff] %v222
                %v224 = vld [vmem:[%s174 + $0x200] sm:$0xff]
                %225 = vst [vmem:[%s175 + $0xc0] sm:$0xff] %v224
                %v226 = vld [vmem:[%s174 + $0x208] sm:$0xff]
                %227 = vst [vmem:[%s175 + $0xc8] sm:$0xff] %v226
                %v228 = vld [vmem:[%s174 + $0x210] sm:$0xff]
                %229 = vst [vmem:[%s175 + $0xd0] sm:$0xff] %v228
                %v230 = vld [vmem:[%s174 + $0x218] sm:$0xff]
                %231 = vst [vmem:[%s175 + $0xd8] sm:$0xff] %v230
                %v232 = vld [vmem:[%s174 + $0x220] sm:$0xff]
                %233 = vst [vmem:[%s175 + $0xe0] sm:$0xff] %v232
                %v234 = vld [vmem:[%s174 + $0x228] sm:$0xff]
                %235 = vst [vmem:[%s175 + $0xe8] sm:$0xff] %v234
                %v236 = vld [vmem:[%s174 + $0x2d0] sm:$0xff]
                %237 = vst [vmem:[%s175 + $0xf0] sm:$0xff] %v236
                %v238 = vld [vmem:[%s174 + $0x2d8] sm:$0xff]
                %239 = vst [vmem:[%s175 + $0xf8] sm:$0xff] %v238
                %v240 = vld [vmem:[%s174 + $0x2e0] sm:$0xff]
                %241 = vst [vmem:[%s175 + $0x100] sm:$0xff] %v240
                %v242 = vld [vmem:[%s174 + $0x2e8] sm:$0xff]
                %243 = vst [vmem:[%s175 + $0x108] sm:$0xff] %v242
                %v244 = vld [vmem:[%s174 + $0x2f0] sm:$0xff]
                %245 = vst [vmem:[%s175 + $0x110] sm:$0xff] %v244
                %v246 = vld [vmem:[%s174 + $0x2f8] sm:$0xff]
                %247 = vst [vmem:[%s175 + $0x118] sm:$0xff] %v246
                %v248 = vld [vmem:[%s174 + $0x300] sm:$0xff]
                %249 = vst [vmem:[%s175 + $0x120] sm:$0xff] %v248
                %v250 = vld [vmem:[%s174 + $0x308] sm:$0xff]
                %251 = vst [vmem:[%s175 + $0x128] sm:$0xff] %v250
                %v252 = vld [vmem:[%s174 + $0x310] sm:$0xff]
                %253 = vst [vmem:[%s175 + $0x130] sm:$0xff] %v252
                %v254 = vld [vmem:[%s174 + $0x318] sm:$0xff]
                %255 = vst [vmem:[%s175 + $0x138] sm:$0xff] %v254
                %v256 = vld [vmem:[%s174 + $0x3c0] sm:$0xff]
                %257 = vst [vmem:[%s175 + $0x140] sm:$0xff] %v256
                %v258 = vld [vmem:[%s174 + $0x3c8] sm:$0xff]
                %259 = vst [vmem:[%s175 + $0x148] sm:$0xff] %v258
                %v260 = vld [vmem:[%s174 + $0x3d0] sm:$0xff]
                %261 = vst [vmem:[%s175 + $0x150] sm:$0xff] %v260
                %v262 = vld [vmem:[%s174 + $0x3d8] sm:$0xff]
                %263 = vst [vmem:[%s175 + $0x158] sm:$0xff] %v262
                %v264 = vld [vmem:[%s174 + $0x3e0] sm:$0xff]
                %265 = vst [vmem:[%s175 + $0x160] sm:$0xff] %v264
                %v266 = vld [vmem:[%s174 + $0x3e8] sm:$0xff]
                %267 = vst [vmem:[%s175 + $0x168] sm:$0xff] %v266
                %v268 = vld [vmem:[%s174 + $0x3f0] sm:$0xff]
                %269 = vst [vmem:[%s175 + $0x170] sm:$0xff] %v268
                %v270 = vld [vmem:[%s174 + $0x3f8] sm:$0xff]
                %271 = vst [vmem:[%s175 + $0x178] sm:$0xff] %v270
                %v272 = vld [vmem:[%s174 + $0x400] sm:$0xff]
                %273 = vst [vmem:[%s175 + $0x180] sm:$0xff] %v272
                %v274 = vld [vmem:[%s174 + $0x408] sm:$0xff]
                %275 = vst [vmem:[%s175 + $0x188] sm:$0xff] %v274
                %v276 = vld [vmem:[%s174 + $0x4b0] sm:$0xff]
                %277 = vst [vmem:[%s175 + $0x190] sm:$0xff] %v276
                %v278 = vld [vmem:[%s174 + $0x4b8] sm:$0xff]
                %279 = vst [vmem:[%s175 + $0x198] sm:$0xff] %v278
                %v280 = vld [vmem:[%s174 + $0x4c0] sm:$0xff]
                %281 = vst [vmem:[%s175 + $0x1a0] sm:$0xff] %v280
                %v282 = vld [vmem:[%s174 + $0x4c8] sm:$0xff]
                %283 = vst [vmem:[%s175 + $0x1a8] sm:$0xff] %v282
                %v284 = vld [vmem:[%s174 + $0x4d0] sm:$0xff]
                %285 = vst [vmem:[%s175 + $0x1b0] sm:$0xff] %v284
                %v286 = vld [vmem:[%s174 + $0x4d8] sm:$0xff]
                %287 = vst [vmem:[%s175 + $0x1b8] sm:$0xff] %v286
                %v288 = vld [vmem:[%s174 + $0x4e0] sm:$0xff]
                %289 = vst [vmem:[%s175 + $0x1c0] sm:$0xff] %v288
                %v290 = vld [vmem:[%s174 + $0x4e8] sm:$0xff]
                %291 = vst [vmem:[%s175 + $0x1c8] sm:$0xff] %v290
                %v292 = vld [vmem:[%s174 + $0x4f0] sm:$0xff]
                %293 = vst [vmem:[%s175 + $0x1d0] sm:$0xff] %v292
                %v294 = vld [vmem:[%s174 + $0x4f8] sm:$0xff]
                %295 = vst [vmem:[%s175 + $0x1d8] sm:$0xff] %v294
                %v296 = vld [vmem:[%s174 + $0x5a0] sm:$0xff]
                %297 = vst [vmem:[%s175 + $0x1e0] sm:$0xff] %v296
                %v298 = vld [vmem:[%s174 + $0x5a8] sm:$0xff]
                %299 = vst [vmem:[%s175 + $0x1e8] sm:$0xff] %v298
                %v300 = vld [vmem:[%s174 + $0x5b0] sm:$0xff]
                %301 = vst [vmem:[%s175 + $0x1f0] sm:$0xff] %v300
                %v302 = vld [vmem:[%s174 + $0x5b8] sm:$0xff]
                %303 = vst [vmem:[%s175 + $0x1f8] sm:$0xff] %v302
                %v304 = vld [vmem:[%s174 + $0x5c0] sm:$0xff]
                %305 = vst [vmem:[%s175 + $0x200] sm:$0xff] %v304
                %v306 = vld [vmem:[%s174 + $0x5c8] sm:$0xff]
                %307 = vst [vmem:[%s175 + $0x208] sm:$0xff] %v306
                %v308 = vld [vmem:[%s174 + $0x5d0] sm:$0xff]
                %309 = vst [vmem:[%s175 + $0x210] sm:$0xff] %v308
                %v310 = vld [vmem:[%s174 + $0x5d8] sm:$0xff]
                %311 = vst [vmem:[%s175 + $0x218] sm:$0xff] %v310
                %v312 = vld [vmem:[%s174 + $0x5e0] sm:$0xff]
                %313 = vst [vmem:[%s175 + $0x220] sm:$0xff] %v312
                %v314 = vld [vmem:[%s174 + $0x5e8] sm:$0xff]
                %315 = vst [vmem:[%s175 + $0x228] sm:$0xff] %v314
              $region37: #{fused_mul_conv1x1.1} parent=31 // loop_footer
                %s173 = sadd.s32 1, %s169
              $region38: #{fused_mul_conv1x1.1} parent=31 // loop_footer_branch
                %168 = sbr.rel target = $region34
              $region39: #{fused_mul_conv1x1.1} parent=31 // loop_exit
                _
            $region32: #{fused_mul_conv1x1.1} parent=27 // pred_fallthru
              _
            // Predicated region
            $region40: #{fused_mul_conv1x1.1} parent=27 // pred_check
              _
            $region41: #{fused_mul_conv1x1.1} parent=27 // pred_check_branch
              %317 = sbr.rel target = $region43
            $region42: #{fused_mul_conv1x1.1} parent=27 // pred_region
              _
            $region43: #{fused_mul_conv1x1.1} parent=27 // pred_fallthru
              _
          $region28: #{fused_mul_conv1x1.1} parent=23 // pred_fallthru
            _
          %318 = vnop
        $region24: #{fused_mul_conv1x1.1} parent=15 // pred_fallthru
          _
        // Predicated region
        $region44: #{fused_mul_conv1x1.1} parent=15 // pred_check
          %p319 = pneg %p95
        $region45: #{fused_mul_conv1x1.1} parent=15 // pred_check_branch
          %321 = sbr.rel (%p319) target = $region47
        $region46: #{fused_mul_conv1x1.1} parent=15 // pred_region
          %s322 = smul.u32 160, %s17
          %s323 = smul.u32 5, %s16
          %p324 = scmp.lt.s32.totalorder %s322, 479
          %s325 = scalar_select %p324, %s322, 479
          %p326 = scmp.lt.s32.totalorder %s323, 4
          %s327 = scalar_select %p326, %s323, 4
          %s328 = smul.addr %s325, 5
          %s329 = sadd.s32 %s327, %s328
          %s330 = smul.addr %s329, 4
          %s331 = scalar_lea.vmem %s2, %s330
          %s332 = smul.u32 160, %s17
          %s333 = smul.u32 5, %s16
        $region47: #{fused_mul_conv1x1.1} parent=15 // pred_fallthru
          _
      $region16: #{fused_mul_conv1x1.1} parent=5 // pred_fallthru
        _
      %p334 = scmp.le.s32.totalorder 1, %s9
      %p335 = scmp.lt.s32.totalorder %s9, 4
      %p336 = pnand %p334, %p335
      %p337 = pneg %p336
      // Predicated region
      $region48: #{fused_mul_conv1x1.1} parent=5 // pred_check
        _
      $region49: #{fused_mul_conv1x1.1} parent=5 // pred_check_branch
        %339 = sbr.rel (%p336) target = $region51
      $region50: #{fused_mul_conv1x1.1} parent=5 // pred_region
        %s340 = ssub.s32 %s9, 1
        %s341 = sand.u32 %s60, 1
        %s342 = sand.u32 %s60, 1
        %s343 = smul.addr %s342, 560
        %s344 = scalar_lea.vmem [#allocation3], %s343
        // Predicated region
        $region52: #{fused_mul_conv1x1.1} parent=50 // pred_check
          %p345 = pneg %p73
        $region53: #{fused_mul_conv1x1.1} parent=50 // pred_check_branch
          %347 = sbr.rel (%p345) target = $region55
        $region54: #{fused_mul_conv1x1.1} parent=50 // pred_region
          _
        $region55: #{fused_mul_conv1x1.1} parent=50 // pred_fallthru
          _
        %s348 = smul.u32 10, %s19
        %p349 = scmp.lt.s32.totalorder %s348, 29
        %s350 = scalar_select %p349, %s348, 29
        %s351 = scalar_lea.vmem %s0, %s350
        %p352 = pneg %p47
        %p353 = pneg %p44
        %s354 = sand.u32 %s60, 1
        %s355 = sand.u32 %s60, 1
        %s356 = smul.addr %s355, 560
        %s357 = scalar_lea.vmem [#allocation3], %s356
        %p358 = pneg %p73
        %p359 = pneg %p70
        %s360 = smul.u32 160, %s19
        %s361 = smul.u32 5, %s18
        %p362 = scmp.lt.s32.totalorder %s360, 479
        %s363 = scalar_select %p362, %s360, 479
        %p364 = scmp.lt.s32.totalorder %s361, 4
        %s365 = scalar_select %p364, %s361, 4
        %s366 = smul.addr %s363, 5
        %s367 = sadd.s32 %s365, %s366
        %s368 = smul.addr %s367, 4
        %s369 = scalar_lea.vmem %s2, %s368
        %p370 = pneg %p101
        %p371 = pneg %p98
        %p372 = pneg %p127
        %p373 = pneg %p124
        %s374 = smul.u32 5, %s18
        %p375 = scmp.lt.s32.totalorder %s374, 4
        %s376 = scalar_select %p375, %s374, 4
        %s377 = smul.addr %s376, 8
        %s378 = scalar_lea.vmem %s3, %s377
        %s379 = smul.u32 10, %s19
        %p380 = scmp.lt.s32.totalorder %s379, 29
        %s381 = scalar_select %p380, %s379, 29
        %s382 = scalar_lea.vmem %s0, %s381
        %s383 = smul.u32 10, %s19
        %s384 = smul.u32 10, %s19
        %s385 = smul.u32 160, %s19
        %s386 = smul.u32 5, %s18
        %p387 = scmp.lt.s32.totalorder %s385, 479
        %s388 = scalar_select %p387, %s385, 479
        %p389 = scmp.lt.s32.totalorder %s386, 4
        %s390 = scalar_select %p389, %s386, 4
        %s391 = smul.addr %s388, 5
        %s392 = sadd.s32 %s390, %s391
        %s393 = smul.addr %s392, 4
        %s394 = scalar_lea.vmem %s2, %s393
        %s395 = smul.u32 160, %s19
        %s396 = smul.u32 5, %s18
        %s397 = smul.u32 5, %s18
        %p398 = scmp.lt.s32.totalorder %s397, 4
        %s399 = scalar_select %p398, %s397, 4
        %s400 = smul.addr %s399, 8
        %s401 = scalar_lea.vmem %s3, %s400
        %s402 = smul.u32 5, %s18
        %p404 = scmp.eq.s32.totalorder %s19, 0
        // Predicated region
        $region56: #{fused_mul_conv1x1.1} parent=50 // pred_check
          %p405 = pneg %p404
        $region57: #{fused_mul_conv1x1.1} parent=50 // pred_check_branch
          %407 = sbr.rel (%p405) target = $region59
        $region58: #{fused_mul_conv1x1.1} parent=50 // pred_region
          %408 = vst [vmem:[#allocation2] sm:$0xff] 0.0
          %409 = vst [vmem:[#allocation2 + $0x8] sm:$0xff] 0.0
          %410 = vst [vmem:[#allocation2 + $0x10] sm:$0xff] 0.0
          %411 = vst [vmem:[#allocation2 + $0x18] sm:$0xff] 0.0
          %412 = vst [vmem:[#allocation2 + $0x20] sm:$0xff] 0.0
          %413 = vst [vmem:[#allocation2 + $0x28] sm:$0xff] 0.0
          %414 = vst [vmem:[#allocation2 + $0x30] sm:$0xff] 0.0
          %415 = vst [vmem:[#allocation2 + $0x38] sm:$0xff] 0.0
          %416 = vst [vmem:[#allocation2 + $0x40] sm:$0xff] 0.0
          %417 = vst [vmem:[#allocation2 + $0x48] sm:$0xff] 0.0
          %418 = vst [vmem:[#allocation2 + $0x50] sm:$0xff] 0.0
          %419 = vst [vmem:[#allocation2 + $0x58] sm:$0xff] 0.0
          %420 = vst [vmem:[#allocation2 + $0x60] sm:$0xff] 0.0
          %421 = vst [vmem:[#allocation2 + $0x68] sm:$0xff] 0.0
          %422 = vst [vmem:[#allocation2 + $0x70] sm:$0xff] 0.0
          %423 = vst [vmem:[#allocation2 + $0x78] sm:$0xff] 0.0
          %424 = vst [vmem:[#allocation2 + $0x80] sm:$0xff] 0.0
          %425 = vst [vmem:[#allocation2 + $0x88] sm:$0xff] 0.0
          %426 = vst [vmem:[#allocation2 + $0x90] sm:$0xff] 0.0
          %427 = vst [vmem:[#allocation2 + $0x98] sm:$0xff] 0.0
          %428 = vst [vmem:[#allocation2 + $0xa0] sm:$0xff] 0.0
          %429 = vst [vmem:[#allocation2 + $0xa8] sm:$0xff] 0.0
          %430 = vst [vmem:[#allocation2 + $0xb0] sm:$0xff] 0.0
          %431 = vst [vmem:[#allocation2 + $0xb8] sm:$0xff] 0.0
          %432 = vst [vmem:[#allocation2 + $0xc0] sm:$0xff] 0.0
          %433 = vst [vmem:[#allocation2 + $0xc8] sm:$0xff] 0.0
          %434 = vst [vmem:[#allocation2 + $0xd0] sm:$0xff] 0.0
          %435 = vst [vmem:[#allocation2 + $0xd8] sm:$0xff] 0.0
          %436 = vst [vmem:[#allocation2 + $0xe0] sm:$0xff] 0.0
          %437 = vst [vmem:[#allocation2 + $0xe8] sm:$0xff] 0.0
          %438 = vst [vmem:[#allocation2 + $0xf0] sm:$0x1] 0.0
          %439 = vst [vmem:[#allocation2 + $0xf8] sm:$0x1] 0.0
          %440 = vst [vmem:[#allocation2 + $0x100] sm:$0x1] 0.0
          %441 = vst [vmem:[#allocation2 + $0x108] sm:$0x1] 0.0
          %442 = vst [vmem:[#allocation2 + $0x110] sm:$0x1] 0.0
        $region59: #{fused_mul_conv1x1.1} parent=50 // pred_fallthru
          _
        %v443 = vld [vmem:[%s344] sm:$0xff]
        %v444 = vld [vmem:[%s344 + $0x8] sm:$0xff]
        %v445 = vld [vmem:[%s344 + $0x10] sm:$0xff]
        %v446 = vld [vmem:[%s344 + $0x18] sm:$0xff]
        %v447 = vld [vmem:[%s344 + $0x20] sm:$0xff]
        %v448 = vld [vmem:[%s344 + $0x28] sm:$0xff]
        %v449 = vld [vmem:[%s344 + $0x30] sm:$0xff]
        %v450 = vld [vmem:[%s344 + $0x38] sm:$0xff]
        %v451 = vld [vmem:[%s344 + $0x40] sm:$0xff]
        %v452 = vld [vmem:[%s344 + $0x48] sm:$0xff]
        %v453 = vld [vmem:[%s344 + $0x50] sm:$0xff]
        %v454 = vld [vmem:[%s344 + $0x58] sm:$0xff]
        %v455 = vld [vmem:[%s344 + $0x60] sm:$0xff]
        %v456 = vld [vmem:[%s344 + $0x68] sm:$0xff]
        %v457 = vld [vmem:[%s344 + $0x70] sm:$0xff]
        %v458 = vld [vmem:[%s344 + $0x78] sm:$0xff]
        %v459 = vld [vmem:[%s344 + $0x80] sm:$0xff]
        %v460 = vld [vmem:[%s344 + $0x88] sm:$0xff]
        %v461 = vld [vmem:[%s344 + $0x90] sm:$0xff]
        %v462 = vld [vmem:[%s344 + $0x98] sm:$0xff]
        %v463 = vld [vmem:[%s344 + $0xa0] sm:$0xff]
        %v464 = vld [vmem:[%s344 + $0xa8] sm:$0xff]
        %v465 = vld [vmem:[%s344 + $0xb0] sm:$0xff]
        %v466 = vld [vmem:[%s344 + $0xb8] sm:$0xff]
        %v467 = vld [vmem:[%s344 + $0xc0] sm:$0xff]
        %v468 = vld [vmem:[%s344 + $0xc8] sm:$0xff]
        %v469 = vld [vmem:[%s344 + $0xd0] sm:$0xff]
        %v470 = vld [vmem:[%s344 + $0xd8] sm:$0xff]
        %v471 = vld [vmem:[%s344 + $0xe0] sm:$0xff]
        %v472 = vld [vmem:[%s344 + $0xe8] sm:$0xff]
        %v473 = vld [vmem:[%s344 + $0xf0] sm:$0xff]
        %v474 = vld [vmem:[%s344 + $0xf8] sm:$0xff]
        %v475 = vld [vmem:[%s344 + $0x100] sm:$0xff]
        %v476 = vld [vmem:[%s344 + $0x108] sm:$0xff]
        %v477 = vld [vmem:[%s344 + $0x110] sm:$0xff]
        %v478 = vld [vmem:[%s344 + $0x118] sm:$0xff]
        %v479 = vld [vmem:[%s344 + $0x120] sm:$0xff]
        %v480 = vld [vmem:[%s344 + $0x128] sm:$0xff]
        %v481 = vld [vmem:[%s344 + $0x130] sm:$0xff]
        %v482 = vld [vmem:[%s344 + $0x138] sm:$0xff]
        %v483 = vld [vmem:[%s344 + $0x140] sm:$0xff]
        %v484 = vld [vmem:[%s344 + $0x148] sm:$0xff]
        %v485 = vld [vmem:[%s344 + $0x150] sm:$0xff]
        %v486 = vld [vmem:[%s344 + $0x158] sm:$0xff]
        %v487 = vld [vmem:[%s344 + $0x160] sm:$0xff]
        %v488 = vld [vmem:[%s344 + $0x168] sm:$0xff]
        %v489 = vld [vmem:[%s344 + $0x170] sm:$0xff]
        %v490 = vld [vmem:[%s344 + $0x178] sm:$0xff]
        %v491 = vld [vmem:[%s344 + $0x180] sm:$0xff]
        %v492 = vld [vmem:[%s344 + $0x188] sm:$0xff]
        %v493 = vld [vmem:[%s344 + $0x190] sm:$0xff]
        %v494 = vld [vmem:[%s344 + $0x198] sm:$0xff]
        %v495 = vld [vmem:[%s344 + $0x1a0] sm:$0xff]
        %v496 = vld [vmem:[%s344 + $0x1a8] sm:$0xff]
        %v497 = vld [vmem:[%s344 + $0x1b0] sm:$0xff]
        %v498 = vld [vmem:[%s344 + $0x1b8] sm:$0xff]
        %v499 = vld [vmem:[%s344 + $0x1c0] sm:$0xff]
        %v500 = vld [vmem:[%s344 + $0x1c8] sm:$0xff]
        %v501 = vld [vmem:[%s344 + $0x1d0] sm:$0xff]
        %v502 = vld [vmem:[%s344 + $0x1d8] sm:$0xff]
        %v503 = vld [vmem:[%s344 + $0x1e0] sm:$0x1]
        %v504 = vld [vmem:[%s344 + $0x1e8] sm:$0x1]
        %v505 = vld [vmem:[%s344 + $0x1f0] sm:$0x1]
        %v506 = vld [vmem:[%s344 + $0x1f8] sm:$0x1]
        %v507 = vld [vmem:[%s344 + $0x200] sm:$0x1]
        %v508 = vld [vmem:[%s344 + $0x208] sm:$0x1]
        %v509 = vld [vmem:[%s344 + $0x210] sm:$0x1]
        %v510 = vld [vmem:[%s344 + $0x218] sm:$0x1]
        %v511 = vld [vmem:[%s344 + $0x220] sm:$0x1]
        %v512 = vld [vmem:[%s344 + $0x228] sm:$0x1]
        %v513 = vld [vmem:[%s382] sm:$0xff]
        %v514 = vld [vmem:[%s382 + $0x8] sm:$0x3]
        %v517 = vlaneseq
        %v518 = vshrl.u32 %v517, 7
        %v519 = vsub.s32 0, %v518
        %v520 = vrot.slane %v513, %v519
        %v521 = vlaneseq
        %v522 = vshrl.u32 %v521, 7
        %v523 = vsub.s32 1, %v522
        %v524 = vrot.slane %v513, %v523
        %v525 = vlaneseq
        %v526 = vshrl.u32 %v525, 7
        %v527 = vsub.s32 2, %v526
        %v528 = vrot.slane %v513, %v527
        %v529 = vlaneseq
        %v530 = vshrl.u32 %v529, 7
        %v531 = vsub.s32 3, %v530
        %v532 = vrot.slane %v513, %v531
        %v533 = vlaneseq
        %v534 = vshrl.u32 %v533, 7
        %v535 = vsub.s32 4, %v534
        %v536 = vrot.slane %v513, %v535
        %v537 = vlaneseq
        %v538 = vshrl.u32 %v537, 7
        %v539 = vsub.s32 5, %v538
        %v540 = vrot.slane %v513, %v539
        %v541 = vlaneseq
        %v542 = vshrl.u32 %v541, 7
        %v543 = vsub.s32 6, %v542
        %v544 = vrot.slane %v513, %v543
        %v545 = vlaneseq
        %v546 = vshrl.u32 %v545, 7
        %v547 = vsub.s32 7, %v546
        %v548 = vrot.slane %v513, %v547
        %v549 = vlaneseq
        %v550 = vshrl.u32 %v549, 7
        %v551 = vsub.s32 0, %v550
        %v552 = vrot.slane %v514, %v551
        %v553 = vlaneseq
        %v554 = vshrl.u32 %v553, 7
        %v555 = vsub.s32 1, %v554
        %v556 = vrot.slane %v514, %v555
        %v567 = vmul.f32 %v443, %v520
        %v568 = vmul.f32 %v444, %v524
        %v569 = vmul.f32 %v445, %v528
        %v570 = vmul.f32 %v446, %v532
        %v571 = vmul.f32 %v447, %v536
        %v572 = vmul.f32 %v448, %v540
        %v573 = vmul.f32 %v449, %v544
        %v574 = vmul.f32 %v450, %v548
        %v575 = vmul.f32 %v451, %v552
        %v576 = vmul.f32 %v452, %v556
        %v577 = vmul.f32 %v453, %v520
        %v578 = vmul.f32 %v454, %v524
        %v579 = vmul.f32 %v455, %v528
        %v580 = vmul.f32 %v456, %v532
        %v581 = vmul.f32 %v457, %v536
        %v582 = vmul.f32 %v458, %v540
        %v583 = vmul.f32 %v459, %v544
        %v584 = vmul.f32 %v460, %v548
        %v585 = vmul.f32 %v461, %v552
        %v586 = vmul.f32 %v462, %v556
        %v587 = vmul.f32 %v463, %v520
        %v588 = vmul.f32 %v464, %v524
        %v589 = vmul.f32 %v465, %v528
        %v590 = vmul.f32 %v466, %v532
        %v591 = vmul.f32 %v467, %v536
        %v592 = vmul.f32 %v468, %v540
        %v593 = vmul.f32 %v469, %v544
        %v594 = vmul.f32 %v470, %v548
        %v595 = vmul.f32 %v471, %v552
        %v596 = vmul.f32 %v472, %v556
        %v597 = vmul.f32 %v473, %v520
        %v598 = vmul.f32 %v474, %v524
        %v599 = vmul.f32 %v475, %v528
        %v600 = vmul.f32 %v476, %v532
        %v601 = vmul.f32 %v477, %v536
        %v602 = vmul.f32 %v478, %v540
        %v603 = vmul.f32 %v479, %v544
        %v604 = vmul.f32 %v480, %v548
        %v605 = vmul.f32 %v481, %v552
        %v606 = vmul.f32 %v482, %v556
        %v607 = vmul.f32 %v483, %v520
        %v608 = vmul.f32 %v484, %v524
        %v609 = vmul.f32 %v485, %v528
        %v610 = vmul.f32 %v486, %v532
        %v611 = vmul.f32 %v487, %v536
        %v612 = vmul.f32 %v488, %v540
        %v613 = vmul.f32 %v489, %v544
        %v614 = vmul.f32 %v490, %v548
        %v615 = vmul.f32 %v491, %v552
        %v616 = vmul.f32 %v492, %v556
        %v617 = vmul.f32 %v493, %v520
        %v618 = vmul.f32 %v494, %v524
        %v619 = vmul.f32 %v495, %v528
        %v620 = vmul.f32 %v496, %v532
        %v621 = vmul.f32 %v497, %v536
        %v622 = vmul.f32 %v498, %v540
        %v623 = vmul.f32 %v499, %v544
        %v624 = vmul.f32 %v500, %v548
        %v625 = vmul.f32 %v501, %v552
        %v626 = vmul.f32 %v502, %v556
        %v627 = vmul.f32 %v503, %v520
        %v628 = vmul.f32 %v504, %v524
        %v629 = vmul.f32 %v505, %v528
        %v630 = vmul.f32 %v506, %v532
        %v631 = vmul.f32 %v507, %v536
        %v632 = vmul.f32 %v508, %v540
        %v633 = vmul.f32 %v509, %v544
        %v634 = vmul.f32 %v510, %v548
        %v635 = vmul.f32 %v511, %v552
        %v636 = vmul.f32 %v512, %v556
        %v637 = vpack.c.bf16 %v577, %v567
        %v638 = vpack.c.bf16 %v578, %v568
        %v639 = vpack.c.bf16 %v579, %v569
        %v640 = vpack.c.bf16 %v580, %v570
        %v641 = vpack.c.bf16 %v581, %v571
        %v642 = vpack.c.bf16 %v582, %v572
        %v643 = vpack.c.bf16 %v583, %v573
        %v644 = vpack.c.bf16 %v584, %v574
        %v645 = vpack.c.bf16 %v585, %v575
        %v646 = vpack.c.bf16 %v586, %v576
        %v647 = vpack.c.bf16 %v597, %v587
        %v648 = vpack.c.bf16 %v598, %v588
        %v649 = vpack.c.bf16 %v599, %v589
        %v650 = vpack.c.bf16 %v600, %v590
        %v651 = vpack.c.bf16 %v601, %v591
        %v652 = vpack.c.bf16 %v602, %v592
        %v653 = vpack.c.bf16 %v603, %v593
        %v654 = vpack.c.bf16 %v604, %v594
        %v655 = vpack.c.bf16 %v605, %v595
        %v656 = vpack.c.bf16 %v606, %v596
        %v657 = vpack.c.bf16 %v617, %v607
        %v658 = vpack.c.bf16 %v618, %v608
        %v659 = vpack.c.bf16 %v619, %v609
        %v660 = vpack.c.bf16 %v620, %v610
        %v661 = vpack.c.bf16 %v621, %v611
        %v662 = vpack.c.bf16 %v622, %v612
        %v663 = vpack.c.bf16 %v623, %v613
        %v664 = vpack.c.bf16 %v624, %v614
        %v665 = vpack.c.bf16 %v625, %v615
        %v666 = vpack.c.bf16 %v626, %v616
        %v667 = vpack.c.bf16 %v627, %v627
        %v668 = vpack.c.bf16 %v628, %v628
        %v669 = vpack.c.bf16 %v629, %v629
        %v670 = vpack.c.bf16 %v630, %v630
        %v671 = vpack.c.bf16 %v631, %v631
        %v672 = vpack.c.bf16 %v632, %v632
        %v673 = vpack.c.bf16 %v633, %v633
        %v674 = vpack.c.bf16 %v634, %v634
        %v675 = vpack.c.bf16 %v635, %v635
        %v676 = vpack.c.bf16 %v636, %v636
        %v677 = vld [vmem:[#allocation2] sm:$0xff]
        %v678 = vld [vmem:[#allocation2 + $0x8] sm:$0xff]
        %v679 = vld [vmem:[#allocation2 + $0x10] sm:$0xff]
        %v680 = vld [vmem:[#allocation2 + $0x18] sm:$0xff]
        %v681 = vld [vmem:[#allocation2 + $0x20] sm:$0xff]
        %v682 = vld [vmem:[#allocation2 + $0x28] sm:$0xff]
        %v683 = vld [vmem:[#allocation2 + $0x30] sm:$0xff]
        %v684 = vld [vmem:[#allocation2 + $0x38] sm:$0xff]
        %v685 = vld [vmem:[#allocation2 + $0x40] sm:$0xff]
        %v686 = vld [vmem:[#allocation2 + $0x48] sm:$0xff]
        %v687 = vld [vmem:[#allocation2 + $0x50] sm:$0xff]
        %v688 = vld [vmem:[#allocation2 + $0x58] sm:$0xff]
        %v689 = vld [vmem:[#allocation2 + $0x60] sm:$0xff]
        %v690 = vld [vmem:[#allocation2 + $0x68] sm:$0xff]
        %v691 = vld [vmem:[#allocation2 + $0x70] sm:$0xff]
        %v692 = vld [vmem:[#allocation2 + $0x78] sm:$0xff]
        %v693 = vld [vmem:[#allocation2 + $0x80] sm:$0xff]
        %v694 = vld [vmem:[#allocation2 + $0x88] sm:$0xff]
        %v695 = vld [vmem:[#allocation2 + $0x90] sm:$0xff]
        %v696 = vld [vmem:[#allocation2 + $0x98] sm:$0xff]
        %v697 = vld [vmem:[#allocation2 + $0xa0] sm:$0xff]
        %v698 = vld [vmem:[#allocation2 + $0xa8] sm:$0xff]
        %v699 = vld [vmem:[#allocation2 + $0xb0] sm:$0xff]
        %v700 = vld [vmem:[#allocation2 + $0xb8] sm:$0xff]
        %v701 = vld [vmem:[#allocation2 + $0xc0] sm:$0xff]
        %v702 = vld [vmem:[#allocation2 + $0xc8] sm:$0xff]
        %v703 = vld [vmem:[#allocation2 + $0xd0] sm:$0xff]
        %v704 = vld [vmem:[#allocation2 + $0xd8] sm:$0xff]
        %v705 = vld [vmem:[#allocation2 + $0xe0] sm:$0xff]
        %v706 = vld [vmem:[#allocation2 + $0xe8] sm:$0xff]
        %v707 = vld [vmem:[#allocation2 + $0xf0] sm:$0x1]
        %v708 = vld [vmem:[#allocation2 + $0xf8] sm:$0x1]
        %v709 = vld [vmem:[#allocation2 + $0x100] sm:$0x1]
        %v710 = vld [vmem:[#allocation2 + $0x108] sm:$0x1]
        %v711 = vld [vmem:[#allocation2 + $0x110] sm:$0x1]
        %v712 = vld [vmem:[%s394] sm:$0xff]
        %v713 = vld [vmem:[%s394 + $0x8] sm:$0xff]
        %v714 = vld [vmem:[%s394 + $0x10] sm:$0xf]
        %v715 = vld [vmem:[%s394 + $0x14] sm:$0xff]
        %v716 = vld [vmem:[%s394 + $0x1c] sm:$0xff]
        %v717 = vld [vmem:[%s394 + $0x24] sm:$0xf]
        %v718 = vld [vmem:[%s394 + $0x28] sm:$0xff]
        %v719 = vld [vmem:[%s394 + $0x30] sm:$0xff]
        %v720 = vld [vmem:[%s394 + $0x38] sm:$0xf]
        %v721 = vld [vmem:[%s394 + $0x3c] sm:$0xff]
        %v722 = vld [vmem:[%s394 + $0x44] sm:$0xff]
        %v723 = vld [vmem:[%s394 + $0x4c] sm:$0xf]
        %v724 = vld [vmem:[%s394 + $0x50] sm:$0xff]
        %v725 = vld [vmem:[%s394 + $0x58] sm:$0xff]
        %v726 = vld [vmem:[%s394 + $0x60] sm:$0xf]
        %v727 = vld [vmem:[%s394 + $0x64] sm:$0xff]
        %v728 = vld [vmem:[%s394 + $0x6c] sm:$0xff]
        %v729 = vld [vmem:[%s394 + $0x74] sm:$0xf]
        %v730 = vld [vmem:[%s394 + $0x78] sm:$0xff]
        %v731 = vld [vmem:[%s394 + $0x80] sm:$0xff]
        %v732 = vld [vmem:[%s394 + $0x88] sm:$0xf]
        %v733 = vld [vmem:[%s394 + $0x8c] sm:$0xff]
        %v734 = vld [vmem:[%s394 + $0x94] sm:$0xff]
        %v735 = vld [vmem:[%s394 + $0x9c] sm:$0xf]
        %v736 = vld [vmem:[%s394 + $0xa0] sm:$0xff]
        %v737 = vld [vmem:[%s394 + $0xa8] sm:$0xff]
        %v738 = vld [vmem:[%s394 + $0xb0] sm:$0xf]
        %v739 = vld [vmem:[%s394 + $0xb4] sm:$0xff]
        %v740 = vld [vmem:[%s394 + $0xbc] sm:$0xff]
        %v741 = vld [vmem:[%s394 + $0xc4] sm:$0xf]
        %v742 = vld [vmem:[%s394 + $0xc8] sm:$0xff]
        %v743 = vld [vmem:[%s394 + $0xd0] sm:$0xff]
        %v744 = vld [vmem:[%s394 + $0xd8] sm:$0xf]
        %v745 = vld [vmem:[%s394 + $0xdc] sm:$0xff]
        %v746 = vld [vmem:[%s394 + $0xe4] sm:$0xff]
        %v747 = vld [vmem:[%s394 + $0xec] sm:$0xf]
        %v748 = vld [vmem:[%s394 + $0xf0] sm:$0xff]
        %v749 = vld [vmem:[%s394 + $0xf8] sm:$0xff]
        %v750 = vld [vmem:[%s394 + $0x100] sm:$0xf]
        %v751 = vld [vmem:[%s394 + $0x104] sm:$0xff]
        %v752 = vld [vmem:[%s394 + $0x10c] sm:$0xff]
        %v753 = vld [vmem:[%s394 + $0x114] sm:$0xf]
        %v754 = vld [vmem:[%s394 + $0x118] sm:$0xff]
        %v755 = vld [vmem:[%s394 + $0x120] sm:$0xff]
        %v756 = vld [vmem:[%s394 + $0x128] sm:$0xf]
        %v757 = vld [vmem:[%s394 + $0x12c] sm:$0xff]
        %v758 = vld [vmem:[%s394 + $0x134] sm:$0xff]
        %v759 = vld [vmem:[%s394 + $0x13c] sm:$0xf]
        %v760 = vld [vmem:[%s394 + $0x140] sm:$0xff]
        %v761 = vld [vmem:[%s394 + $0x148] sm:$0xff]
        %v762 = vld [vmem:[%s394 + $0x150] sm:$0xf]
        %v763 = vld [vmem:[%s394 + $0x154] sm:$0xff]
        %v764 = vld [vmem:[%s394 + $0x15c] sm:$0xff]
        %v765 = vld [vmem:[%s394 + $0x164] sm:$0xf]
        %v766 = vld [vmem:[%s394 + $0x168] sm:$0xff]
        %v767 = vld [vmem:[%s394 + $0x170] sm:$0xff]
        %v768 = vld [vmem:[%s394 + $0x178] sm:$0xf]
        %v769 = vld [vmem:[%s394 + $0x17c] sm:$0xff]
        %v770 = vld [vmem:[%s394 + $0x184] sm:$0xff]
        %v771 = vld [vmem:[%s394 + $0x18c] sm:$0xf]
        %v772 = vld [vmem:[%s394 + $0x190] sm:$0xff]
        %v773 = vld [vmem:[%s394 + $0x198] sm:$0xff]
        %v774 = vld [vmem:[%s394 + $0x1a0] sm:$0xf]
        %v775 = vld [vmem:[%s394 + $0x1a4] sm:$0xff]
        %v776 = vld [vmem:[%s394 + $0x1ac] sm:$0xff]
        %v777 = vld [vmem:[%s394 + $0x1b4] sm:$0xf]
        %v778 = vld [vmem:[%s394 + $0x1b8] sm:$0xff]
        %v779 = vld [vmem:[%s394 + $0x1c0] sm:$0xff]
        %v780 = vld [vmem:[%s394 + $0x1c8] sm:$0xf]
        %v781 = vld [vmem:[%s394 + $0x1cc] sm:$0xff]
        %v782 = vld [vmem:[%s394 + $0x1d4] sm:$0xff]
        %v783 = vld [vmem:[%s394 + $0x1dc] sm:$0xf]
        %v784 = vld [vmem:[%s394 + $0x1e0] sm:$0xff]
        %v785 = vld [vmem:[%s394 + $0x1e8] sm:$0xff]
        %v786 = vld [vmem:[%s394 + $0x1f0] sm:$0xf]
        %v787 = vld [vmem:[%s394 + $0x1f4] sm:$0xff]
        %v788 = vld [vmem:[%s394 + $0x1fc] sm:$0xff]
        %v789 = vld [vmem:[%s394 + $0x204] sm:$0xf]
        %v790 = vld [vmem:[%s394 + $0x208] sm:$0xff]
        %v791 = vld [vmem:[%s394 + $0x210] sm:$0xff]
        %v792 = vld [vmem:[%s394 + $0x218] sm:$0xf]
        %v793 = vld [vmem:[%s394 + $0x21c] sm:$0xff]
        %v794 = vld [vmem:[%s394 + $0x224] sm:$0xff]
        %v795 = vld [vmem:[%s394 + $0x22c] sm:$0xf]
        %v796 = vld [vmem:[%s394 + $0x230] sm:$0xff]
        %v797 = vld [vmem:[%s394 + $0x238] sm:$0xff]
        %v798 = vld [vmem:[%s394 + $0x240] sm:$0xf]
        %v799 = vld [vmem:[%s394 + $0x244] sm:$0xff]
        %v800 = vld [vmem:[%s394 + $0x24c] sm:$0xff]
        %v801 = vld [vmem:[%s394 + $0x254] sm:$0xf]
        %v802 = vld [vmem:[%s394 + $0x258] sm:$0xff]
        %v803 = vld [vmem:[%s394 + $0x260] sm:$0xff]
        %v804 = vld [vmem:[%s394 + $0x268] sm:$0xf]
        %v805 = vld [vmem:[%s394 + $0x26c] sm:$0xff]
        %v806 = vld [vmem:[%s394 + $0x274] sm:$0xff]
        %v807 = vld [vmem:[%s394 + $0x27c] sm:$0xf]
        %v808 = vld [vmem:[%s394 + $0x280] sm:$0xff]
        %v809 = vld [vmem:[%s394 + $0x288] sm:$0xff]
        %v810 = vld [vmem:[%s394 + $0x290] sm:$0xf]
        %v811 = vld [vmem:[%s394 + $0x294] sm:$0xff]
        %v812 = vld [vmem:[%s394 + $0x29c] sm:$0xff]
        %v813 = vld [vmem:[%s394 + $0x2a4] sm:$0xf]
        %v814 = vld [vmem:[%s394 + $0x2a8] sm:$0xff]
        %v815 = vld [vmem:[%s394 + $0x2b0] sm:$0xff]
        %v816 = vld [vmem:[%s394 + $0x2b8] sm:$0xf]
        %v817 = vld [vmem:[%s394 + $0x2bc] sm:$0xff]
        %v818 = vld [vmem:[%s394 + $0x2c4] sm:$0xff]
        %v819 = vld [vmem:[%s394 + $0x2cc] sm:$0xf]
        %v820 = vld [vmem:[%s394 + $0x2d0] sm:$0xff]
        %v821 = vld [vmem:[%s394 + $0x2d8] sm:$0xff]
        %v822 = vld [vmem:[%s394 + $0x2e0] sm:$0xf]
        %v823 = vld [vmem:[%s394 + $0x2e4] sm:$0xff]
        %v824 = vld [vmem:[%s394 + $0x2ec] sm:$0xff]
        %v825 = vld [vmem:[%s394 + $0x2f4] sm:$0xf]
        %v826 = vld [vmem:[%s394 + $0x2f8] sm:$0xff]
        %v827 = vld [vmem:[%s394 + $0x300] sm:$0xff]
        %v828 = vld [vmem:[%s394 + $0x308] sm:$0xf]
        %v829 = vld [vmem:[%s394 + $0x30c] sm:$0xff]
        %v830 = vld [vmem:[%s394 + $0x314] sm:$0xff]
        %v831 = vld [vmem:[%s394 + $0x31c] sm:$0xf]
        %v832 = vld [vmem:[%s394 + $0x320] sm:$0xff]
        %v833 = vld [vmem:[%s394 + $0x328] sm:$0xff]
        %v834 = vld [vmem:[%s394 + $0x330] sm:$0xf]
        %v835 = vld [vmem:[%s394 + $0x334] sm:$0xff]
        %v836 = vld [vmem:[%s394 + $0x33c] sm:$0xff]
        %v837 = vld [vmem:[%s394 + $0x344] sm:$0xf]
        %v838 = vld [vmem:[%s394 + $0x348] sm:$0xff]
        %v839 = vld [vmem:[%s394 + $0x350] sm:$0xff]
        %v840 = vld [vmem:[%s394 + $0x358] sm:$0xf]
        %v841 = vld [vmem:[%s394 + $0x35c] sm:$0xff]
        %v842 = vld [vmem:[%s394 + $0x364] sm:$0xff]
        %v843 = vld [vmem:[%s394 + $0x36c] sm:$0xf]
        %v844 = vld [vmem:[%s394 + $0x370] sm:$0xff]
        %v845 = vld [vmem:[%s394 + $0x378] sm:$0xff]
        %v846 = vld [vmem:[%s394 + $0x380] sm:$0xf]
        %v847 = vld [vmem:[%s394 + $0x384] sm:$0xff]
        %v848 = vld [vmem:[%s394 + $0x38c] sm:$0xff]
        %v849 = vld [vmem:[%s394 + $0x394] sm:$0xf]
        %v850 = vld [vmem:[%s394 + $0x398] sm:$0xff]
        %v851 = vld [vmem:[%s394 + $0x3a0] sm:$0xff]
        %v852 = vld [vmem:[%s394 + $0x3a8] sm:$0xf]
        %v853 = vld [vmem:[%s394 + $0x3ac] sm:$0xff]
        %v854 = vld [vmem:[%s394 + $0x3b4] sm:$0xff]
        %v855 = vld [vmem:[%s394 + $0x3bc] sm:$0xf]
        %v856 = vld [vmem:[%s394 + $0x3c0] sm:$0xff]
        %v857 = vld [vmem:[%s394 + $0x3c8] sm:$0xff]
        %v858 = vld [vmem:[%s394 + $0x3d0] sm:$0xf]
        %v859 = vld [vmem:[%s394 + $0x3d4] sm:$0xff]
        %v860 = vld [vmem:[%s394 + $0x3dc] sm:$0xff]
        %v861 = vld [vmem:[%s394 + $0x3e4] sm:$0xf]
        %v862 = vld [vmem:[%s394 + $0x3e8] sm:$0xff]
        %v863 = vld [vmem:[%s394 + $0x3f0] sm:$0xff]
        %v864 = vld [vmem:[%s394 + $0x3f8] sm:$0xf]
        %v865 = vld [vmem:[%s394 + $0x3fc] sm:$0xff]
        %v866 = vld [vmem:[%s394 + $0x404] sm:$0xff]
        %v867 = vld [vmem:[%s394 + $0x40c] sm:$0xf]
        %v868 = vld [vmem:[%s394 + $0x410] sm:$0xff]
        %v869 = vld [vmem:[%s394 + $0x418] sm:$0xff]
        %v870 = vld [vmem:[%s394 + $0x420] sm:$0xf]
        %v871 = vld [vmem:[%s394 + $0x424] sm:$0xff]
        %v872 = vld [vmem:[%s394 + $0x42c] sm:$0xff]
        %v873 = vld [vmem:[%s394 + $0x434] sm:$0xf]
        %v874 = vld [vmem:[%s394 + $0x438] sm:$0xff]
        %v875 = vld [vmem:[%s394 + $0x440] sm:$0xff]
        %v876 = vld [vmem:[%s394 + $0x448] sm:$0xf]
        %v877 = vld [vmem:[%s394 + $0x44c] sm:$0xff]
        %v878 = vld [vmem:[%s394 + $0x454] sm:$0xff]
        %v879 = vld [vmem:[%s394 + $0x45c] sm:$0xf]
        %v880 = vld [vmem:[%s394 + $0x460] sm:$0xff]
        %v881 = vld [vmem:[%s394 + $0x468] sm:$0xff]
        %v882 = vld [vmem:[%s394 + $0x470] sm:$0xf]
        %v883 = vld [vmem:[%s394 + $0x474] sm:$0xff]
        %v884 = vld [vmem:[%s394 + $0x47c] sm:$0xff]
        %v885 = vld [vmem:[%s394 + $0x484] sm:$0xf]
        %v886 = vld [vmem:[%s394 + $0x488] sm:$0xff]
        %v887 = vld [vmem:[%s394 + $0x490] sm:$0xff]
        %v888 = vld [vmem:[%s394 + $0x498] sm:$0xf]
        %v889 = vld [vmem:[%s394 + $0x49c] sm:$0xff]
        %v890 = vld [vmem:[%s394 + $0x4a4] sm:$0xff]
        %v891 = vld [vmem:[%s394 + $0x4ac] sm:$0xf]
        %v892 = vld [vmem:[%s394 + $0x4b0] sm:$0xff]
        %v893 = vld [vmem:[%s394 + $0x4b8] sm:$0xff]
        %v894 = vld [vmem:[%s394 + $0x4c0] sm:$0xf]
        %v895 = vld [vmem:[%s394 + $0x4c4] sm:$0xff]
        %v896 = vld [vmem:[%s394 + $0x4cc] sm:$0xff]
        %v897 = vld [vmem:[%s394 + $0x4d4] sm:$0xf]
        %v898 = vld [vmem:[%s394 + $0x4d8] sm:$0xff]
        %v899 = vld [vmem:[%s394 + $0x4e0] sm:$0xff]
        %v900 = vld [vmem:[%s394 + $0x4e8] sm:$0xf]
        %v901 = vld [vmem:[%s394 + $0x4ec] sm:$0xff]
        %v902 = vld [vmem:[%s394 + $0x4f4] sm:$0xff]
        %v903 = vld [vmem:[%s394 + $0x4fc] sm:$0xf]
        %v904 = vld [vmem:[%s394 + $0x500] sm:$0xff]
        %v905 = vld [vmem:[%s394 + $0x508] sm:$0xff]
        %v906 = vld [vmem:[%s394 + $0x510] sm:$0xf]
        %v907 = vld [vmem:[%s394 + $0x514] sm:$0xff]
        %v908 = vld [vmem:[%s394 + $0x51c] sm:$0xff]
        %v909 = vld [vmem:[%s394 + $0x524] sm:$0xf]
        %v910 = vld [vmem:[%s394 + $0x528] sm:$0xff]
        %v911 = vld [vmem:[%s394 + $0x530] sm:$0xff]
        %v912 = vld [vmem:[%s394 + $0x538] sm:$0xf]
        %v913 = vld [vmem:[%s394 + $0x53c] sm:$0xff]
        %v914 = vld [vmem:[%s394 + $0x544] sm:$0xff]
        %v915 = vld [vmem:[%s394 + $0x54c] sm:$0xf]
        %v916 = vld [vmem:[%s394 + $0x550] sm:$0xff]
        %v917 = vld [vmem:[%s394 + $0x558] sm:$0xff]
        %v918 = vld [vmem:[%s394 + $0x560] sm:$0xf]
        %v919 = vld [vmem:[%s394 + $0x564] sm:$0xff]
        %v920 = vld [vmem:[%s394 + $0x56c] sm:$0xff]
        %v921 = vld [vmem:[%s394 + $0x574] sm:$0xf]
        %v922 = vld [vmem:[%s394 + $0x578] sm:$0xff]
        %v923 = vld [vmem:[%s394 + $0x580] sm:$0xff]
        %v924 = vld [vmem:[%s394 + $0x588] sm:$0xf]
        %v925 = vld [vmem:[%s394 + $0x58c] sm:$0xff]
        %v926 = vld [vmem:[%s394 + $0x594] sm:$0xff]
        %v927 = vld [vmem:[%s394 + $0x59c] sm:$0xf]
        %v928 = vld [vmem:[%s394 + $0x5a0] sm:$0xff]
        %v929 = vld [vmem:[%s394 + $0x5a8] sm:$0xff]
        %v930 = vld [vmem:[%s394 + $0x5b0] sm:$0xf]
        %v931 = vld [vmem:[%s394 + $0x5b4] sm:$0xff]
        %v932 = vld [vmem:[%s394 + $0x5bc] sm:$0xff]
        %v933 = vld [vmem:[%s394 + $0x5c4] sm:$0xf]
        %v934 = vld [vmem:[%s394 + $0x5c8] sm:$0xff]
        %v935 = vld [vmem:[%s394 + $0x5d0] sm:$0xff]
        %v936 = vld [vmem:[%s394 + $0x5d8] sm:$0xf]
        %v937 = vld [vmem:[%s394 + $0x5dc] sm:$0xff]
        %v938 = vld [vmem:[%s394 + $0x5e4] sm:$0xff]
        %v939 = vld [vmem:[%s394 + $0x5ec] sm:$0xf]
        %v940 = vld [vmem:[%s394 + $0x5f0] sm:$0xff]
        %v941 = vld [vmem:[%s394 + $0x5f8] sm:$0xff]
        %v942 = vld [vmem:[%s394 + $0x600] sm:$0xf]
        %v943 = vld [vmem:[%s394 + $0x604] sm:$0xff]
        %v944 = vld [vmem:[%s394 + $0x60c] sm:$0xff]
        %v945 = vld [vmem:[%s394 + $0x614] sm:$0xf]
        %v946 = vld [vmem:[%s394 + $0x618] sm:$0xff]
        %v947 = vld [vmem:[%s394 + $0x620] sm:$0xff]
        %v948 = vld [vmem:[%s394 + $0x628] sm:$0xf]
        %v949 = vld [vmem:[%s394 + $0x62c] sm:$0xff]
        %v950 = vld [vmem:[%s394 + $0x634] sm:$0xff]
        %v951 = vld [vmem:[%s394 + $0x63c] sm:$0xf]
        %v952 = vld [vmem:[%s394 + $0x640] sm:$0xff]
        %v953 = vld [vmem:[%s394 + $0x648] sm:$0xff]
        %v954 = vld [vmem:[%s394 + $0x650] sm:$0xf]
        %v955 = vld [vmem:[%s394 + $0x654] sm:$0xff]
        %v956 = vld [vmem:[%s394 + $0x65c] sm:$0xff]
        %v957 = vld [vmem:[%s394 + $0x664] sm:$0xf]
        %v958 = vld [vmem:[%s394 + $0x668] sm:$0xff]
        %v959 = vld [vmem:[%s394 + $0x670] sm:$0xff]
        %v960 = vld [vmem:[%s394 + $0x678] sm:$0xf]
        %v961 = vld [vmem:[%s394 + $0x67c] sm:$0xff]
        %v962 = vld [vmem:[%s394 + $0x684] sm:$0xff]
        %v963 = vld [vmem:[%s394 + $0x68c] sm:$0xf]
        %v964 = vld [vmem:[%s394 + $0x690] sm:$0xff]
        %v965 = vld [vmem:[%s394 + $0x698] sm:$0xff]
        %v966 = vld [vmem:[%s394 + $0x6a0] sm:$0xf]
        %v967 = vld [vmem:[%s394 + $0x6a4] sm:$0xff]
        %v968 = vld [vmem:[%s394 + $0x6ac] sm:$0xff]
        %v969 = vld [vmem:[%s394 + $0x6b4] sm:$0xf]
        %v970 = vld [vmem:[%s394 + $0x6b8] sm:$0xff]
        %v971 = vld [vmem:[%s394 + $0x6c0] sm:$0xff]
        %v972 = vld [vmem:[%s394 + $0x6c8] sm:$0xf]
        %v973 = vld [vmem:[%s394 + $0x6cc] sm:$0xff]
        %v974 = vld [vmem:[%s394 + $0x6d4] sm:$0xff]
        %v975 = vld [vmem:[%s394 + $0x6dc] sm:$0xf]
        %v976 = vld [vmem:[%s394 + $0x6e0] sm:$0xff]
        %v977 = vld [vmem:[%s394 + $0x6e8] sm:$0xff]
        %v978 = vld [vmem:[%s394 + $0x6f0] sm:$0xf]
        %v979 = vld [vmem:[%s394 + $0x6f4] sm:$0xff]
        %v980 = vld [vmem:[%s394 + $0x6fc] sm:$0xff]
        %v981 = vld [vmem:[%s394 + $0x704] sm:$0xf]
        %v982 = vld [vmem:[%s394 + $0x708] sm:$0xff]
        %v983 = vld [vmem:[%s394 + $0x710] sm:$0xff]
        %v984 = vld [vmem:[%s394 + $0x718] sm:$0xf]
        %v985 = vld [vmem:[%s394 + $0x71c] sm:$0xff]
        %v986 = vld [vmem:[%s394 + $0x724] sm:$0xff]
        %v987 = vld [vmem:[%s394 + $0x72c] sm:$0xf]
        %v988 = vld [vmem:[%s394 + $0x730] sm:$0xff]
        %v989 = vld [vmem:[%s394 + $0x738] sm:$0xff]
        %v990 = vld [vmem:[%s394 + $0x740] sm:$0xf]
        %v991 = vld [vmem:[%s394 + $0x744] sm:$0xff]
        %v992 = vld [vmem:[%s394 + $0x74c] sm:$0xff]
        %v993 = vld [vmem:[%s394 + $0x754] sm:$0xf]
        %v994 = vld [vmem:[%s394 + $0x758] sm:$0xff]
        %v995 = vld [vmem:[%s394 + $0x760] sm:$0xff]
        %v996 = vld [vmem:[%s394 + $0x768] sm:$0xf]
        %v997 = vld [vmem:[%s394 + $0x76c] sm:$0xff]
        %v998 = vld [vmem:[%s394 + $0x774] sm:$0xff]
        %v999 = vld [vmem:[%s394 + $0x77c] sm:$0xf]
        %v1000 = vld [vmem:[%s394 + $0x780] sm:$0xff]
        %v1001 = vld [vmem:[%s394 + $0x788] sm:$0xff]
        %v1002 = vld [vmem:[%s394 + $0x790] sm:$0xf]
        %v1003 = vld [vmem:[%s394 + $0x794] sm:$0xff]
        %v1004 = vld [vmem:[%s394 + $0x79c] sm:$0xff]
        %v1005 = vld [vmem:[%s394 + $0x7a4] sm:$0xf]
        %v1006 = vld [vmem:[%s394 + $0x7a8] sm:$0xff]
        %v1007 = vld [vmem:[%s394 + $0x7b0] sm:$0xff]
        %v1008 = vld [vmem:[%s394 + $0x7b8] sm:$0xf]
        %v1009 = vld [vmem:[%s394 + $0x7bc] sm:$0xff]
        %v1010 = vld [vmem:[%s394 + $0x7c4] sm:$0xff]
        %v1011 = vld [vmem:[%s394 + $0x7cc] sm:$0xf]
        %v1012 = vld [vmem:[%s394 + $0x7d0] sm:$0xff]
        %v1013 = vld [vmem:[%s394 + $0x7d8] sm:$0xff]
        %v1014 = vld [vmem:[%s394 + $0x7e0] sm:$0xf]
        %v1015 = vld [vmem:[%s394 + $0x7e4] sm:$0xff]
        %v1016 = vld [vmem:[%s394 + $0x7ec] sm:$0xff]
        %v1017 = vld [vmem:[%s394 + $0x7f4] sm:$0xf]
        %v1018 = vld [vmem:[%s394 + $0x7f8] sm:$0xff]
        %v1019 = vld [vmem:[%s394 + $0x800] sm:$0xff]
        %v1020 = vld [vmem:[%s394 + $0x808] sm:$0xf]
        %v1021 = vld [vmem:[%s394 + $0x80c] sm:$0xff]
        %v1022 = vld [vmem:[%s394 + $0x814] sm:$0xff]
        %v1023 = vld [vmem:[%s394 + $0x81c] sm:$0xf]
        %v1024 = vld [vmem:[%s394 + $0x820] sm:$0xff]
        %v1025 = vld [vmem:[%s394 + $0x828] sm:$0xff]
        %v1026 = vld [vmem:[%s394 + $0x830] sm:$0xf]
        %v1027 = vld [vmem:[%s394 + $0x834] sm:$0xff]
        %v1028 = vld [vmem:[%s394 + $0x83c] sm:$0xff]
        %v1029 = vld [vmem:[%s394 + $0x844] sm:$0xf]
        %v1030 = vld [vmem:[%s394 + $0x848] sm:$0xff]
        %v1031 = vld [vmem:[%s394 + $0x850] sm:$0xff]
        %v1032 = vld [vmem:[%s394 + $0x858] sm:$0xf]
        %v1033 = vld [vmem:[%s394 + $0x85c] sm:$0xff]
        %v1034 = vld [vmem:[%s394 + $0x864] sm:$0xff]
        %v1035 = vld [vmem:[%s394 + $0x86c] sm:$0xf]
        %v1036 = vld [vmem:[%s394 + $0x870] sm:$0xff]
        %v1037 = vld [vmem:[%s394 + $0x878] sm:$0xff]
        %v1038 = vld [vmem:[%s394 + $0x880] sm:$0xf]
        %v1039 = vld [vmem:[%s394 + $0x884] sm:$0xff]
        %v1040 = vld [vmem:[%s394 + $0x88c] sm:$0xff]
        %v1041 = vld [vmem:[%s394 + $0x894] sm:$0xf]
        %v1042 = vld [vmem:[%s394 + $0x898] sm:$0xff]
        %v1043 = vld [vmem:[%s394 + $0x8a0] sm:$0xff]
        %v1044 = vld [vmem:[%s394 + $0x8a8] sm:$0xf]
        %v1045 = vld [vmem:[%s394 + $0x8ac] sm:$0xff]
        %v1046 = vld [vmem:[%s394 + $0x8b4] sm:$0xff]
        %v1047 = vld [vmem:[%s394 + $0x8bc] sm:$0xf]
        %v1048 = vld [vmem:[%s394 + $0x8c0] sm:$0xff]
        %v1049 = vld [vmem:[%s394 + $0x8c8] sm:$0xff]
        %v1050 = vld [vmem:[%s394 + $0x8d0] sm:$0xf]
        %v1051 = vld [vmem:[%s394 + $0x8d4] sm:$0xff]
        %v1052 = vld [vmem:[%s394 + $0x8dc] sm:$0xff]
        %v1053 = vld [vmem:[%s394 + $0x8e4] sm:$0xf]
        %v1054 = vld [vmem:[%s394 + $0x8e8] sm:$0xff]
        %v1055 = vld [vmem:[%s394 + $0x8f0] sm:$0xff]
        %v1056 = vld [vmem:[%s394 + $0x8f8] sm:$0xf]
        %v1057 = vld [vmem:[%s394 + $0x8fc] sm:$0xff]
        %v1058 = vld [vmem:[%s394 + $0x904] sm:$0xff]
        %v1059 = vld [vmem:[%s394 + $0x90c] sm:$0xf]
        %v1060 = vld [vmem:[%s394 + $0x910] sm:$0xff]
        %v1061 = vld [vmem:[%s394 + $0x918] sm:$0xff]
        %v1062 = vld [vmem:[%s394 + $0x920] sm:$0xf]
        %v1063 = vld [vmem:[%s394 + $0x924] sm:$0xff]
        %v1064 = vld [vmem:[%s394 + $0x92c] sm:$0xff]
        %v1065 = vld [vmem:[%s394 + $0x934] sm:$0xf]
        %v1066 = vld [vmem:[%s394 + $0x938] sm:$0xff]
        %v1067 = vld [vmem:[%s394 + $0x940] sm:$0xff]
        %v1068 = vld [vmem:[%s394 + $0x948] sm:$0xf]
        %v1069 = vld [vmem:[%s394 + $0x94c] sm:$0xff]
        %v1070 = vld [vmem:[%s394 + $0x954] sm:$0xff]
        %v1071 = vld [vmem:[%s394 + $0x95c] sm:$0xf]
        %v1072 = vld [vmem:[%s394 + $0x960] sm:$0xff]
        %v1073 = vld [vmem:[%s394 + $0x968] sm:$0xff]
        %v1074 = vld [vmem:[%s394 + $0x970] sm:$0xf]
        %v1075 = vld [vmem:[%s394 + $0x974] sm:$0xff]
        %v1076 = vld [vmem:[%s394 + $0x97c] sm:$0xff]
        %v1077 = vld [vmem:[%s394 + $0x984] sm:$0xf]
        %v1078 = vld [vmem:[%s394 + $0x988] sm:$0xff]
        %v1079 = vld [vmem:[%s394 + $0x990] sm:$0xff]
        %v1080 = vld [vmem:[%s394 + $0x998] sm:$0xf]
        %v1081 = vld [vmem:[%s394 + $0x99c] sm:$0xff]
        %v1082 = vld [vmem:[%s394 + $0x9a4] sm:$0xff]
        %v1083 = vld [vmem:[%s394 + $0x9ac] sm:$0xf]
        %v1084 = vld [vmem:[%s394 + $0x9b0] sm:$0xff]
        %v1085 = vld [vmem:[%s394 + $0x9b8] sm:$0xff]
        %v1086 = vld [vmem:[%s394 + $0x9c0] sm:$0xf]
        %v1087 = vld [vmem:[%s394 + $0x9c4] sm:$0xff]
        %v1088 = vld [vmem:[%s394 + $0x9cc] sm:$0xff]
        %v1089 = vld [vmem:[%s394 + $0x9d4] sm:$0xf]
        %v1090 = vld [vmem:[%s394 + $0x9d8] sm:$0xff]
        %v1091 = vld [vmem:[%s394 + $0x9e0] sm:$0xff]
        %v1092 = vld [vmem:[%s394 + $0x9e8] sm:$0xf]
        %v1093 = vld [vmem:[%s394 + $0x9ec] sm:$0xff]
        %v1094 = vld [vmem:[%s394 + $0x9f4] sm:$0xff]
        %v1095 = vld [vmem:[%s394 + $0x9fc] sm:$0xf]
        %v1096 = vld [vmem:[%s394 + $0xa00] sm:$0xff]
        %v1097 = vld [vmem:[%s394 + $0xa08] sm:$0xff]
        %v1098 = vld [vmem:[%s394 + $0xa10] sm:$0xf]
        %v1099 = vld [vmem:[%s394 + $0xa14] sm:$0xff]
        %v1100 = vld [vmem:[%s394 + $0xa1c] sm:$0xff]
        %v1101 = vld [vmem:[%s394 + $0xa24] sm:$0xf]
        %v1102 = vld [vmem:[%s394 + $0xa28] sm:$0xff]
        %v1103 = vld [vmem:[%s394 + $0xa30] sm:$0xff]
        %v1104 = vld [vmem:[%s394 + $0xa38] sm:$0xf]
        %v1105 = vld [vmem:[%s394 + $0xa3c] sm:$0xff]
        %v1106 = vld [vmem:[%s394 + $0xa44] sm:$0xff]
        %v1107 = vld [vmem:[%s394 + $0xa4c] sm:$0xf]
        %v1108 = vld [vmem:[%s394 + $0xa50] sm:$0xff]
        %v1109 = vld [vmem:[%s394 + $0xa58] sm:$0xff]
        %v1110 = vld [vmem:[%s394 + $0xa60] sm:$0xf]
        %v1111 = vld [vmem:[%s394 + $0xa64] sm:$0xff]
        %v1112 = vld [vmem:[%s394 + $0xa6c] sm:$0xff]
        %v1113 = vld [vmem:[%s394 + $0xa74] sm:$0xf]
        %v1114 = vld [vmem:[%s394 + $0xa78] sm:$0xff]
        %v1115 = vld [vmem:[%s394 + $0xa80] sm:$0xff]
        %v1116 = vld [vmem:[%s394 + $0xa88] sm:$0xf]
        %v1117 = vld [vmem:[%s394 + $0xa8c] sm:$0xff]
        %v1118 = vld [vmem:[%s394 + $0xa94] sm:$0xff]
        %v1119 = vld [vmem:[%s394 + $0xa9c] sm:$0xf]
        %v1120 = vld [vmem:[%s394 + $0xaa0] sm:$0xff]
        %v1121 = vld [vmem:[%s394 + $0xaa8] sm:$0xff]
        %v1122 = vld [vmem:[%s394 + $0xab0] sm:$0xf]
        %v1123 = vld [vmem:[%s394 + $0xab4] sm:$0xff]
        %v1124 = vld [vmem:[%s394 + $0xabc] sm:$0xff]
        %v1125 = vld [vmem:[%s394 + $0xac4] sm:$0xf]
        %v1126 = vld [vmem:[%s394 + $0xac8] sm:$0xff]
        %v1127 = vld [vmem:[%s394 + $0xad0] sm:$0xff]
        %v1128 = vld [vmem:[%s394 + $0xad8] sm:$0xf]
        %v1129 = vld [vmem:[%s394 + $0xadc] sm:$0xff]
        %v1130 = vld [vmem:[%s394 + $0xae4] sm:$0xff]
        %v1131 = vld [vmem:[%s394 + $0xaec] sm:$0xf]
        %v1132 = vld [vmem:[%s394 + $0xaf0] sm:$0xff]
        %v1133 = vld [vmem:[%s394 + $0xaf8] sm:$0xff]
        %v1134 = vld [vmem:[%s394 + $0xb00] sm:$0xf]
        %v1135 = vld [vmem:[%s394 + $0xb04] sm:$0xff]
        %v1136 = vld [vmem:[%s394 + $0xb0c] sm:$0xff]
        %v1137 = vld [vmem:[%s394 + $0xb14] sm:$0xf]
        %v1138 = vld [vmem:[%s394 + $0xb18] sm:$0xff]
        %v1139 = vld [vmem:[%s394 + $0xb20] sm:$0xff]
        %v1140 = vld [vmem:[%s394 + $0xb28] sm:$0xf]
        %v1141 = vld [vmem:[%s394 + $0xb2c] sm:$0xff]
        %v1142 = vld [vmem:[%s394 + $0xb34] sm:$0xff]
        %v1143 = vld [vmem:[%s394 + $0xb3c] sm:$0xf]
        %v1144 = vld [vmem:[%s394 + $0xb40] sm:$0xff]
        %v1145 = vld [vmem:[%s394 + $0xb48] sm:$0xff]
        %v1146 = vld [vmem:[%s394 + $0xb50] sm:$0xf]
        %v1147 = vld [vmem:[%s394 + $0xb54] sm:$0xff]
        %v1148 = vld [vmem:[%s394 + $0xb5c] sm:$0xff]
        %v1149 = vld [vmem:[%s394 + $0xb64] sm:$0xf]
        %v1150 = vld [vmem:[%s394 + $0xb68] sm:$0xff]
        %v1151 = vld [vmem:[%s394 + $0xb70] sm:$0xff]
        %v1152 = vld [vmem:[%s394 + $0xb78] sm:$0xf]
        %v1153 = vld [vmem:[%s394 + $0xb7c] sm:$0xff]
        %v1154 = vld [vmem:[%s394 + $0xb84] sm:$0xff]
        %v1155 = vld [vmem:[%s394 + $0xb8c] sm:$0xf]
        %v1156 = vld [vmem:[%s394 + $0xb90] sm:$0xff]
        %v1157 = vld [vmem:[%s394 + $0xb98] sm:$0xff]
        %v1158 = vld [vmem:[%s394 + $0xba0] sm:$0xf]
        %v1159 = vld [vmem:[%s394 + $0xba4] sm:$0xff]
        %v1160 = vld [vmem:[%s394 + $0xbac] sm:$0xff]
        %v1161 = vld [vmem:[%s394 + $0xbb4] sm:$0xf]
        %v1162 = vld [vmem:[%s394 + $0xbb8] sm:$0xff]
        %v1163 = vld [vmem:[%s394 + $0xbc0] sm:$0xff]
        %v1164 = vld [vmem:[%s394 + $0xbc8] sm:$0xf]
        %v1165 = vld [vmem:[%s394 + $0xbcc] sm:$0xff]
        %v1166 = vld [vmem:[%s394 + $0xbd4] sm:$0xff]
        %v1167 = vld [vmem:[%s394 + $0xbdc] sm:$0xf]
        %v1168 = vld [vmem:[%s394 + $0xbe0] sm:$0xff]
        %v1169 = vld [vmem:[%s394 + $0xbe8] sm:$0xff]
        %v1170 = vld [vmem:[%s394 + $0xbf0] sm:$0xf]
        %v1171 = vld [vmem:[%s394 + $0xbf4] sm:$0xff]
        %v1172 = vld [vmem:[%s394 + $0xbfc] sm:$0xff]
        %v1173 = vld [vmem:[%s394 + $0xc04] sm:$0xf]
        %v1174 = vld [vmem:[%s394 + $0xc08] sm:$0xff]
        %v1175 = vld [vmem:[%s394 + $0xc10] sm:$0xff]
        %v1176 = vld [vmem:[%s394 + $0xc18] sm:$0xf]
        %v1177 = vld [vmem:[%s394 + $0xc1c] sm:$0xff]
        %v1178 = vld [vmem:[%s394 + $0xc24] sm:$0xff]
        %v1179 = vld [vmem:[%s394 + $0xc2c] sm:$0xf]
        %v1180 = vld [vmem:[%s394 + $0xc30] sm:$0xff]
        %v1181 = vld [vmem:[%s394 + $0xc38] sm:$0xff]
        %v1182 = vld [vmem:[%s394 + $0xc40] sm:$0xf]
        %v1183 = vld [vmem:[%s394 + $0xc44] sm:$0xff]
        %v1184 = vld [vmem:[%s394 + $0xc4c] sm:$0xff]
        %v1185 = vld [vmem:[%s394 + $0xc54] sm:$0xf]
        %v1186 = vld [vmem:[%s394 + $0xc58] sm:$0xff]
        %v1187 = vld [vmem:[%s394 + $0xc60] sm:$0xff]
        %v1188 = vld [vmem:[%s394 + $0xc68] sm:$0xf]
        %v1189 = vld [vmem:[%s394 + $0xc6c] sm:$0xff]
        %v1190 = vld [vmem:[%s394 + $0xc74] sm:$0xff]
        %v1191 = vld [vmem:[%s394 + $0xc7c] sm:$0xf]
        %v1672 = vunpack.c.l.b16 %v712
        %v1673 = vunpack.c.h.b16 %v712
        %v1674 = vunpack.c.l.b16 %v713
        %v1675 = vunpack.c.h.b16 %v713
        %v1676 = vunpack.c.l.b16 %v714
        %v1677 = vunpack.c.l.b16 %v715
        %v1678 = vunpack.c.h.b16 %v715
        %v1679 = vunpack.c.l.b16 %v716
        %v1680 = vunpack.c.h.b16 %v716
        %v1681 = vunpack.c.l.b16 %v717
        %v1682 = vunpack.c.l.b16 %v718
        %v1683 = vunpack.c.h.b16 %v718
        %v1684 = vunpack.c.l.b16 %v719
        %v1685 = vunpack.c.h.b16 %v719
        %v1686 = vunpack.c.l.b16 %v720
        %v1687 = vunpack.c.l.b16 %v721
        %v1688 = vunpack.c.h.b16 %v721
        %v1689 = vunpack.c.l.b16 %v722
        %v1690 = vunpack.c.h.b16 %v722
        %v1691 = vunpack.c.l.b16 %v723
        %v1692 = vunpack.c.l.b16 %v724
        %v1693 = vunpack.c.h.b16 %v724
        %v1694 = vunpack.c.l.b16 %v725
        %v1695 = vunpack.c.h.b16 %v725
        %v1696 = vunpack.c.l.b16 %v726
        %v1697 = vunpack.c.l.b16 %v727
        %v1698 = vunpack.c.h.b16 %v727
        %v1699 = vunpack.c.l.b16 %v728
        %v1700 = vunpack.c.h.b16 %v728
        %v1701 = vunpack.c.l.b16 %v729
        %v1702 = vunpack.c.l.b16 %v730
        %v1703 = vunpack.c.h.b16 %v730
        %v1704 = vunpack.c.l.b16 %v731
        %v1705 = vunpack.c.h.b16 %v731
        %v1706 = vunpack.c.l.b16 %v732
        %v1707 = vunpack.c.l.b16 %v733
        %v1708 = vunpack.c.h.b16 %v733
        %v1709 = vunpack.c.l.b16 %v734
        %v1710 = vunpack.c.h.b16 %v734
        %v1711 = vunpack.c.l.b16 %v735
        %v1712 = vunpack.c.l.b16 %v736
        %v1713 = vunpack.c.h.b16 %v736
        %v1714 = vunpack.c.l.b16 %v737
        %v1715 = vunpack.c.h.b16 %v737
        %v1716 = vunpack.c.l.b16 %v738
        %v1717 = vunpack.c.l.b16 %v739
        %v1718 = vunpack.c.h.b16 %v739
        %v1719 = vunpack.c.l.b16 %v740
        %v1720 = vunpack.c.h.b16 %v740
        %v1721 = vunpack.c.l.b16 %v741
        %v1722 = vunpack.c.l.b16 %v742
        %v1723 = vunpack.c.h.b16 %v742
        %v1724 = vunpack.c.l.b16 %v743
        %v1725 = vunpack.c.h.b16 %v743
        %v1726 = vunpack.c.l.b16 %v744
        %v1727 = vunpack.c.l.b16 %v745
        %v1728 = vunpack.c.h.b16 %v745
        %v1729 = vunpack.c.l.b16 %v746
        %v1730 = vunpack.c.h.b16 %v746
        %v1731 = vunpack.c.l.b16 %v747
        %v1732 = vunpack.c.l.b16 %v748
        %v1733 = vunpack.c.h.b16 %v748
        %v1734 = vunpack.c.l.b16 %v749
        %v1735 = vunpack.c.h.b16 %v749
        %v1736 = vunpack.c.l.b16 %v750
        %v1737 = vunpack.c.l.b16 %v751
        %v1738 = vunpack.c.h.b16 %v751
        %v1739 = vunpack.c.l.b16 %v752
        %v1740 = vunpack.c.h.b16 %v752
        %v1741 = vunpack.c.l.b16 %v753
        %v1742 = vunpack.c.l.b16 %v754
        %v1743 = vunpack.c.h.b16 %v754
        %v1744 = vunpack.c.l.b16 %v755
        %v1745 = vunpack.c.h.b16 %v755
        %v1746 = vunpack.c.l.b16 %v756
        %v1747 = vunpack.c.l.b16 %v757
        %v1748 = vunpack.c.h.b16 %v757
        %v1749 = vunpack.c.l.b16 %v758
        %v1750 = vunpack.c.h.b16 %v758
        %v1751 = vunpack.c.l.b16 %v759
        %v1752 = vunpack.c.l.b16 %v760
        %v1753 = vunpack.c.h.b16 %v760
        %v1754 = vunpack.c.l.b16 %v761
        %v1755 = vunpack.c.h.b16 %v761
        %v1756 = vunpack.c.l.b16 %v762
        %v1757 = vunpack.c.l.b16 %v763
        %v1758 = vunpack.c.h.b16 %v763
        %v1759 = vunpack.c.l.b16 %v764
        %v1760 = vunpack.c.h.b16 %v764
        %v1761 = vunpack.c.l.b16 %v765
        %v1762 = vunpack.c.l.b16 %v766
        %v1763 = vunpack.c.h.b16 %v766
        %v1764 = vunpack.c.l.b16 %v767
        %v1765 = vunpack.c.h.b16 %v767
        %v1766 = vunpack.c.l.b16 %v768
        %v1767 = vunpack.c.l.b16 %v769
        %v1768 = vunpack.c.h.b16 %v769
        %v1769 = vunpack.c.l.b16 %v770
        %v1770 = vunpack.c.h.b16 %v770
        %v1771 = vunpack.c.l.b16 %v771
        %v1772 = vunpack.c.l.b16 %v772
        %v1773 = vunpack.c.h.b16 %v772
        %v1774 = vunpack.c.l.b16 %v773
        %v1775 = vunpack.c.h.b16 %v773
        %v1776 = vunpack.c.l.b16 %v774
        %v1777 = vunpack.c.l.b16 %v775
        %v1778 = vunpack.c.h.b16 %v775
        %v1779 = vunpack.c.l.b16 %v776
        %v1780 = vunpack.c.h.b16 %v776
        %v1781 = vunpack.c.l.b16 %v777
        %v1782 = vunpack.c.l.b16 %v778
        %v1783 = vunpack.c.h.b16 %v778
        %v1784 = vunpack.c.l.b16 %v779
        %v1785 = vunpack.c.h.b16 %v779
        %v1786 = vunpack.c.l.b16 %v780
        %v1787 = vunpack.c.l.b16 %v781
        %v1788 = vunpack.c.h.b16 %v781
        %v1789 = vunpack.c.l.b16 %v782
        %v1790 = vunpack.c.h.b16 %v782
        %v1791 = vunpack.c.l.b16 %v783
        %v1792 = vunpack.c.l.b16 %v784
        %v1793 = vunpack.c.h.b16 %v784
        %v1794 = vunpack.c.l.b16 %v785
        %v1795 = vunpack.c.h.b16 %v785
        %v1796 = vunpack.c.l.b16 %v786
        %v1797 = vunpack.c.l.b16 %v787
        %v1798 = vunpack.c.h.b16 %v787
        %v1799 = vunpack.c.l.b16 %v788
        %v1800 = vunpack.c.h.b16 %v788
        %v1801 = vunpack.c.l.b16 %v789
        %v1802 = vunpack.c.l.b16 %v790
        %v1803 = vunpack.c.h.b16 %v790
        %v1804 = vunpack.c.l.b16 %v791
        %v1805 = vunpack.c.h.b16 %v791
        %v1806 = vunpack.c.l.b16 %v792
        %v1807 = vunpack.c.l.b16 %v793
        %v1808 = vunpack.c.h.b16 %v793
        %v1809 = vunpack.c.l.b16 %v794
        %v1810 = vunpack.c.h.b16 %v794
        %v1811 = vunpack.c.l.b16 %v795
        %v1812 = vunpack.c.l.b16 %v796
        %v1813 = vunpack.c.h.b16 %v796
        %v1814 = vunpack.c.l.b16 %v797
        %v1815 = vunpack.c.h.b16 %v797
        %v1816 = vunpack.c.l.b16 %v798
        %v1817 = vunpack.c.l.b16 %v799
        %v1818 = vunpack.c.h.b16 %v799
        %v1819 = vunpack.c.l.b16 %v800
        %v1820 = vunpack.c.h.b16 %v800
        %v1821 = vunpack.c.l.b16 %v801
        %v1822 = vunpack.c.l.b16 %v802
        %v1823 = vunpack.c.h.b16 %v802
        %v1824 = vunpack.c.l.b16 %v803
        %v1825 = vunpack.c.h.b16 %v803
        %v1826 = vunpack.c.l.b16 %v804
        %v1827 = vunpack.c.l.b16 %v805
        %v1828 = vunpack.c.h.b16 %v805
        %v1829 = vunpack.c.l.b16 %v806
        %v1830 = vunpack.c.h.b16 %v806
        %v1831 = vunpack.c.l.b16 %v807
        %v1832 = vunpack.c.l.b16 %v808
        %v1833 = vunpack.c.h.b16 %v808
        %v1834 = vunpack.c.l.b16 %v809
        %v1835 = vunpack.c.h.b16 %v809
        %v1836 = vunpack.c.l.b16 %v810
        %v1837 = vunpack.c.l.b16 %v811
        %v1838 = vunpack.c.h.b16 %v811
        %v1839 = vunpack.c.l.b16 %v812
        %v1840 = vunpack.c.h.b16 %v812
        %v1841 = vunpack.c.l.b16 %v813
        %v1842 = vunpack.c.l.b16 %v814
        %v1843 = vunpack.c.h.b16 %v814
        %v1844 = vunpack.c.l.b16 %v815
        %v1845 = vunpack.c.h.b16 %v815
        %v1846 = vunpack.c.l.b16 %v816
        %v1847 = vunpack.c.l.b16 %v817
        %v1848 = vunpack.c.h.b16 %v817
        %v1849 = vunpack.c.l.b16 %v818
        %v1850 = vunpack.c.h.b16 %v818
        %v1851 = vunpack.c.l.b16 %v819
        %v1852 = vunpack.c.l.b16 %v820
        %v1853 = vunpack.c.h.b16 %v820
        %v1854 = vunpack.c.l.b16 %v821
        %v1855 = vunpack.c.h.b16 %v821
        %v1856 = vunpack.c.l.b16 %v822
        %v1857 = vunpack.c.l.b16 %v823
        %v1858 = vunpack.c.h.b16 %v823
        %v1859 = vunpack.c.l.b16 %v824
        %v1860 = vunpack.c.h.b16 %v824
        %v1861 = vunpack.c.l.b16 %v825
        %v1862 = vunpack.c.l.b16 %v826
        %v1863 = vunpack.c.h.b16 %v826
        %v1864 = vunpack.c.l.b16 %v827
        %v1865 = vunpack.c.h.b16 %v827
        %v1866 = vunpack.c.l.b16 %v828
        %v1867 = vunpack.c.l.b16 %v829
        %v1868 = vunpack.c.h.b16 %v829
        %v1869 = vunpack.c.l.b16 %v830
        %v1870 = vunpack.c.h.b16 %v830
        %v1871 = vunpack.c.l.b16 %v831
        %v1872 = vunpack.c.l.b16 %v832
        %v1873 = vunpack.c.h.b16 %v832
        %v1874 = vunpack.c.l.b16 %v833
        %v1875 = vunpack.c.h.b16 %v833
        %v1876 = vunpack.c.l.b16 %v834
        %v1877 = vunpack.c.l.b16 %v835
        %v1878 = vunpack.c.h.b16 %v835
        %v1879 = vunpack.c.l.b16 %v836
        %v1880 = vunpack.c.h.b16 %v836
        %v1881 = vunpack.c.l.b16 %v837
        %v1882 = vunpack.c.l.b16 %v838
        %v1883 = vunpack.c.h.b16 %v838
        %v1884 = vunpack.c.l.b16 %v839
        %v1885 = vunpack.c.h.b16 %v839
        %v1886 = vunpack.c.l.b16 %v840
        %v1887 = vunpack.c.l.b16 %v841
        %v1888 = vunpack.c.h.b16 %v841
        %v1889 = vunpack.c.l.b16 %v842
        %v1890 = vunpack.c.h.b16 %v842
        %v1891 = vunpack.c.l.b16 %v843
        %v1892 = vunpack.c.l.b16 %v844
        %v1893 = vunpack.c.h.b16 %v844
        %v1894 = vunpack.c.l.b16 %v845
        %v1895 = vunpack.c.h.b16 %v845
        %v1896 = vunpack.c.l.b16 %v846
        %v1897 = vunpack.c.l.b16 %v847
        %v1898 = vunpack.c.h.b16 %v847
        %v1899 = vunpack.c.l.b16 %v848
        %v1900 = vunpack.c.h.b16 %v848
        %v1901 = vunpack.c.l.b16 %v849
        %v1902 = vunpack.c.l.b16 %v850
        %v1903 = vunpack.c.h.b16 %v850
        %v1904 = vunpack.c.l.b16 %v851
        %v1905 = vunpack.c.h.b16 %v851
        %v1906 = vunpack.c.l.b16 %v852
        %v1907 = vunpack.c.l.b16 %v853
        %v1908 = vunpack.c.h.b16 %v853
        %v1909 = vunpack.c.l.b16 %v854
        %v1910 = vunpack.c.h.b16 %v854
        %v1911 = vunpack.c.l.b16 %v855
        %v1912 = vunpack.c.l.b16 %v856
        %v1913 = vunpack.c.h.b16 %v856
        %v1914 = vunpack.c.l.b16 %v857
        %v1915 = vunpack.c.h.b16 %v857
        %v1916 = vunpack.c.l.b16 %v858
        %v1917 = vunpack.c.l.b16 %v859
        %v1918 = vunpack.c.h.b16 %v859
        %v1919 = vunpack.c.l.b16 %v860
        %v1920 = vunpack.c.h.b16 %v860
        %v1921 = vunpack.c.l.b16 %v861
        %v1922 = vunpack.c.l.b16 %v862
        %v1923 = vunpack.c.h.b16 %v862
        %v1924 = vunpack.c.l.b16 %v863
        %v1925 = vunpack.c.h.b16 %v863
        %v1926 = vunpack.c.l.b16 %v864
        %v1927 = vunpack.c.l.b16 %v865
        %v1928 = vunpack.c.h.b16 %v865
        %v1929 = vunpack.c.l.b16 %v866
        %v1930 = vunpack.c.h.b16 %v866
        %v1931 = vunpack.c.l.b16 %v867
        %v1932 = vunpack.c.l.b16 %v868
        %v1933 = vunpack.c.h.b16 %v868
        %v1934 = vunpack.c.l.b16 %v869
        %v1935 = vunpack.c.h.b16 %v869
        %v1936 = vunpack.c.l.b16 %v870
        %v1937 = vunpack.c.l.b16 %v871
        %v1938 = vunpack.c.h.b16 %v871
        %v1939 = vunpack.c.l.b16 %v872
        %v1940 = vunpack.c.h.b16 %v872
        %v1941 = vunpack.c.l.b16 %v873
        %v1942 = vunpack.c.l.b16 %v874
        %v1943 = vunpack.c.h.b16 %v874
        %v1944 = vunpack.c.l.b16 %v875
        %v1945 = vunpack.c.h.b16 %v875
        %v1946 = vunpack.c.l.b16 %v876
        %v1947 = vunpack.c.l.b16 %v877
        %v1948 = vunpack.c.h.b16 %v877
        %v1949 = vunpack.c.l.b16 %v878
        %v1950 = vunpack.c.h.b16 %v878
        %v1951 = vunpack.c.l.b16 %v879
        %v1952 = vunpack.c.l.b16 %v880
        %v1953 = vunpack.c.h.b16 %v880
        %v1954 = vunpack.c.l.b16 %v881
        %v1955 = vunpack.c.h.b16 %v881
        %v1956 = vunpack.c.l.b16 %v882
        %v1957 = vunpack.c.l.b16 %v883
        %v1958 = vunpack.c.h.b16 %v883
        %v1959 = vunpack.c.l.b16 %v884
        %v1960 = vunpack.c.h.b16 %v884
        %v1961 = vunpack.c.l.b16 %v885
        %v1962 = vunpack.c.l.b16 %v886
        %v1963 = vunpack.c.h.b16 %v886
        %v1964 = vunpack.c.l.b16 %v887
        %v1965 = vunpack.c.h.b16 %v887
        %v1966 = vunpack.c.l.b16 %v888
        %v1967 = vunpack.c.l.b16 %v889
        %v1968 = vunpack.c.h.b16 %v889
        %v1969 = vunpack.c.l.b16 %v890
        %v1970 = vunpack.c.h.b16 %v890
        %v1971 = vunpack.c.l.b16 %v891
        %v1972 = vunpack.c.l.b16 %v892
        %v1973 = vunpack.c.h.b16 %v892
        %v1974 = vunpack.c.l.b16 %v893
        %v1975 = vunpack.c.h.b16 %v893
        %v1976 = vunpack.c.l.b16 %v894
        %v1977 = vunpack.c.l.b16 %v895
        %v1978 = vunpack.c.h.b16 %v895
        %v1979 = vunpack.c.l.b16 %v896
        %v1980 = vunpack.c.h.b16 %v896
        %v1981 = vunpack.c.l.b16 %v897
        %v1982 = vunpack.c.l.b16 %v898
        %v1983 = vunpack.c.h.b16 %v898
        %v1984 = vunpack.c.l.b16 %v899
        %v1985 = vunpack.c.h.b16 %v899
        %v1986 = vunpack.c.l.b16 %v900
        %v1987 = vunpack.c.l.b16 %v901
        %v1988 = vunpack.c.h.b16 %v901
        %v1989 = vunpack.c.l.b16 %v902
        %v1990 = vunpack.c.h.b16 %v902
        %v1991 = vunpack.c.l.b16 %v903
        %v1992 = vunpack.c.l.b16 %v904
        %v1993 = vunpack.c.h.b16 %v904
        %v1994 = vunpack.c.l.b16 %v905
        %v1995 = vunpack.c.h.b16 %v905
        %v1996 = vunpack.c.l.b16 %v906
        %v1997 = vunpack.c.l.b16 %v907
        %v1998 = vunpack.c.h.b16 %v907
        %v1999 = vunpack.c.l.b16 %v908
        %v2000 = vunpack.c.h.b16 %v908
        %v2001 = vunpack.c.l.b16 %v909
        %v2002 = vunpack.c.l.b16 %v910
        %v2003 = vunpack.c.h.b16 %v910
        %v2004 = vunpack.c.l.b16 %v911
        %v2005 = vunpack.c.h.b16 %v911
        %v2006 = vunpack.c.l.b16 %v912
        %v2007 = vunpack.c.l.b16 %v913
        %v2008 = vunpack.c.h.b16 %v913
        %v2009 = vunpack.c.l.b16 %v914
        %v2010 = vunpack.c.h.b16 %v914
        %v2011 = vunpack.c.l.b16 %v915
        %v2012 = vunpack.c.l.b16 %v916
        %v2013 = vunpack.c.h.b16 %v916
        %v2014 = vunpack.c.l.b16 %v917
        %v2015 = vunpack.c.h.b16 %v917
        %v2016 = vunpack.c.l.b16 %v918
        %v2017 = vunpack.c.l.b16 %v919
        %v2018 = vunpack.c.h.b16 %v919
        %v2019 = vunpack.c.l.b16 %v920
        %v2020 = vunpack.c.h.b16 %v920
        %v2021 = vunpack.c.l.b16 %v921
        %v2022 = vunpack.c.l.b16 %v922
        %v2023 = vunpack.c.h.b16 %v922
        %v2024 = vunpack.c.l.b16 %v923
        %v2025 = vunpack.c.h.b16 %v923
        %v2026 = vunpack.c.l.b16 %v924
        %v2027 = vunpack.c.l.b16 %v925
        %v2028 = vunpack.c.h.b16 %v925
        %v2029 = vunpack.c.l.b16 %v926
        %v2030 = vunpack.c.h.b16 %v926
        %v2031 = vunpack.c.l.b16 %v927
        %v2032 = vunpack.c.l.b16 %v928
        %v2033 = vunpack.c.h.b16 %v928
        %v2034 = vunpack.c.l.b16 %v929
        %v2035 = vunpack.c.h.b16 %v929
        %v2036 = vunpack.c.l.b16 %v930
        %v2037 = vunpack.c.l.b16 %v931
        %v2038 = vunpack.c.h.b16 %v931
        %v2039 = vunpack.c.l.b16 %v932
        %v2040 = vunpack.c.h.b16 %v932
        %v2041 = vunpack.c.l.b16 %v933
        %v2042 = vunpack.c.l.b16 %v934
        %v2043 = vunpack.c.h.b16 %v934
        %v2044 = vunpack.c.l.b16 %v935
        %v2045 = vunpack.c.h.b16 %v935
        %v2046 = vunpack.c.l.b16 %v936
        %v2047 = vunpack.c.l.b16 %v937
        %v2048 = vunpack.c.h.b16 %v937
        %v2049 = vunpack.c.l.b16 %v938
        %v2050 = vunpack.c.h.b16 %v938
        %v2051 = vunpack.c.l.b16 %v939
        %v2052 = vunpack.c.l.b16 %v940
        %v2053 = vunpack.c.h.b16 %v940
        %v2054 = vunpack.c.l.b16 %v941
        %v2055 = vunpack.c.h.b16 %v941
        %v2056 = vunpack.c.l.b16 %v942
        %v2057 = vunpack.c.l.b16 %v943
        %v2058 = vunpack.c.h.b16 %v943
        %v2059 = vunpack.c.l.b16 %v944
        %v2060 = vunpack.c.h.b16 %v944
        %v2061 = vunpack.c.l.b16 %v945
        %v2062 = vunpack.c.l.b16 %v946
        %v2063 = vunpack.c.h.b16 %v946
        %v2064 = vunpack.c.l.b16 %v947
        %v2065 = vunpack.c.h.b16 %v947
        %v2066 = vunpack.c.l.b16 %v948
        %v2067 = vunpack.c.l.b16 %v949
        %v2068 = vunpack.c.h.b16 %v949
        %v2069 = vunpack.c.l.b16 %v950
        %v2070 = vunpack.c.h.b16 %v950
        %v2071 = vunpack.c.l.b16 %v951
        %v2072 = vunpack.c.l.b16 %v952
        %v2073 = vunpack.c.h.b16 %v952
        %v2074 = vunpack.c.l.b16 %v953
        %v2075 = vunpack.c.h.b16 %v953
        %v2076 = vunpack.c.l.b16 %v954
        %v2077 = vunpack.c.l.b16 %v955
        %v2078 = vunpack.c.h.b16 %v955
        %v2079 = vunpack.c.l.b16 %v956
        %v2080 = vunpack.c.h.b16 %v956
        %v2081 = vunpack.c.l.b16 %v957
        %v2082 = vunpack.c.l.b16 %v958
        %v2083 = vunpack.c.h.b16 %v958
        %v2084 = vunpack.c.l.b16 %v959
        %v2085 = vunpack.c.h.b16 %v959
        %v2086 = vunpack.c.l.b16 %v960
        %v2087 = vunpack.c.l.b16 %v961
        %v2088 = vunpack.c.h.b16 %v961
        %v2089 = vunpack.c.l.b16 %v962
        %v2090 = vunpack.c.h.b16 %v962
        %v2091 = vunpack.c.l.b16 %v963
        %v2092 = vunpack.c.l.b16 %v964
        %v2093 = vunpack.c.h.b16 %v964
        %v2094 = vunpack.c.l.b16 %v965
        %v2095 = vunpack.c.h.b16 %v965
        %v2096 = vunpack.c.l.b16 %v966
        %v2097 = vunpack.c.l.b16 %v967
        %v2098 = vunpack.c.h.b16 %v967
        %v2099 = vunpack.c.l.b16 %v968
        %v2100 = vunpack.c.h.b16 %v968
        %v2101 = vunpack.c.l.b16 %v969
        %v2102 = vunpack.c.l.b16 %v970
        %v2103 = vunpack.c.h.b16 %v970
        %v2104 = vunpack.c.l.b16 %v971
        %v2105 = vunpack.c.h.b16 %v971
        %v2106 = vunpack.c.l.b16 %v972
        %v2107 = vunpack.c.l.b16 %v973
        %v2108 = vunpack.c.h.b16 %v973
        %v2109 = vunpack.c.l.b16 %v974
        %v2110 = vunpack.c.h.b16 %v974
        %v2111 = vunpack.c.l.b16 %v975
        %v2112 = vunpack.c.l.b16 %v976
        %v2113 = vunpack.c.h.b16 %v976
        %v2114 = vunpack.c.l.b16 %v977
        %v2115 = vunpack.c.h.b16 %v977
        %v2116 = vunpack.c.l.b16 %v978
        %v2117 = vunpack.c.l.b16 %v979
        %v2118 = vunpack.c.h.b16 %v979
        %v2119 = vunpack.c.l.b16 %v980
        %v2120 = vunpack.c.h.b16 %v980
        %v2121 = vunpack.c.l.b16 %v981
        %v2122 = vunpack.c.l.b16 %v982
        %v2123 = vunpack.c.h.b16 %v982
        %v2124 = vunpack.c.l.b16 %v983
        %v2125 = vunpack.c.h.b16 %v983
        %v2126 = vunpack.c.l.b16 %v984
        %v2127 = vunpack.c.l.b16 %v985
        %v2128 = vunpack.c.h.b16 %v985
        %v2129 = vunpack.c.l.b16 %v986
        %v2130 = vunpack.c.h.b16 %v986
        %v2131 = vunpack.c.l.b16 %v987
        %v2132 = vunpack.c.l.b16 %v988
        %v2133 = vunpack.c.h.b16 %v988
        %v2134 = vunpack.c.l.b16 %v989
        %v2135 = vunpack.c.h.b16 %v989
        %v2136 = vunpack.c.l.b16 %v990
        %v2137 = vunpack.c.l.b16 %v991
        %v2138 = vunpack.c.h.b16 %v991
        %v2139 = vunpack.c.l.b16 %v992
        %v2140 = vunpack.c.h.b16 %v992
        %v2141 = vunpack.c.l.b16 %v993
        %v2142 = vunpack.c.l.b16 %v994
        %v2143 = vunpack.c.h.b16 %v994
        %v2144 = vunpack.c.l.b16 %v995
        %v2145 = vunpack.c.h.b16 %v995
        %v2146 = vunpack.c.l.b16 %v996
        %v2147 = vunpack.c.l.b16 %v997
        %v2148 = vunpack.c.h.b16 %v997
        %v2149 = vunpack.c.l.b16 %v998
        %v2150 = vunpack.c.h.b16 %v998
        %v2151 = vunpack.c.l.b16 %v999
        %v2152 = vunpack.c.l.b16 %v1000
        %v2153 = vunpack.c.h.b16 %v1000
        %v2154 = vunpack.c.l.b16 %v1001
        %v2155 = vunpack.c.h.b16 %v1001
        %v2156 = vunpack.c.l.b16 %v1002
        %v2157 = vunpack.c.l.b16 %v1003
        %v2158 = vunpack.c.h.b16 %v1003
        %v2159 = vunpack.c.l.b16 %v1004
        %v2160 = vunpack.c.h.b16 %v1004
        %v2161 = vunpack.c.l.b16 %v1005
        %v2162 = vunpack.c.l.b16 %v1006
        %v2163 = vunpack.c.h.b16 %v1006
        %v2164 = vunpack.c.l.b16 %v1007
        %v2165 = vunpack.c.h.b16 %v1007
        %v2166 = vunpack.c.l.b16 %v1008
        %v2167 = vunpack.c.l.b16 %v1009
        %v2168 = vunpack.c.h.b16 %v1009
        %v2169 = vunpack.c.l.b16 %v1010
        %v2170 = vunpack.c.h.b16 %v1010
        %v2171 = vunpack.c.l.b16 %v1011
        %v2172 = vunpack.c.l.b16 %v1012
        %v2173 = vunpack.c.h.b16 %v1012
        %v2174 = vunpack.c.l.b16 %v1013
        %v2175 = vunpack.c.h.b16 %v1013
        %v2176 = vunpack.c.l.b16 %v1014
        %v2177 = vunpack.c.l.b16 %v1015
        %v2178 = vunpack.c.h.b16 %v1015
        %v2179 = vunpack.c.l.b16 %v1016
        %v2180 = vunpack.c.h.b16 %v1016
        %v2181 = vunpack.c.l.b16 %v1017
        %v2182 = vunpack.c.l.b16 %v1018
        %v2183 = vunpack.c.h.b16 %v1018
        %v2184 = vunpack.c.l.b16 %v1019
        %v2185 = vunpack.c.h.b16 %v1019
        %v2186 = vunpack.c.l.b16 %v1020
        %v2187 = vunpack.c.l.b16 %v1021
        %v2188 = vunpack.c.h.b16 %v1021
        %v2189 = vunpack.c.l.b16 %v1022
        %v2190 = vunpack.c.h.b16 %v1022
        %v2191 = vunpack.c.l.b16 %v1023
        %v2192 = vunpack.c.l.b16 %v1024
        %v2193 = vunpack.c.h.b16 %v1024
        %v2194 = vunpack.c.l.b16 %v1025
        %v2195 = vunpack.c.h.b16 %v1025
        %v2196 = vunpack.c.l.b16 %v1026
        %v2197 = vunpack.c.l.b16 %v1027
        %v2198 = vunpack.c.h.b16 %v1027
        %v2199 = vunpack.c.l.b16 %v1028
        %v2200 = vunpack.c.h.b16 %v1028
        %v2201 = vunpack.c.l.b16 %v1029
        %v2202 = vunpack.c.l.b16 %v1030
        %v2203 = vunpack.c.h.b16 %v1030
        %v2204 = vunpack.c.l.b16 %v1031
        %v2205 = vunpack.c.h.b16 %v1031
        %v2206 = vunpack.c.l.b16 %v1032
        %v2207 = vunpack.c.l.b16 %v1033
        %v2208 = vunpack.c.h.b16 %v1033
        %v2209 = vunpack.c.l.b16 %v1034
        %v2210 = vunpack.c.h.b16 %v1034
        %v2211 = vunpack.c.l.b16 %v1035
        %v2212 = vunpack.c.l.b16 %v1036
        %v2213 = vunpack.c.h.b16 %v1036
        %v2214 = vunpack.c.l.b16 %v1037
        %v2215 = vunpack.c.h.b16 %v1037
        %v2216 = vunpack.c.l.b16 %v1038
        %v2217 = vunpack.c.l.b16 %v1039
        %v2218 = vunpack.c.h.b16 %v1039
        %v2219 = vunpack.c.l.b16 %v1040
        %v2220 = vunpack.c.h.b16 %v1040
        %v2221 = vunpack.c.l.b16 %v1041
        %v2222 = vunpack.c.l.b16 %v1042
        %v2223 = vunpack.c.h.b16 %v1042
        %v2224 = vunpack.c.l.b16 %v1043
        %v2225 = vunpack.c.h.b16 %v1043
        %v2226 = vunpack.c.l.b16 %v1044
        %v2227 = vunpack.c.l.b16 %v1045
        %v2228 = vunpack.c.h.b16 %v1045
        %v2229 = vunpack.c.l.b16 %v1046
        %v2230 = vunpack.c.h.b16 %v1046
        %v2231 = vunpack.c.l.b16 %v1047
        %v2232 = vunpack.c.l.b16 %v1048
        %v2233 = vunpack.c.h.b16 %v1048
        %v2234 = vunpack.c.l.b16 %v1049
        %v2235 = vunpack.c.h.b16 %v1049
        %v2236 = vunpack.c.l.b16 %v1050
        %v2237 = vunpack.c.l.b16 %v1051
        %v2238 = vunpack.c.h.b16 %v1051
        %v2239 = vunpack.c.l.b16 %v1052
        %v2240 = vunpack.c.h.b16 %v1052
        %v2241 = vunpack.c.l.b16 %v1053
        %v2242 = vunpack.c.l.b16 %v1054
        %v2243 = vunpack.c.h.b16 %v1054
        %v2244 = vunpack.c.l.b16 %v1055
        %v2245 = vunpack.c.h.b16 %v1055
        %v2246 = vunpack.c.l.b16 %v1056
        %v2247 = vunpack.c.l.b16 %v1057
        %v2248 = vunpack.c.h.b16 %v1057
        %v2249 = vunpack.c.l.b16 %v1058
        %v2250 = vunpack.c.h.b16 %v1058
        %v2251 = vunpack.c.l.b16 %v1059
        %v2252 = vunpack.c.l.b16 %v1060
        %v2253 = vunpack.c.h.b16 %v1060
        %v2254 = vunpack.c.l.b16 %v1061
        %v2255 = vunpack.c.h.b16 %v1061
        %v2256 = vunpack.c.l.b16 %v1062
        %v2257 = vunpack.c.l.b16 %v1063
        %v2258 = vunpack.c.h.b16 %v1063
        %v2259 = vunpack.c.l.b16 %v1064
        %v2260 = vunpack.c.h.b16 %v1064
        %v2261 = vunpack.c.l.b16 %v1065
        %v2262 = vunpack.c.l.b16 %v1066
        %v2263 = vunpack.c.h.b16 %v1066
        %v2264 = vunpack.c.l.b16 %v1067
        %v2265 = vunpack.c.h.b16 %v1067
        %v2266 = vunpack.c.l.b16 %v1068
        %v2267 = vunpack.c.l.b16 %v1069
        %v2268 = vunpack.c.h.b16 %v1069
        %v2269 = vunpack.c.l.b16 %v1070
        %v2270 = vunpack.c.h.b16 %v1070
        %v2271 = vunpack.c.l.b16 %v1071
        %v2272 = vunpack.c.l.b16 %v1072
        %v2273 = vunpack.c.h.b16 %v1072
        %v2274 = vunpack.c.l.b16 %v1073
        %v2275 = vunpack.c.h.b16 %v1073
        %v2276 = vunpack.c.l.b16 %v1074
        %v2277 = vunpack.c.l.b16 %v1075
        %v2278 = vunpack.c.h.b16 %v1075
        %v2279 = vunpack.c.l.b16 %v1076
        %v2280 = vunpack.c.h.b16 %v1076
        %v2281 = vunpack.c.l.b16 %v1077
        %v2282 = vunpack.c.l.b16 %v1078
        %v2283 = vunpack.c.h.b16 %v1078
        %v2284 = vunpack.c.l.b16 %v1079
        %v2285 = vunpack.c.h.b16 %v1079
        %v2286 = vunpack.c.l.b16 %v1080
        %v2287 = vunpack.c.l.b16 %v1081
        %v2288 = vunpack.c.h.b16 %v1081
        %v2289 = vunpack.c.l.b16 %v1082
        %v2290 = vunpack.c.h.b16 %v1082
        %v2291 = vunpack.c.l.b16 %v1083
        %v2292 = vunpack.c.l.b16 %v1084
        %v2293 = vunpack.c.h.b16 %v1084
        %v2294 = vunpack.c.l.b16 %v1085
        %v2295 = vunpack.c.h.b16 %v1085
        %v2296 = vunpack.c.l.b16 %v1086
        %v2297 = vunpack.c.l.b16 %v1087
        %v2298 = vunpack.c.h.b16 %v1087
        %v2299 = vunpack.c.l.b16 %v1088
        %v2300 = vunpack.c.h.b16 %v1088
        %v2301 = vunpack.c.l.b16 %v1089
        %v2302 = vunpack.c.l.b16 %v1090
        %v2303 = vunpack.c.h.b16 %v1090
        %v2304 = vunpack.c.l.b16 %v1091
        %v2305 = vunpack.c.h.b16 %v1091
        %v2306 = vunpack.c.l.b16 %v1092
        %v2307 = vunpack.c.l.b16 %v1093
        %v2308 = vunpack.c.h.b16 %v1093
        %v2309 = vunpack.c.l.b16 %v1094
        %v2310 = vunpack.c.h.b16 %v1094
        %v2311 = vunpack.c.l.b16 %v1095
        %v2312 = vunpack.c.l.b16 %v1096
        %v2313 = vunpack.c.h.b16 %v1096
        %v2314 = vunpack.c.l.b16 %v1097
        %v2315 = vunpack.c.h.b16 %v1097
        %v2316 = vunpack.c.l.b16 %v1098
        %v2317 = vunpack.c.l.b16 %v1099
        %v2318 = vunpack.c.h.b16 %v1099
        %v2319 = vunpack.c.l.b16 %v1100
        %v2320 = vunpack.c.h.b16 %v1100
        %v2321 = vunpack.c.l.b16 %v1101
        %v2322 = vunpack.c.l.b16 %v1102
        %v2323 = vunpack.c.h.b16 %v1102
        %v2324 = vunpack.c.l.b16 %v1103
        %v2325 = vunpack.c.h.b16 %v1103
        %v2326 = vunpack.c.l.b16 %v1104
        %v2327 = vunpack.c.l.b16 %v1105
        %v2328 = vunpack.c.h.b16 %v1105
        %v2329 = vunpack.c.l.b16 %v1106
        %v2330 = vunpack.c.h.b16 %v1106
        %v2331 = vunpack.c.l.b16 %v1107
        %v2332 = vunpack.c.l.b16 %v1108
        %v2333 = vunpack.c.h.b16 %v1108
        %v2334 = vunpack.c.l.b16 %v1109
        %v2335 = vunpack.c.h.b16 %v1109
        %v2336 = vunpack.c.l.b16 %v1110
        %v2337 = vunpack.c.l.b16 %v1111
        %v2338 = vunpack.c.h.b16 %v1111
        %v2339 = vunpack.c.l.b16 %v1112
        %v2340 = vunpack.c.h.b16 %v1112
        %v2341 = vunpack.c.l.b16 %v1113
        %v2342 = vunpack.c.l.b16 %v1114
        %v2343 = vunpack.c.h.b16 %v1114
        %v2344 = vunpack.c.l.b16 %v1115
        %v2345 = vunpack.c.h.b16 %v1115
        %v2346 = vunpack.c.l.b16 %v1116
        %v2347 = vunpack.c.l.b16 %v1117
        %v2348 = vunpack.c.h.b16 %v1117
        %v2349 = vunpack.c.l.b16 %v1118
        %v2350 = vunpack.c.h.b16 %v1118
        %v2351 = vunpack.c.l.b16 %v1119
        %v2352 = vunpack.c.l.b16 %v1120
        %v2353 = vunpack.c.h.b16 %v1120
        %v2354 = vunpack.c.l.b16 %v1121
        %v2355 = vunpack.c.h.b16 %v1121
        %v2356 = vunpack.c.l.b16 %v1122
        %v2357 = vunpack.c.l.b16 %v1123
        %v2358 = vunpack.c.h.b16 %v1123
        %v2359 = vunpack.c.l.b16 %v1124
        %v2360 = vunpack.c.h.b16 %v1124
        %v2361 = vunpack.c.l.b16 %v1125
        %v2362 = vunpack.c.l.b16 %v1126
        %v2363 = vunpack.c.h.b16 %v1126
        %v2364 = vunpack.c.l.b16 %v1127
        %v2365 = vunpack.c.h.b16 %v1127
        %v2366 = vunpack.c.l.b16 %v1128
        %v2367 = vunpack.c.l.b16 %v1129
        %v2368 = vunpack.c.h.b16 %v1129
        %v2369 = vunpack.c.l.b16 %v1130
        %v2370 = vunpack.c.h.b16 %v1130
        %v2371 = vunpack.c.l.b16 %v1131
        %v2372 = vunpack.c.l.b16 %v1132
        %v2373 = vunpack.c.h.b16 %v1132
        %v2374 = vunpack.c.l.b16 %v1133
        %v2375 = vunpack.c.h.b16 %v1133
        %v2376 = vunpack.c.l.b16 %v1134
        %v2377 = vunpack.c.l.b16 %v1135
        %v2378 = vunpack.c.h.b16 %v1135
        %v2379 = vunpack.c.l.b16 %v1136
        %v2380 = vunpack.c.h.b16 %v1136
        %v2381 = vunpack.c.l.b16 %v1137
        %v2382 = vunpack.c.l.b16 %v1138
        %v2383 = vunpack.c.h.b16 %v1138
        %v2384 = vunpack.c.l.b16 %v1139
        %v2385 = vunpack.c.h.b16 %v1139
        %v2386 = vunpack.c.l.b16 %v1140
        %v2387 = vunpack.c.l.b16 %v1141
        %v2388 = vunpack.c.h.b16 %v1141
        %v2389 = vunpack.c.l.b16 %v1142
        %v2390 = vunpack.c.h.b16 %v1142
        %v2391 = vunpack.c.l.b16 %v1143
        %v2392 = vunpack.c.l.b16 %v1144
        %v2393 = vunpack.c.h.b16 %v1144
        %v2394 = vunpack.c.l.b16 %v1145
        %v2395 = vunpack.c.h.b16 %v1145
        %v2396 = vunpack.c.l.b16 %v1146
        %v2397 = vunpack.c.l.b16 %v1147
        %v2398 = vunpack.c.h.b16 %v1147
        %v2399 = vunpack.c.l.b16 %v1148
        %v2400 = vunpack.c.h.b16 %v1148
        %v2401 = vunpack.c.l.b16 %v1149
        %v2402 = vunpack.c.l.b16 %v1150
        %v2403 = vunpack.c.h.b16 %v1150
        %v2404 = vunpack.c.l.b16 %v1151
        %v2405 = vunpack.c.h.b16 %v1151
        %v2406 = vunpack.c.l.b16 %v1152
        %v2407 = vunpack.c.l.b16 %v1153
        %v2408 = vunpack.c.h.b16 %v1153
        %v2409 = vunpack.c.l.b16 %v1154
        %v2410 = vunpack.c.h.b16 %v1154
        %v2411 = vunpack.c.l.b16 %v1155
        %v2412 = vunpack.c.l.b16 %v1156
        %v2413 = vunpack.c.h.b16 %v1156
        %v2414 = vunpack.c.l.b16 %v1157
        %v2415 = vunpack.c.h.b16 %v1157
        %v2416 = vunpack.c.l.b16 %v1158
        %v2417 = vunpack.c.l.b16 %v1159
        %v2418 = vunpack.c.h.b16 %v1159
        %v2419 = vunpack.c.l.b16 %v1160
        %v2420 = vunpack.c.h.b16 %v1160
        %v2421 = vunpack.c.l.b16 %v1161
        %v2422 = vunpack.c.l.b16 %v1162
        %v2423 = vunpack.c.h.b16 %v1162
        %v2424 = vunpack.c.l.b16 %v1163
        %v2425 = vunpack.c.h.b16 %v1163
        %v2426 = vunpack.c.l.b16 %v1164
        %v2427 = vunpack.c.l.b16 %v1165
        %v2428 = vunpack.c.h.b16 %v1165
        %v2429 = vunpack.c.l.b16 %v1166
        %v2430 = vunpack.c.h.b16 %v1166
        %v2431 = vunpack.c.l.b16 %v1167
        %v2432 = vunpack.c.l.b16 %v1168
        %v2433 = vunpack.c.h.b16 %v1168
        %v2434 = vunpack.c.l.b16 %v1169
        %v2435 = vunpack.c.h.b16 %v1169
        %v2436 = vunpack.c.l.b16 %v1170
        %v2437 = vunpack.c.l.b16 %v1171
        %v2438 = vunpack.c.h.b16 %v1171
        %v2439 = vunpack.c.l.b16 %v1172
        %v2440 = vunpack.c.h.b16 %v1172
        %v2441 = vunpack.c.l.b16 %v1173
        %v2442 = vunpack.c.l.b16 %v1174
        %v2443 = vunpack.c.h.b16 %v1174
        %v2444 = vunpack.c.l.b16 %v1175
        %v2445 = vunpack.c.h.b16 %v1175
        %v2446 = vunpack.c.l.b16 %v1176
        %v2447 = vunpack.c.l.b16 %v1177
        %v2448 = vunpack.c.h.b16 %v1177
        %v2449 = vunpack.c.l.b16 %v1178
        %v2450 = vunpack.c.h.b16 %v1178
        %v2451 = vunpack.c.l.b16 %v1179
        %v2452 = vunpack.c.l.b16 %v1180
        %v2453 = vunpack.c.h.b16 %v1180
        %v2454 = vunpack.c.l.b16 %v1181
        %v2455 = vunpack.c.h.b16 %v1181
        %v2456 = vunpack.c.l.b16 %v1182
        %v2457 = vunpack.c.l.b16 %v1183
        %v2458 = vunpack.c.h.b16 %v1183
        %v2459 = vunpack.c.l.b16 %v1184
        %v2460 = vunpack.c.h.b16 %v1184
        %v2461 = vunpack.c.l.b16 %v1185
        %v2462 = vunpack.c.l.b16 %v1186
        %v2463 = vunpack.c.h.b16 %v1186
        %v2464 = vunpack.c.l.b16 %v1187
        %v2465 = vunpack.c.h.b16 %v1187
        %v2466 = vunpack.c.l.b16 %v1188
        %v2467 = vunpack.c.l.b16 %v1189
        %v2468 = vunpack.c.h.b16 %v1189
        %v2469 = vunpack.c.l.b16 %v1190
        %v2470 = vunpack.c.h.b16 %v1190
        %v2471 = vunpack.c.l.b16 %v1191
        %v2472 = vpack.c.b16 %v1677, %v1672
        %v2473 = vpack.c.b16 %v1678, %v1673
        %v2474 = vpack.c.b16 %v1679, %v1674
        %v2475 = vpack.c.b16 %v1680, %v1675
        %v2476 = vpack.c.b16 %v1681, %v1676
        %v2477 = vpack.c.b16 %v1687, %v1682
        %v2478 = vpack.c.b16 %v1688, %v1683
        %v2479 = vpack.c.b16 %v1689, %v1684
        %v2480 = vpack.c.b16 %v1690, %v1685
        %v2481 = vpack.c.b16 %v1691, %v1686
        %v2482 = vpack.c.b16 %v1697, %v1692
        %v2483 = vpack.c.b16 %v1698, %v1693
        %v2484 = vpack.c.b16 %v1699, %v1694
        %v2485 = vpack.c.b16 %v1700, %v1695
        %v2486 = vpack.c.b16 %v1701, %v1696
        %v2487 = vpack.c.b16 %v1707, %v1702
        %v2488 = vpack.c.b16 %v1708, %v1703
        %v2489 = vpack.c.b16 %v1709, %v1704
        %v2490 = vpack.c.b16 %v1710, %v1705
        %v2491 = vpack.c.b16 %v1711, %v1706
        %v2492 = vpack.c.b16 %v1717, %v1712
        %v2493 = vpack.c.b16 %v1718, %v1713
        %v2494 = vpack.c.b16 %v1719, %v1714
        %v2495 = vpack.c.b16 %v1720, %v1715
        %v2496 = vpack.c.b16 %v1721, %v1716
        %v2497 = vpack.c.b16 %v1727, %v1722
        %v2498 = vpack.c.b16 %v1728, %v1723
        %v2499 = vpack.c.b16 %v1729, %v1724
        %v2500 = vpack.c.b16 %v1730, %v1725
        %v2501 = vpack.c.b16 %v1731, %v1726
        %v2502 = vpack.c.b16 %v1737, %v1732
        %v2503 = vpack.c.b16 %v1738, %v1733
        %v2504 = vpack.c.b16 %v1739, %v1734
        %v2505 = vpack.c.b16 %v1740, %v1735
        %v2506 = vpack.c.b16 %v1741, %v1736
        %v2507 = vpack.c.b16 %v1747, %v1742
        %v2508 = vpack.c.b16 %v1748, %v1743
        %v2509 = vpack.c.b16 %v1749, %v1744
        %v2510 = vpack.c.b16 %v1750, %v1745
        %v2511 = vpack.c.b16 %v1751, %v1746
        %v2512 = vpack.c.b16 %v1757, %v1752
        %v2513 = vpack.c.b16 %v1758, %v1753
        %v2514 = vpack.c.b16 %v1759, %v1754
        %v2515 = vpack.c.b16 %v1760, %v1755
        %v2516 = vpack.c.b16 %v1761, %v1756
        %v2517 = vpack.c.b16 %v1767, %v1762
        %v2518 = vpack.c.b16 %v1768, %v1763
        %v2519 = vpack.c.b16 %v1769, %v1764
        %v2520 = vpack.c.b16 %v1770, %v1765
        %v2521 = vpack.c.b16 %v1771, %v1766
        %v2522 = vpack.c.b16 %v1777, %v1772
        %v2523 = vpack.c.b16 %v1778, %v1773
        %v2524 = vpack.c.b16 %v1779, %v1774
        %v2525 = vpack.c.b16 %v1780, %v1775
        %v2526 = vpack.c.b16 %v1781, %v1776
        %v2527 = vpack.c.b16 %v1787, %v1782
        %v2528 = vpack.c.b16 %v1788, %v1783
        %v2529 = vpack.c.b16 %v1789, %v1784
        %v2530 = vpack.c.b16 %v1790, %v1785
        %v2531 = vpack.c.b16 %v1791, %v1786
        %v2532 = vpack.c.b16 %v1797, %v1792
        %v2533 = vpack.c.b16 %v1798, %v1793
        %v2534 = vpack.c.b16 %v1799, %v1794
        %v2535 = vpack.c.b16 %v1800, %v1795
        %v2536 = vpack.c.b16 %v1801, %v1796
        %v2537 = vpack.c.b16 %v1807, %v1802
        %v2538 = vpack.c.b16 %v1808, %v1803
        %v2539 = vpack.c.b16 %v1809, %v1804
        %v2540 = vpack.c.b16 %v1810, %v1805
        %v2541 = vpack.c.b16 %v1811, %v1806
        %v2542 = vpack.c.b16 %v1817, %v1812
        %v2543 = vpack.c.b16 %v1818, %v1813
        %v2544 = vpack.c.b16 %v1819, %v1814
        %v2545 = vpack.c.b16 %v1820, %v1815
        %v2546 = vpack.c.b16 %v1821, %v1816
        %v2547 = vpack.c.b16 %v1827, %v1822
        %v2548 = vpack.c.b16 %v1828, %v1823
        %v2549 = vpack.c.b16 %v1829, %v1824
        %v2550 = vpack.c.b16 %v1830, %v1825
        %v2551 = vpack.c.b16 %v1831, %v1826
        %v2552 = vpack.c.b16 %v1837, %v1832
        %v2553 = vpack.c.b16 %v1838, %v1833
        %v2554 = vpack.c.b16 %v1839, %v1834
        %v2555 = vpack.c.b16 %v1840, %v1835
        %v2556 = vpack.c.b16 %v1841, %v1836
        %v2557 = vpack.c.b16 %v1847, %v1842
        %v2558 = vpack.c.b16 %v1848, %v1843
        %v2559 = vpack.c.b16 %v1849, %v1844
        %v2560 = vpack.c.b16 %v1850, %v1845
        %v2561 = vpack.c.b16 %v1851, %v1846
        %v2562 = vpack.c.b16 %v1857, %v1852
        %v2563 = vpack.c.b16 %v1858, %v1853
        %v2564 = vpack.c.b16 %v1859, %v1854
        %v2565 = vpack.c.b16 %v1860, %v1855
        %v2566 = vpack.c.b16 %v1861, %v1856
        %v2567 = vpack.c.b16 %v1867, %v1862
        %v2568 = vpack.c.b16 %v1868, %v1863
        %v2569 = vpack.c.b16 %v1869, %v1864
        %v2570 = vpack.c.b16 %v1870, %v1865
        %v2571 = vpack.c.b16 %v1871, %v1866
        %v2572 = vpack.c.b16 %v1877, %v1872
        %v2573 = vpack.c.b16 %v1878, %v1873
        %v2574 = vpack.c.b16 %v1879, %v1874
        %v2575 = vpack.c.b16 %v1880, %v1875
        %v2576 = vpack.c.b16 %v1881, %v1876
        %v2577 = vpack.c.b16 %v1887, %v1882
        %v2578 = vpack.c.b16 %v1888, %v1883
        %v2579 = vpack.c.b16 %v1889, %v1884
        %v2580 = vpack.c.b16 %v1890, %v1885
        %v2581 = vpack.c.b16 %v1891, %v1886
        %v2582 = vpack.c.b16 %v1897, %v1892
        %v2583 = vpack.c.b16 %v1898, %v1893
        %v2584 = vpack.c.b16 %v1899, %v1894
        %v2585 = vpack.c.b16 %v1900, %v1895
        %v2586 = vpack.c.b16 %v1901, %v1896
        %v2587 = vpack.c.b16 %v1907, %v1902
        %v2588 = vpack.c.b16 %v1908, %v1903
        %v2589 = vpack.c.b16 %v1909, %v1904
        %v2590 = vpack.c.b16 %v1910, %v1905
        %v2591 = vpack.c.b16 %v1911, %v1906
        %v2592 = vpack.c.b16 %v1917, %v1912
        %v2593 = vpack.c.b16 %v1918, %v1913
        %v2594 = vpack.c.b16 %v1919, %v1914
        %v2595 = vpack.c.b16 %v1920, %v1915
        %v2596 = vpack.c.b16 %v1921, %v1916
        %v2597 = vpack.c.b16 %v1927, %v1922
        %v2598 = vpack.c.b16 %v1928, %v1923
        %v2599 = vpack.c.b16 %v1929, %v1924
        %v2600 = vpack.c.b16 %v1930, %v1925
        %v2601 = vpack.c.b16 %v1931, %v1926
        %v2602 = vpack.c.b16 %v1937, %v1932
        %v2603 = vpack.c.b16 %v1938, %v1933
        %v2604 = vpack.c.b16 %v1939, %v1934
        %v2605 = vpack.c.b16 %v1940, %v1935
        %v2606 = vpack.c.b16 %v1941, %v1936
        %v2607 = vpack.c.b16 %v1947, %v1942
        %v2608 = vpack.c.b16 %v1948, %v1943
        %v2609 = vpack.c.b16 %v1949, %v1944
        %v2610 = vpack.c.b16 %v1950, %v1945
        %v2611 = vpack.c.b16 %v1951, %v1946
        %v2612 = vpack.c.b16 %v1957, %v1952
        %v2613 = vpack.c.b16 %v1958, %v1953
        %v2614 = vpack.c.b16 %v1959, %v1954
        %v2615 = vpack.c.b16 %v1960, %v1955
        %v2616 = vpack.c.b16 %v1961, %v1956
        %v2617 = vpack.c.b16 %v1967, %v1962
        %v2618 = vpack.c.b16 %v1968, %v1963
        %v2619 = vpack.c.b16 %v1969, %v1964
        %v2620 = vpack.c.b16 %v1970, %v1965
        %v2621 = vpack.c.b16 %v1971, %v1966
        %v2622 = vpack.c.b16 %v1977, %v1972
        %v2623 = vpack.c.b16 %v1978, %v1973
        %v2624 = vpack.c.b16 %v1979, %v1974
        %v2625 = vpack.c.b16 %v1980, %v1975
        %v2626 = vpack.c.b16 %v1981, %v1976
        %v2627 = vpack.c.b16 %v1987, %v1982
        %v2628 = vpack.c.b16 %v1988, %v1983
        %v2629 = vpack.c.b16 %v1989, %v1984
        %v2630 = vpack.c.b16 %v1990, %v1985
        %v2631 = vpack.c.b16 %v1991, %v1986
        %v2632 = vpack.c.b16 %v1997, %v1992
        %v2633 = vpack.c.b16 %v1998, %v1993
        %v2634 = vpack.c.b16 %v1999, %v1994
        %v2635 = vpack.c.b16 %v2000, %v1995
        %v2636 = vpack.c.b16 %v2001, %v1996
        %v2637 = vpack.c.b16 %v2007, %v2002
        %v2638 = vpack.c.b16 %v2008, %v2003
        %v2639 = vpack.c.b16 %v2009, %v2004
        %v2640 = vpack.c.b16 %v2010, %v2005
        %v2641 = vpack.c.b16 %v2011, %v2006
        %v2642 = vpack.c.b16 %v2017, %v2012
        %v2643 = vpack.c.b16 %v2018, %v2013
        %v2644 = vpack.c.b16 %v2019, %v2014
        %v2645 = vpack.c.b16 %v2020, %v2015
        %v2646 = vpack.c.b16 %v2021, %v2016
        %v2647 = vpack.c.b16 %v2027, %v2022
        %v2648 = vpack.c.b16 %v2028, %v2023
        %v2649 = vpack.c.b16 %v2029, %v2024
        %v2650 = vpack.c.b16 %v2030, %v2025
        %v2651 = vpack.c.b16 %v2031, %v2026
        %v2652 = vpack.c.b16 %v2037, %v2032
        %v2653 = vpack.c.b16 %v2038, %v2033
        %v2654 = vpack.c.b16 %v2039, %v2034
        %v2655 = vpack.c.b16 %v2040, %v2035
        %v2656 = vpack.c.b16 %v2041, %v2036
        %v2657 = vpack.c.b16 %v2047, %v2042
        %v2658 = vpack.c.b16 %v2048, %v2043
        %v2659 = vpack.c.b16 %v2049, %v2044
        %v2660 = vpack.c.b16 %v2050, %v2045
        %v2661 = vpack.c.b16 %v2051, %v2046
        %v2662 = vpack.c.b16 %v2057, %v2052
        %v2663 = vpack.c.b16 %v2058, %v2053
        %v2664 = vpack.c.b16 %v2059, %v2054
        %v2665 = vpack.c.b16 %v2060, %v2055
        %v2666 = vpack.c.b16 %v2061, %v2056
        %v2667 = vpack.c.b16 %v2067, %v2062
        %v2668 = vpack.c.b16 %v2068, %v2063
        %v2669 = vpack.c.b16 %v2069, %v2064
        %v2670 = vpack.c.b16 %v2070, %v2065
        %v2671 = vpack.c.b16 %v2071, %v2066
        %v2672 = vpack.c.b16 %v2077, %v2072
        %v2673 = vpack.c.b16 %v2078, %v2073
        %v2674 = vpack.c.b16 %v2079, %v2074
        %v2675 = vpack.c.b16 %v2080, %v2075
        %v2676 = vpack.c.b16 %v2081, %v2076
        %v2677 = vpack.c.b16 %v2087, %v2082
        %v2678 = vpack.c.b16 %v2088, %v2083
        %v2679 = vpack.c.b16 %v2089, %v2084
        %v2680 = vpack.c.b16 %v2090, %v2085
        %v2681 = vpack.c.b16 %v2091, %v2086
        %v2682 = vpack.c.b16 %v2097, %v2092
        %v2683 = vpack.c.b16 %v2098, %v2093
        %v2684 = vpack.c.b16 %v2099, %v2094
        %v2685 = vpack.c.b16 %v2100, %v2095
        %v2686 = vpack.c.b16 %v2101, %v2096
        %v2687 = vpack.c.b16 %v2107, %v2102
        %v2688 = vpack.c.b16 %v2108, %v2103
        %v2689 = vpack.c.b16 %v2109, %v2104
        %v2690 = vpack.c.b16 %v2110, %v2105
        %v2691 = vpack.c.b16 %v2111, %v2106
        %v2692 = vpack.c.b16 %v2117, %v2112
        %v2693 = vpack.c.b16 %v2118, %v2113
        %v2694 = vpack.c.b16 %v2119, %v2114
        %v2695 = vpack.c.b16 %v2120, %v2115
        %v2696 = vpack.c.b16 %v2121, %v2116
        %v2697 = vpack.c.b16 %v2127, %v2122
        %v2698 = vpack.c.b16 %v2128, %v2123
        %v2699 = vpack.c.b16 %v2129, %v2124
        %v2700 = vpack.c.b16 %v2130, %v2125
        %v2701 = vpack.c.b16 %v2131, %v2126
        %v2702 = vpack.c.b16 %v2137, %v2132
        %v2703 = vpack.c.b16 %v2138, %v2133
        %v2704 = vpack.c.b16 %v2139, %v2134
        %v2705 = vpack.c.b16 %v2140, %v2135
        %v2706 = vpack.c.b16 %v2141, %v2136
        %v2707 = vpack.c.b16 %v2147, %v2142
        %v2708 = vpack.c.b16 %v2148, %v2143
        %v2709 = vpack.c.b16 %v2149, %v2144
        %v2710 = vpack.c.b16 %v2150, %v2145
        %v2711 = vpack.c.b16 %v2151, %v2146
        %v2712 = vpack.c.b16 %v2157, %v2152
        %v2713 = vpack.c.b16 %v2158, %v2153
        %v2714 = vpack.c.b16 %v2159, %v2154
        %v2715 = vpack.c.b16 %v2160, %v2155
        %v2716 = vpack.c.b16 %v2161, %v2156
        %v2717 = vpack.c.b16 %v2167, %v2162
        %v2718 = vpack.c.b16 %v2168, %v2163
        %v2719 = vpack.c.b16 %v2169, %v2164
        %v2720 = vpack.c.b16 %v2170, %v2165
        %v2721 = vpack.c.b16 %v2171, %v2166
        %v2722 = vpack.c.b16 %v2177, %v2172
        %v2723 = vpack.c.b16 %v2178, %v2173
        %v2724 = vpack.c.b16 %v2179, %v2174
        %v2725 = vpack.c.b16 %v2180, %v2175
        %v2726 = vpack.c.b16 %v2181, %v2176
        %v2727 = vpack.c.b16 %v2187, %v2182
        %v2728 = vpack.c.b16 %v2188, %v2183
        %v2729 = vpack.c.b16 %v2189, %v2184
        %v2730 = vpack.c.b16 %v2190, %v2185
        %v2731 = vpack.c.b16 %v2191, %v2186
        %v2732 = vpack.c.b16 %v2197, %v2192
        %v2733 = vpack.c.b16 %v2198, %v2193
        %v2734 = vpack.c.b16 %v2199, %v2194
        %v2735 = vpack.c.b16 %v2200, %v2195
        %v2736 = vpack.c.b16 %v2201, %v2196
        %v2737 = vpack.c.b16 %v2207, %v2202
        %v2738 = vpack.c.b16 %v2208, %v2203
        %v2739 = vpack.c.b16 %v2209, %v2204
        %v2740 = vpack.c.b16 %v2210, %v2205
        %v2741 = vpack.c.b16 %v2211, %v2206
        %v2742 = vpack.c.b16 %v2217, %v2212
        %v2743 = vpack.c.b16 %v2218, %v2213
        %v2744 = vpack.c.b16 %v2219, %v2214
        %v2745 = vpack.c.b16 %v2220, %v2215
        %v2746 = vpack.c.b16 %v2221, %v2216
        %v2747 = vpack.c.b16 %v2227, %v2222
        %v2748 = vpack.c.b16 %v2228, %v2223
        %v2749 = vpack.c.b16 %v2229, %v2224
        %v2750 = vpack.c.b16 %v2230, %v2225
        %v2751 = vpack.c.b16 %v2231, %v2226
        %v2752 = vpack.c.b16 %v2237, %v2232
        %v2753 = vpack.c.b16 %v2238, %v2233
        %v2754 = vpack.c.b16 %v2239, %v2234
        %v2755 = vpack.c.b16 %v2240, %v2235
        %v2756 = vpack.c.b16 %v2241, %v2236
        %v2757 = vpack.c.b16 %v2247, %v2242
        %v2758 = vpack.c.b16 %v2248, %v2243
        %v2759 = vpack.c.b16 %v2249, %v2244
        %v2760 = vpack.c.b16 %v2250, %v2245
        %v2761 = vpack.c.b16 %v2251, %v2246
        %v2762 = vpack.c.b16 %v2257, %v2252
        %v2763 = vpack.c.b16 %v2258, %v2253
        %v2764 = vpack.c.b16 %v2259, %v2254
        %v2765 = vpack.c.b16 %v2260, %v2255
        %v2766 = vpack.c.b16 %v2261, %v2256
        %v2767 = vpack.c.b16 %v2267, %v2262
        %v2768 = vpack.c.b16 %v2268, %v2263
        %v2769 = vpack.c.b16 %v2269, %v2264
        %v2770 = vpack.c.b16 %v2270, %v2265
        %v2771 = vpack.c.b16 %v2271, %v2266
        %v2772 = vpack.c.b16 %v2277, %v2272
        %v2773 = vpack.c.b16 %v2278, %v2273
        %v2774 = vpack.c.b16 %v2279, %v2274
        %v2775 = vpack.c.b16 %v2280, %v2275
        %v2776 = vpack.c.b16 %v2281, %v2276
        %v2777 = vpack.c.b16 %v2287, %v2282
        %v2778 = vpack.c.b16 %v2288, %v2283
        %v2779 = vpack.c.b16 %v2289, %v2284
        %v2780 = vpack.c.b16 %v2290, %v2285
        %v2781 = vpack.c.b16 %v2291, %v2286
        %v2782 = vpack.c.b16 %v2297, %v2292
        %v2783 = vpack.c.b16 %v2298, %v2293
        %v2784 = vpack.c.b16 %v2299, %v2294
        %v2785 = vpack.c.b16 %v2300, %v2295
        %v2786 = vpack.c.b16 %v2301, %v2296
        %v2787 = vpack.c.b16 %v2307, %v2302
        %v2788 = vpack.c.b16 %v2308, %v2303
        %v2789 = vpack.c.b16 %v2309, %v2304
        %v2790 = vpack.c.b16 %v2310, %v2305
        %v2791 = vpack.c.b16 %v2311, %v2306
        %v2792 = vpack.c.b16 %v2317, %v2312
        %v2793 = vpack.c.b16 %v2318, %v2313
        %v2794 = vpack.c.b16 %v2319, %v2314
        %v2795 = vpack.c.b16 %v2320, %v2315
        %v2796 = vpack.c.b16 %v2321, %v2316
        %v2797 = vpack.c.b16 %v2327, %v2322
        %v2798 = vpack.c.b16 %v2328, %v2323
        %v2799 = vpack.c.b16 %v2329, %v2324
        %v2800 = vpack.c.b16 %v2330, %v2325
        %v2801 = vpack.c.b16 %v2331, %v2326
        %v2802 = vpack.c.b16 %v2337, %v2332
        %v2803 = vpack.c.b16 %v2338, %v2333
        %v2804 = vpack.c.b16 %v2339, %v2334
        %v2805 = vpack.c.b16 %v2340, %v2335
        %v2806 = vpack.c.b16 %v2341, %v2336
        %v2807 = vpack.c.b16 %v2347, %v2342
        %v2808 = vpack.c.b16 %v2348, %v2343
        %v2809 = vpack.c.b16 %v2349, %v2344
        %v2810 = vpack.c.b16 %v2350, %v2345
        %v2811 = vpack.c.b16 %v2351, %v2346
        %v2812 = vpack.c.b16 %v2357, %v2352
        %v2813 = vpack.c.b16 %v2358, %v2353
        %v2814 = vpack.c.b16 %v2359, %v2354
        %v2815 = vpack.c.b16 %v2360, %v2355
        %v2816 = vpack.c.b16 %v2361, %v2356
        %v2817 = vpack.c.b16 %v2367, %v2362
        %v2818 = vpack.c.b16 %v2368, %v2363
        %v2819 = vpack.c.b16 %v2369, %v2364
        %v2820 = vpack.c.b16 %v2370, %v2365
        %v2821 = vpack.c.b16 %v2371, %v2366
        %v2822 = vpack.c.b16 %v2377, %v2372
        %v2823 = vpack.c.b16 %v2378, %v2373
        %v2824 = vpack.c.b16 %v2379, %v2374
        %v2825 = vpack.c.b16 %v2380, %v2375
        %v2826 = vpack.c.b16 %v2381, %v2376
        %v2827 = vpack.c.b16 %v2387, %v2382
        %v2828 = vpack.c.b16 %v2388, %v2383
        %v2829 = vpack.c.b16 %v2389, %v2384
        %v2830 = vpack.c.b16 %v2390, %v2385
        %v2831 = vpack.c.b16 %v2391, %v2386
        %v2832 = vpack.c.b16 %v2397, %v2392
        %v2833 = vpack.c.b16 %v2398, %v2393
        %v2834 = vpack.c.b16 %v2399, %v2394
        %v2835 = vpack.c.b16 %v2400, %v2395
        %v2836 = vpack.c.b16 %v2401, %v2396
        %v2837 = vpack.c.b16 %v2407, %v2402
        %v2838 = vpack.c.b16 %v2408, %v2403
        %v2839 = vpack.c.b16 %v2409, %v2404
        %v2840 = vpack.c.b16 %v2410, %v2405
        %v2841 = vpack.c.b16 %v2411, %v2406
        %v2842 = vpack.c.b16 %v2417, %v2412
        %v2843 = vpack.c.b16 %v2418, %v2413
        %v2844 = vpack.c.b16 %v2419, %v2414
        %v2845 = vpack.c.b16 %v2420, %v2415
        %v2846 = vpack.c.b16 %v2421, %v2416
        %v2847 = vpack.c.b16 %v2427, %v2422
        %v2848 = vpack.c.b16 %v2428, %v2423
        %v2849 = vpack.c.b16 %v2429, %v2424
        %v2850 = vpack.c.b16 %v2430, %v2425
        %v2851 = vpack.c.b16 %v2431, %v2426
        %v2852 = vpack.c.b16 %v2437, %v2432
        %v2853 = vpack.c.b16 %v2438, %v2433
        %v2854 = vpack.c.b16 %v2439, %v2434
        %v2855 = vpack.c.b16 %v2440, %v2435
        %v2856 = vpack.c.b16 %v2441, %v2436
        %v2857 = vpack.c.b16 %v2447, %v2442
        %v2858 = vpack.c.b16 %v2448, %v2443
        %v2859 = vpack.c.b16 %v2449, %v2444
        %v2860 = vpack.c.b16 %v2450, %v2445
        %v2861 = vpack.c.b16 %v2451, %v2446
        %v2862 = vpack.c.b16 %v2457, %v2452
        %v2863 = vpack.c.b16 %v2458, %v2453
        %v2864 = vpack.c.b16 %v2459, %v2454
        %v2865 = vpack.c.b16 %v2460, %v2455
        %v2866 = vpack.c.b16 %v2461, %v2456
        %v2867 = vpack.c.b16 %v2467, %v2462
        %v2868 = vpack.c.b16 %v2468, %v2463
        %v2869 = vpack.c.b16 %v2469, %v2464
        %v2870 = vpack.c.b16 %v2470, %v2465
        %v2871 = vpack.c.b16 %v2471, %v2466
        %3272 = vmatprep.subr.bf16.mxu0 %v2473
        %3273 = vmatpush1.bf16.msra.mxu0 %v2472
        %3274 = vmatprep.subr.bf16.mxu0 %v2478
        %3275 = vmatpush1.bf16.msra.mxu0 %v2477
        %3276 = vmatprep.subr.bf16.mxu0 %v2483
        %3277 = vmatpush1.bf16.msra.mxu0 %v2482
        %3278 = vmatprep.subr.bf16.mxu0 %v2488
        %3279 = vmatpush1.bf16.msra.mxu0 %v2487
        %3280 = vmatprep.subr.bf16.mxu0 %v2493
        %3281 = vmatpush1.bf16.msra.mxu0 %v2492
        %3282 = vmatprep.subr.bf16.mxu0 %v2498
        %3283 = vmatpush1.bf16.msra.mxu0 %v2497
        %3284 = vmatprep.subr.bf16.mxu0 %v2503
        %3285 = vmatpush1.bf16.msra.mxu0 %v2502
        %3286 = vmatprep.subr.bf16.mxu0 %v2508
        %3287 = vmatpush1.bf16.msra.mxu0 %v2507
        %3288 = vmatprep.subr.bf16.mxu0 %v2513
        %3289 = vmatpush1.bf16.msra.mxu0 %v2512
        %3290 = vmatprep.subr.bf16.mxu0 %v2518
        %3291 = vmatpush1.bf16.msra.mxu0 %v2517
        %3292 = vmatprep.subr.bf16.mxu0 %v2523
        %3293 = vmatpush1.bf16.msra.mxu0 %v2522
        %3294 = vmatprep.subr.bf16.mxu0 %v2528
        %3295 = vmatpush1.bf16.msra.mxu0 %v2527
        %3296 = vmatprep.subr.bf16.mxu0 %v2533
        %3297 = vmatpush1.bf16.msra.mxu0 %v2532
        %3298 = vmatprep.subr.bf16.mxu0 %v2538
        %3299 = vmatpush1.bf16.msra.mxu0 %v2537
        %3300 = vmatprep.subr.bf16.mxu0 %v2543
        %3301 = vmatpush1.bf16.msra.mxu0 %v2542
        %3302 = vmatprep.subr.bf16.mxu0 %v2548
        %3303 = vmatpush1.bf16.msra.mxu0 %v2547
        %3304 = vmatprep.mubr.bf16.mxu0 %v638
        %3305 = vmatmul.mubr.bf16.gmra.mrb[0].mxu0 %v637
        %v3306 = vpop.f32.mrb[0].mxu0
        %v3307 = vadd.f32 0.0, %v3306
        %v3308 = vpop.f32.mrb[0].mxu0
        %v3309 = vadd.f32 0.0, %v3308
        %v3310 = vpop.f32.mrb[0].mxu0
        %v3311 = vadd.f32 0.0, %v3310
        %v3312 = vpop.f32.mrb[0].mxu0
        %v3313 = vadd.f32 0.0, %v3312
        %3314 = vmatprep.mubr.bf16.mxu0 %v648
        %3315 = vmatmul.mubr.bf16.gmra.mrb[0].mxu0 %v647
        %v3316 = vpop.f32.mrb[0].mxu0
        %v3317 = vadd.f32 0.0, %v3316
        %v3318 = vpop.f32.mrb[0].mxu0
        %v3319 = vadd.f32 0.0, %v3318
        %v3320 = vpop.f32.mrb[0].mxu0
        %v3321 = vadd.f32 0.0, %v3320
        %v3322 = vpop.f32.mrb[0].mxu0
        %v3323 = vadd.f32 0.0, %v3322
        %3324 = vmatprep.mubr.bf16.mxu0 %v658
        %3325 = vmatmul.mubr.bf16.gmra.mrb[0].mxu0 %v657
        %v3326 = vpop.f32.mrb[0].mxu0
        %v3327 = vadd.f32 0.0, %v3326
        %v3328 = vpop.f32.mrb[0].mxu0
        %v3329 = vadd.f32 0.0, %v3328
        %v3330 = vpop.f32.mrb[0].mxu0
        %v3331 = vadd.f32 0.0, %v3330
        %v3332 = vpop.f32.mrb[0].mxu0
        %v3333 = vadd.f32 0.0, %v3332
        %3334 = vmatprep.mubr.bf16.mxu0 %v668
        %3335 = vmatmul.mubr.bf16.gmra.mrb[0].mxu0 %v667
        %v3336 = vpop.f32.mrb[0].mxu0
        %v3337 = vadd.f32 0.0, %v3336
        %v3338 = vpop.f32.mrb[0].mxu0
        %v3339 = vadd.f32 0.0, %v3338
        %v3340 = vpop.f32.mrb[0].mxu0
        %v3341 = vpop.f32.mrb[0].mxu0
        %3342 = vdwg.mxu0
        %3343 = vmatprep.subr.bf16.mxu0 %v2553
        %3344 = vmatpush1.bf16.msra.mxu0 %v2552
        %3345 = vmatprep.subr.bf16.mxu0 %v2558
        %3346 = vmatpush1.bf16.msra.mxu0 %v2557
        %3347 = vmatprep.subr.bf16.mxu0 %v2563
        %3348 = vmatpush1.bf16.msra.mxu0 %v2562
        %3349 = vmatprep.subr.bf16.mxu0 %v2568
        %3350 = vmatpush1.bf16.msra.mxu0 %v2567
        %3351 = vmatprep.subr.bf16.mxu0 %v2573
        %3352 = vmatpush1.bf16.msra.mxu0 %v2572
        %3353 = vmatprep.subr.bf16.mxu0 %v2578
        %3354 = vmatpush1.bf16.msra.mxu0 %v2577
        %3355 = vmatprep.subr.bf16.mxu0 %v2583
        %3356 = vmatpush1.bf16.msra.mxu0 %v2582
        %3357 = vmatprep.subr.bf16.mxu0 %v2588
        %3358 = vmatpush1.bf16.msra.mxu0 %v2587
        %3359 = vmatprep.subr.bf16.mxu0 %v2593
        %3360 = vmatpush1.bf16.msra.mxu0 %v2592
        %3361 = vmatprep.subr.bf16.mxu0 %v2598
        %3362 = vmatpush1.bf16.msra.mxu0 %v2597
        %3363 = vmatprep.subr.bf16.mxu0 %v2603
        %3364 = vmatpush1.bf16.msra.mxu0 %v2602
        %3365 = vmatprep.subr.bf16.mxu0 %v2608
        %3366 = vmatpush1.bf16.msra.mxu0 %v2607
        %3367 = vmatprep.subr.bf16.mxu0 %v2613
        %3368 = vmatpush1.bf16.msra.mxu0 %v2612
        %3369 = vmatprep.subr.bf16.mxu0 %v2618
        %3370 = vmatpush1.bf16.msra.mxu0 %v2617
        %3371 = vmatprep.subr.bf16.mxu0 %v2623
        %3372 = vmatpush1.bf16.msra.mxu0 %v2622
        %3373 = vmatprep.subr.bf16.mxu0 %v2628
        %3374 = vmatpush1.bf16.msra.mxu0 %v2627
        %3375 = vmatprep.mubr.bf16.mxu0 %v640
        %3376 = vmatmul.mubr.bf16.gmra.mrb[0].mxu0 %v639
        %v3377 = vpop.f32.mrb[0].mxu0
        %v3378 = vadd.f32 %v3307, %v3377
        %v3379 = vpop.f32.mrb[0].mxu0
        %v3380 = vadd.f32 %v3309, %v3379
        %v3381 = vpop.f32.mrb[0].mxu0
        %v3382 = vadd.f32 %v3311, %v3381
        %v3383 = vpop.f32.mrb[0].mxu0
        %v3384 = vadd.f32 %v3313, %v3383
        %3385 = vmatprep.mubr.bf16.mxu0 %v650
        %3386 = vmatmul.mubr.bf16.gmra.mrb[0].mxu0 %v649
        %v3387 = vpop.f32.mrb[0].mxu0
        %v3388 = vadd.f32 %v3317, %v3387
        %v3389 = vpop.f32.mrb[0].mxu0
        %v3390 = vadd.f32 %v3319, %v3389
        %v3391 = vpop.f32.mrb[0].mxu0
        %v3392 = vadd.f32 %v3321, %v3391
        %v3393 = vpop.f32.mrb[0].mxu0
        %v3394 = vadd.f32 %v3323, %v3393
        %3395 = vmatprep.mubr.bf16.mxu0 %v660
        %3396 = vmatmul.mubr.bf16.gmra.mrb[0].mxu0 %v659
        %v3397 = vpop.f32.mrb[0].mxu0
        %v3398 = vadd.f32 %v3327, %v3397
        %v3399 = vpop.f32.mrb[0].mxu0
        %v3400 = vadd.f32 %v3329, %v3399
        %v3401 = vpop.f32.mrb[0].mxu0
        %v3402 = vadd.f32 %v3331, %v3401
        %v3403 = vpop.f32.mrb[0].mxu0
        %v3404 = vadd.f32 %v3333, %v3403
        %3405 = vmatprep.mubr.bf16.mxu0 %v670
        %3406 = vmatmul.mubr.bf16.gmra.mrb[0].mxu0 %v669
        %v3407 = vpop.f32.mrb[0].mxu0
        %v3408 = vadd.f32 %v3337, %v3407
        %v3409 = vpop.f32.mrb[0].mxu0
        %v3410 = vadd.f32 %v3339, %v3409
        %v3411 = vpop.f32.mrb[0].mxu0
        %v3412 = vpop.f32.mrb[0].mxu0
        %3413 = vdwg.mxu0
        %3414 = vmatprep.subr.bf16.mxu0 %v2633
        %3415 = vmatpush1.bf16.msra.mxu0 %v2632
        %3416 = vmatprep.subr.bf16.mxu0 %v2638
        %3417 = vmatpush1.bf16.msra.mxu0 %v2637
        %3418 = vmatprep.subr.bf16.mxu0 %v2643
        %3419 = vmatpush1.bf16.msra.mxu0 %v2642
        %3420 = vmatprep.subr.bf16.mxu0 %v2648
        %3421 = vmatpush1.bf16.msra.mxu0 %v2647
        %3422 = vmatprep.subr.bf16.mxu0 %v2653
        %3423 = vmatpush1.bf16.msra.mxu0 %v2652
        %3424 = vmatprep.subr.bf16.mxu0 %v2658
        %3425 = vmatpush1.bf16.msra.mxu0 %v2657
        %3426 = vmatprep.subr.bf16.mxu0 %v2663
        %3427 = vmatpush1.bf16.msra.mxu0 %v2662
        %3428 = vmatprep.subr.bf16.mxu0 %v2668
        %3429 = vmatpush1.bf16.msra.mxu0 %v2667
        %3430 = vmatprep.subr.bf16.mxu0 %v2673
        %3431 = vmatpush1.bf16.msra.mxu0 %v2672
        %3432 = vmatprep.subr.bf16.mxu0 %v2678
        %3433 = vmatpush1.bf16.msra.mxu0 %v2677
        %3434 = vmatprep.subr.bf16.mxu0 %v2683
        %3435 = vmatpush1.bf16.msra.mxu0 %v2682
        %3436 = vmatprep.subr.bf16.mxu0 %v2688
        %3437 = vmatpush1.bf16.msra.mxu0 %v2687
        %3438 = vmatprep.subr.bf16.mxu0 %v2693
        %3439 = vmatpush1.bf16.msra.mxu0 %v2692
        %3440 = vmatprep.subr.bf16.mxu0 %v2698
        %3441 = vmatpush1.bf16.msra.mxu0 %v2697
        %3442 = vmatprep.subr.bf16.mxu0 %v2703
        %3443 = vmatpush1.bf16.msra.mxu0 %v2702
        %3444 = vmatprep.subr.bf16.mxu0 %v2708
        %3445 = vmatpush1.bf16.msra.mxu0 %v2707
        %3446 = vmatprep.mubr.bf16.mxu0 %v642
        %3447 = vmatmul.mubr.bf16.gmra.mrb[0].mxu0 %v641
        %v3448 = vpop.f32.mrb[0].mxu0
        %v3449 = vadd.f32 %v3378, %v3448
        %v3450 = vpop.f32.mrb[0].mxu0
        %v3451 = vadd.f32 %v3380, %v3450
        %v3452 = vpop.f32.mrb[0].mxu0
        %v3453 = vadd.f32 %v3382, %v3452
        %v3454 = vpop.f32.mrb[0].mxu0
        %v3455 = vadd.f32 %v3384, %v3454
        %3456 = vmatprep.mubr.bf16.mxu0 %v652
        %3457 = vmatmul.mubr.bf16.gmra.mrb[0].mxu0 %v651
        %v3458 = vpop.f32.mrb[0].mxu0
        %v3459 = vadd.f32 %v3388, %v3458
        %v3460 = vpop.f32.mrb[0].mxu0
        %v3461 = vadd.f32 %v3390, %v3460
        %v3462 = vpop.f32.mrb[0].mxu0
        %v3463 = vadd.f32 %v3392, %v3462
        %v3464 = vpop.f32.mrb[0].mxu0
        %v3465 = vadd.f32 %v3394, %v3464
        %3466 = vmatprep.mubr.bf16.mxu0 %v662
        %3467 = vmatmul.mubr.bf16.gmra.mrb[0].mxu0 %v661
        %v3468 = vpop.f32.mrb[0].mxu0
        %v3469 = vadd.f32 %v3398, %v3468
        %v3470 = vpop.f32.mrb[0].mxu0
        %v3471 = vadd.f32 %v3400, %v3470
        %v3472 = vpop.f32.mrb[0].mxu0
        %v3473 = vadd.f32 %v3402, %v3472
        %v3474 = vpop.f32.mrb[0].mxu0
        %v3475 = vadd.f32 %v3404, %v3474
        %3476 = vmatprep.mubr.bf16.mxu0 %v672
        %3477 = vmatmul.mubr.bf16.gmra.mrb[0].mxu0 %v671
        %v3478 = vpop.f32.mrb[0].mxu0
        %v3479 = vadd.f32 %v3408, %v3478
        %v3480 = vpop.f32.mrb[0].mxu0
        %v3481 = vadd.f32 %v3410, %v3480
        %v3482 = vpop.f32.mrb[0].mxu0
        %v3483 = vpop.f32.mrb[0].mxu0
        %3484 = vdwg.mxu0
        %3485 = vmatprep.subr.bf16.mxu0 %v2713
        %3486 = vmatpush1.bf16.msra.mxu0 %v2712
        %3487 = vmatprep.subr.bf16.mxu0 %v2718
        %3488 = vmatpush1.bf16.msra.mxu0 %v2717
        %3489 = vmatprep.subr.bf16.mxu0 %v2723
        %3490 = vmatpush1.bf16.msra.mxu0 %v2722
        %3491 = vmatprep.subr.bf16.mxu0 %v2728
        %3492 = vmatpush1.bf16.msra.mxu0 %v2727
        %3493 = vmatprep.subr.bf16.mxu0 %v2733
        %3494 = vmatpush1.bf16.msra.mxu0 %v2732
        %3495 = vmatprep.subr.bf16.mxu0 %v2738
        %3496 = vmatpush1.bf16.msra.mxu0 %v2737
        %3497 = vmatprep.subr.bf16.mxu0 %v2743
        %3498 = vmatpush1.bf16.msra.mxu0 %v2742
        %3499 = vmatprep.subr.bf16.mxu0 %v2748
        %3500 = vmatpush1.bf16.msra.mxu0 %v2747
        %3501 = vmatprep.subr.bf16.mxu0 %v2753
        %3502 = vmatpush1.bf16.msra.mxu0 %v2752
        %3503 = vmatprep.subr.bf16.mxu0 %v2758
        %3504 = vmatpush1.bf16.msra.mxu0 %v2757
        %3505 = vmatprep.subr.bf16.mxu0 %v2763
        %3506 = vmatpush1.bf16.msra.mxu0 %v2762
        %3507 = vmatprep.subr.bf16.mxu0 %v2768
        %3508 = vmatpush1.bf16.msra.mxu0 %v2767
        %3509 = vmatprep.subr.bf16.mxu0 %v2773
        %3510 = vmatpush1.bf16.msra.mxu0 %v2772
        %3511 = vmatprep.subr.bf16.mxu0 %v2778
        %3512 = vmatpush1.bf16.msra.mxu0 %v2777
        %3513 = vmatprep.subr.bf16.mxu0 %v2783
        %3514 = vmatpush1.bf16.msra.mxu0 %v2782
        %3515 = vmatprep.subr.bf16.mxu0 %v2788
        %3516 = vmatpush1.bf16.msra.mxu0 %v2787
        %3517 = vmatprep.mubr.bf16.mxu0 %v644
        %3518 = vmatmul.mubr.bf16.gmra.mrb[0].mxu0 %v643
        %v3519 = vpop.f32.mrb[0].mxu0
        %v3520 = vadd.f32 %v3449, %v3519
        %v3521 = vpop.f32.mrb[0].mxu0
        %v3522 = vadd.f32 %v3451, %v3521
        %v3523 = vpop.f32.mrb[0].mxu0
        %v3524 = vadd.f32 %v3453, %v3523
        %v3525 = vpop.f32.mrb[0].mxu0
        %v3526 = vadd.f32 %v3455, %v3525
        %3527 = vmatprep.mubr.bf16.mxu0 %v654
        %3528 = vmatmul.mubr.bf16.gmra.mrb[0].mxu0 %v653
        %v3529 = vpop.f32.mrb[0].mxu0
        %v3530 = vadd.f32 %v3459, %v3529
        %v3531 = vpop.f32.mrb[0].mxu0
        %v3532 = vadd.f32 %v3461, %v3531
        %v3533 = vpop.f32.mrb[0].mxu0
        %v3534 = vadd.f32 %v3463, %v3533
        %v3535 = vpop.f32.mrb[0].mxu0
        %v3536 = vadd.f32 %v3465, %v3535
        %3537 = vmatprep.mubr.bf16.mxu0 %v664
        %3538 = vmatmul.mubr.bf16.gmra.mrb[0].mxu0 %v663
        %v3539 = vpop.f32.mrb[0].mxu0
        %v3540 = vadd.f32 %v3469, %v3539
        %v3541 = vpop.f32.mrb[0].mxu0
        %v3542 = vadd.f32 %v3471, %v3541
        %v3543 = vpop.f32.mrb[0].mxu0
        %v3544 = vadd.f32 %v3473, %v3543
        %v3545 = vpop.f32.mrb[0].mxu0
        %v3546 = vadd.f32 %v3475, %v3545
        %3547 = vmatprep.mubr.bf16.mxu0 %v674
        %3548 = vmatmul.mubr.bf16.gmra.mrb[0].mxu0 %v673
        %v3549 = vpop.f32.mrb[0].mxu0
        %v3550 = vadd.f32 %v3479, %v3549
        %v3551 = vpop.f32.mrb[0].mxu0
        %v3552 = vadd.f32 %v3481, %v3551
        %v3553 = vpop.f32.mrb[0].mxu0
        %v3554 = vpop.f32.mrb[0].mxu0
        %3555 = vdwg.mxu0
        %3556 = vmatprep.subr.bf16.mxu0 %v2793
        %3557 = vmatpush1.bf16.msra.mxu0 %v2792
        %3558 = vmatprep.subr.bf16.mxu0 %v2798
        %3559 = vmatpush1.bf16.msra.mxu0 %v2797
        %3560 = vmatprep.subr.bf16.mxu0 %v2803
        %3561 = vmatpush1.bf16.msra.mxu0 %v2802
        %3562 = vmatprep.subr.bf16.mxu0 %v2808
        %3563 = vmatpush1.bf16.msra.mxu0 %v2807
        %3564 = vmatprep.subr.bf16.mxu0 %v2813
        %3565 = vmatpush1.bf16.msra.mxu0 %v2812
        %3566 = vmatprep.subr.bf16.mxu0 %v2818
        %3567 = vmatpush1.bf16.msra.mxu0 %v2817
        %3568 = vmatprep.subr.bf16.mxu0 %v2823
        %3569 = vmatpush1.bf16.msra.mxu0 %v2822
        %3570 = vmatprep.subr.bf16.mxu0 %v2828
        %3571 = vmatpush1.bf16.msra.mxu0 %v2827
        %3572 = vmatprep.subr.bf16.mxu0 %v2833
        %3573 = vmatpush1.bf16.msra.mxu0 %v2832
        %3574 = vmatprep.subr.bf16.mxu0 %v2838
        %3575 = vmatpush1.bf16.msra.mxu0 %v2837
        %3576 = vmatprep.subr.bf16.mxu0 %v2843
        %3577 = vmatpush1.bf16.msra.mxu0 %v2842
        %3578 = vmatprep.subr.bf16.mxu0 %v2848
        %3579 = vmatpush1.bf16.msra.mxu0 %v2847
        %3580 = vmatprep.subr.bf16.mxu0 %v2853
        %3581 = vmatpush1.bf16.msra.mxu0 %v2852
        %3582 = vmatprep.subr.bf16.mxu0 %v2858
        %3583 = vmatpush1.bf16.msra.mxu0 %v2857
        %3584 = vmatprep.subr.bf16.mxu0 %v2863
        %3585 = vmatpush1.bf16.msra.mxu0 %v2862
        %3586 = vmatprep.subr.bf16.mxu0 %v2868
        %3587 = vmatpush1.bf16.msra.mxu0 %v2867
        %3588 = vmatprep.mubr.bf16.mxu0 %v646
        %3589 = vmatmul.mubr.bf16.gmra.mrb[0].mxu0 %v645
        %v3590 = vpop.f32.mrb[0].mxu0
        %v3591 = vadd.f32 %v3520, %v3590
        %v3592 = vpop.f32.mrb[0].mxu0
        %v3593 = vadd.f32 %v3522, %v3592
        %v3594 = vpop.f32.mrb[0].mxu0
        %v3595 = vadd.f32 %v3524, %v3594
        %v3596 = vpop.f32.mrb[0].mxu0
        %v3597 = vadd.f32 %v3526, %v3596
        %3598 = vmatprep.mubr.bf16.mxu0 %v656
        %3599 = vmatmul.mubr.bf16.gmra.mrb[0].mxu0 %v655
        %v3600 = vpop.f32.mrb[0].mxu0
        %v3601 = vadd.f32 %v3530, %v3600
        %v3602 = vpop.f32.mrb[0].mxu0
        %v3603 = vadd.f32 %v3532, %v3602
        %v3604 = vpop.f32.mrb[0].mxu0
        %v3605 = vadd.f32 %v3534, %v3604
        %v3606 = vpop.f32.mrb[0].mxu0
        %v3607 = vadd.f32 %v3536, %v3606
        %3608 = vmatprep.mubr.bf16.mxu0 %v666
        %3609 = vmatmul.mubr.bf16.gmra.mrb[0].mxu0 %v665
        %v3610 = vpop.f32.mrb[0].mxu0
        %v3611 = vadd.f32 %v3540, %v3610
        %v3612 = vpop.f32.mrb[0].mxu0
        %v3613 = vadd.f32 %v3542, %v3612
        %v3614 = vpop.f32.mrb[0].mxu0
        %v3615 = vadd.f32 %v3544, %v3614
        %v3616 = vpop.f32.mrb[0].mxu0
        %v3617 = vadd.f32 %v3546, %v3616
        %3618 = vmatprep.mubr.bf16.mxu0 %v676
        %3619 = vmatmul.mubr.bf16.gmra.mrb[0].mxu0 %v675
        %v3620 = vpop.f32.mrb[0].mxu0
        %v3621 = vadd.f32 %v3550, %v3620
        %v3622 = vpop.f32.mrb[0].mxu0
        %v3623 = vadd.f32 %v3552, %v3622
        %v3624 = vpop.f32.mrb[0].mxu0
        %v3625 = vpop.f32.mrb[0].mxu0
        %3626 = vdwg.mxu0
        %3627 = vmatprep.subr.bf16.mxu0 %v2475
        %3628 = vmatpush1.bf16.msra.mxu0 %v2474
        %3629 = vmatprep.subr.bf16.mxu0 %v2480
        %3630 = vmatpush1.bf16.msra.mxu0 %v2479
        %3631 = vmatprep.subr.bf16.mxu0 %v2485
        %3632 = vmatpush1.bf16.msra.mxu0 %v2484
        %3633 = vmatprep.subr.bf16.mxu0 %v2490
        %3634 = vmatpush1.bf16.msra.mxu0 %v2489
        %3635 = vmatprep.subr.bf16.mxu0 %v2495
        %3636 = vmatpush1.bf16.msra.mxu0 %v2494
        %3637 = vmatprep.subr.bf16.mxu0 %v2500
        %3638 = vmatpush1.bf16.msra.mxu0 %v2499
        %3639 = vmatprep.subr.bf16.mxu0 %v2505
        %3640 = vmatpush1.bf16.msra.mxu0 %v2504
        %3641 = vmatprep.subr.bf16.mxu0 %v2510
        %3642 = vmatpush1.bf16.msra.mxu0 %v2509
        %3643 = vmatprep.subr.bf16.mxu0 %v2515
        %3644 = vmatpush1.bf16.msra.mxu0 %v2514
        %3645 = vmatprep.subr.bf16.mxu0 %v2520
        %3646 = vmatpush1.bf16.msra.mxu0 %v2519
        %3647 = vmatprep.subr.bf16.mxu0 %v2525
        %3648 = vmatpush1.bf16.msra.mxu0 %v2524
        %3649 = vmatprep.subr.bf16.mxu0 %v2530
        %3650 = vmatpush1.bf16.msra.mxu0 %v2529
        %3651 = vmatprep.subr.bf16.mxu0 %v2535
        %3652 = vmatpush1.bf16.msra.mxu0 %v2534
        %3653 = vmatprep.subr.bf16.mxu0 %v2540
        %3654 = vmatpush1.bf16.msra.mxu0 %v2539
        %3655 = vmatprep.subr.bf16.mxu0 %v2545
        %3656 = vmatpush1.bf16.msra.mxu0 %v2544
        %3657 = vmatprep.subr.bf16.mxu0 %v2550
        %3658 = vmatpush1.bf16.msra.mxu0 %v2549
        %3659 = vmatprep.mubr.bf16.mxu0 %v638
        %3660 = vmatmul.mubr.bf16.gmra.mrb[0].mxu0 %v637
        %v3661 = vpop.f32.mrb[0].mxu0
        %v3662 = vadd.f32 0.0, %v3661
        %v3663 = vpop.f32.mrb[0].mxu0
        %v3664 = vadd.f32 0.0, %v3663
        %v3665 = vpop.f32.mrb[0].mxu0
        %v3666 = vadd.f32 0.0, %v3665
        %v3667 = vpop.f32.mrb[0].mxu0
        %v3668 = vadd.f32 0.0, %v3667
        %3669 = vmatprep.mubr.bf16.mxu0 %v648
        %3670 = vmatmul.mubr.bf16.gmra.mrb[0].mxu0 %v647
        %v3671 = vpop.f32.mrb[0].mxu0
        %v3672 = vadd.f32 0.0, %v3671
        %v3673 = vpop.f32.mrb[0].mxu0
        %v3674 = vadd.f32 0.0, %v3673
        %v3675 = vpop.f32.mrb[0].mxu0
        %v3676 = vadd.f32 0.0, %v3675
        %v3677 = vpop.f32.mrb[0].mxu0
        %v3678 = vadd.f32 0.0, %v3677
        %3679 = vmatprep.mubr.bf16.mxu0 %v658
        %3680 = vmatmul.mubr.bf16.gmra.mrb[0].mxu0 %v657
        %v3681 = vpop.f32.mrb[0].mxu0
        %v3682 = vadd.f32 0.0, %v3681
        %v3683 = vpop.f32.mrb[0].mxu0
        %v3684 = vadd.f32 0.0, %v3683
        %v3685 = vpop.f32.mrb[0].mxu0
        %v3686 = vadd.f32 0.0, %v3685
        %v3687 = vpop.f32.mrb[0].mxu0
        %v3688 = vadd.f32 0.0, %v3687
        %3689 = vmatprep.mubr.bf16.mxu0 %v668
        %3690 = vmatmul.mubr.bf16.gmra.mrb[0].mxu0 %v667
        %v3691 = vpop.f32.mrb[0].mxu0
        %v3692 = vadd.f32 0.0, %v3691
        %v3693 = vpop.f32.mrb[0].mxu0
        %v3694 = vadd.f32 0.0, %v3693
        %v3695 = vpop.f32.mrb[0].mxu0
        %v3696 = vpop.f32.mrb[0].mxu0
        %3697 = vdwg.mxu0
        %3698 = vmatprep.subr.bf16.mxu0 %v2555
        %3699 = vmatpush1.bf16.msra.mxu0 %v2554
        %3700 = vmatprep.subr.bf16.mxu0 %v2560
        %3701 = vmatpush1.bf16.msra.mxu0 %v2559
        %3702 = vmatprep.subr.bf16.mxu0 %v2565
        %3703 = vmatpush1.bf16.msra.mxu0 %v2564
        %3704 = vmatprep.subr.bf16.mxu0 %v2570
        %3705 = vmatpush1.bf16.msra.mxu0 %v2569
        %3706 = vmatprep.subr.bf16.mxu0 %v2575
        %3707 = vmatpush1.bf16.msra.mxu0 %v2574
        %3708 = vmatprep.subr.bf16.mxu0 %v2580
        %3709 = vmatpush1.bf16.msra.mxu0 %v2579
        %3710 = vmatprep.subr.bf16.mxu0 %v2585
        %3711 = vmatpush1.bf16.msra.mxu0 %v2584
        %3712 = vmatprep.subr.bf16.mxu0 %v2590
        %3713 = vmatpush1.bf16.msra.mxu0 %v2589
        %3714 = vmatprep.subr.bf16.mxu0 %v2595
        %3715 = vmatpush1.bf16.msra.mxu0 %v2594
        %3716 = vmatprep.subr.bf16.mxu0 %v2600
        %3717 = vmatpush1.bf16.msra.mxu0 %v2599
        %3718 = vmatprep.subr.bf16.mxu0 %v2605
        %3719 = vmatpush1.bf16.msra.mxu0 %v2604
        %3720 = vmatprep.subr.bf16.mxu0 %v2610
        %3721 = vmatpush1.bf16.msra.mxu0 %v2609
        %3722 = vmatprep.subr.bf16.mxu0 %v2615
        %3723 = vmatpush1.bf16.msra.mxu0 %v2614
        %3724 = vmatprep.subr.bf16.mxu0 %v2620
        %3725 = vmatpush1.bf16.msra.mxu0 %v2619
        %3726 = vmatprep.subr.bf16.mxu0 %v2625
        %3727 = vmatpush1.bf16.msra.mxu0 %v2624
        %3728 = vmatprep.subr.bf16.mxu0 %v2630
        %3729 = vmatpush1.bf16.msra.mxu0 %v2629
        %3730 = vmatprep.mubr.bf16.mxu0 %v640
        %3731 = vmatmul.mubr.bf16.gmra.mrb[0].mxu0 %v639
        %v3732 = vpop.f32.mrb[0].mxu0
        %v3733 = vadd.f32 %v3662, %v3732
        %v3734 = vpop.f32.mrb[0].mxu0
        %v3735 = vadd.f32 %v3664, %v3734
        %v3736 = vpop.f32.mrb[0].mxu0
        %v3737 = vadd.f32 %v3666, %v3736
        %v3738 = vpop.f32.mrb[0].mxu0
        %v3739 = vadd.f32 %v3668, %v3738
        %3740 = vmatprep.mubr.bf16.mxu0 %v650
        %3741 = vmatmul.mubr.bf16.gmra.mrb[0].mxu0 %v649
        %v3742 = vpop.f32.mrb[0].mxu0
        %v3743 = vadd.f32 %v3672, %v3742
        %v3744 = vpop.f32.mrb[0].mxu0
        %v3745 = vadd.f32 %v3674, %v3744
        %v3746 = vpop.f32.mrb[0].mxu0
        %v3747 = vadd.f32 %v3676, %v3746
        %v3748 = vpop.f32.mrb[0].mxu0
        %v3749 = vadd.f32 %v3678, %v3748
        %3750 = vmatprep.mubr.bf16.mxu0 %v660
        %3751 = vmatmul.mubr.bf16.gmra.mrb[0].mxu0 %v659
        %v3752 = vpop.f32.mrb[0].mxu0
        %v3753 = vadd.f32 %v3682, %v3752
        %v3754 = vpop.f32.mrb[0].mxu0
        %v3755 = vadd.f32 %v3684, %v3754
        %v3756 = vpop.f32.mrb[0].mxu0
        %v3757 = vadd.f32 %v3686, %v3756
        %v3758 = vpop.f32.mrb[0].mxu0
        %v3759 = vadd.f32 %v3688, %v3758
        %3760 = vmatprep.mubr.bf16.mxu0 %v670
        %3761 = vmatmul.mubr.bf16.gmra.mrb[0].mxu0 %v669
        %v3762 = vpop.f32.mrb[0].mxu0
        %v3763 = vadd.f32 %v3692, %v3762
        %v3764 = vpop.f32.mrb[0].mxu0
        %v3765 = vadd.f32 %v3694, %v3764
        %v3766 = vpop.f32.mrb[0].mxu0
        %v3767 = vpop.f32.mrb[0].mxu0
        %3768 = vdwg.mxu0
        %3769 = vmatprep.subr.bf16.mxu0 %v2635
        %3770 = vmatpush1.bf16.msra.mxu0 %v2634
        %3771 = vmatprep.subr.bf16.mxu0 %v2640
        %3772 = vmatpush1.bf16.msra.mxu0 %v2639
        %3773 = vmatprep.subr.bf16.mxu0 %v2645
        %3774 = vmatpush1.bf16.msra.mxu0 %v2644
        %3775 = vmatprep.subr.bf16.mxu0 %v2650
        %3776 = vmatpush1.bf16.msra.mxu0 %v2649
        %3777 = vmatprep.subr.bf16.mxu0 %v2655
        %3778 = vmatpush1.bf16.msra.mxu0 %v2654
        %3779 = vmatprep.subr.bf16.mxu0 %v2660
        %3780 = vmatpush1.bf16.msra.mxu0 %v2659
        %3781 = vmatprep.subr.bf16.mxu0 %v2665
        %3782 = vmatpush1.bf16.msra.mxu0 %v2664
        %3783 = vmatprep.subr.bf16.mxu0 %v2670
        %3784 = vmatpush1.bf16.msra.mxu0 %v2669
        %3785 = vmatprep.subr.bf16.mxu0 %v2675
        %3786 = vmatpush1.bf16.msra.mxu0 %v2674
        %3787 = vmatprep.subr.bf16.mxu0 %v2680
        %3788 = vmatpush1.bf16.msra.mxu0 %v2679
        %3789 = vmatprep.subr.bf16.mxu0 %v2685
        %3790 = vmatpush1.bf16.msra.mxu0 %v2684
        %3791 = vmatprep.subr.bf16.mxu0 %v2690
        %3792 = vmatpush1.bf16.msra.mxu0 %v2689
        %3793 = vmatprep.subr.bf16.mxu0 %v2695
        %3794 = vmatpush1.bf16.msra.mxu0 %v2694
        %3795 = vmatprep.subr.bf16.mxu0 %v2700
        %3796 = vmatpush1.bf16.msra.mxu0 %v2699
        %3797 = vmatprep.subr.bf16.mxu0 %v2705
        %3798 = vmatpush1.bf16.msra.mxu0 %v2704
        %3799 = vmatprep.subr.bf16.mxu0 %v2710
        %3800 = vmatpush1.bf16.msra.mxu0 %v2709
        %3801 = vmatprep.mubr.bf16.mxu0 %v642
        %3802 = vmatmul.mubr.bf16.gmra.mrb[0].mxu0 %v641
        %v3803 = vpop.f32.mrb[0].mxu0
        %v3804 = vadd.f32 %v3733, %v3803
        %v3805 = vpop.f32.mrb[0].mxu0
        %v3806 = vadd.f32 %v3735, %v3805
        %v3807 = vpop.f32.mrb[0].mxu0
        %v3808 = vadd.f32 %v3737, %v3807
        %v3809 = vpop.f32.mrb[0].mxu0
        %v3810 = vadd.f32 %v3739, %v3809
        %3811 = vmatprep.mubr.bf16.mxu0 %v652
        %3812 = vmatmul.mubr.bf16.gmra.mrb[0].mxu0 %v651
        %v3813 = vpop.f32.mrb[0].mxu0
        %v3814 = vadd.f32 %v3743, %v3813
        %v3815 = vpop.f32.mrb[0].mxu0
        %v3816 = vadd.f32 %v3745, %v3815
        %v3817 = vpop.f32.mrb[0].mxu0
        %v3818 = vadd.f32 %v3747, %v3817
        %v3819 = vpop.f32.mrb[0].mxu0
        %v3820 = vadd.f32 %v3749, %v3819
        %3821 = vmatprep.mubr.bf16.mxu0 %v662
        %3822 = vmatmul.mubr.bf16.gmra.mrb[0].mxu0 %v661
        %v3823 = vpop.f32.mrb[0].mxu0
        %v3824 = vadd.f32 %v3753, %v3823
        %v3825 = vpop.f32.mrb[0].mxu0
        %v3826 = vadd.f32 %v3755, %v3825
        %v3827 = vpop.f32.mrb[0].mxu0
        %v3828 = vadd.f32 %v3757, %v3827
        %v3829 = vpop.f32.mrb[0].mxu0
        %v3830 = vadd.f32 %v3759, %v3829
        %3831 = vmatprep.mubr.bf16.mxu0 %v672
        %3832 = vmatmul.mubr.bf16.gmra.mrb[0].mxu0 %v671
        %v3833 = vpop.f32.mrb[0].mxu0
        %v3834 = vadd.f32 %v3763, %v3833
        %v3835 = vpop.f32.mrb[0].mxu0
        %v3836 = vadd.f32 %v3765, %v3835
        %v3837 = vpop.f32.mrb[0].mxu0
        %v3838 = vpop.f32.mrb[0].mxu0
        %3839 = vdwg.mxu0
        %3840 = vmatprep.subr.bf16.mxu0 %v2715
        %3841 = vmatpush1.bf16.msra.mxu0 %v2714
        %3842 = vmatprep.subr.bf16.mxu0 %v2720
        %3843 = vmatpush1.bf16.msra.mxu0 %v2719
        %3844 = vmatprep.subr.bf16.mxu0 %v2725
        %3845 = vmatpush1.bf16.msra.mxu0 %v2724
        %3846 = vmatprep.subr.bf16.mxu0 %v2730
        %3847 = vmatpush1.bf16.msra.mxu0 %v2729
        %3848 = vmatprep.subr.bf16.mxu0 %v2735
        %3849 = vmatpush1.bf16.msra.mxu0 %v2734
        %3850 = vmatprep.subr.bf16.mxu0 %v2740
        %3851 = vmatpush1.bf16.msra.mxu0 %v2739
        %3852 = vmatprep.subr.bf16.mxu0 %v2745
        %3853 = vmatpush1.bf16.msra.mxu0 %v2744
        %3854 = vmatprep.subr.bf16.mxu0 %v2750
        %3855 = vmatpush1.bf16.msra.mxu0 %v2749
        %3856 = vmatprep.subr.bf16.mxu0 %v2755
        %3857 = vmatpush1.bf16.msra.mxu0 %v2754
        %3858 = vmatprep.subr.bf16.mxu0 %v2760
        %3859 = vmatpush1.bf16.msra.mxu0 %v2759
        %3860 = vmatprep.subr.bf16.mxu0 %v2765
        %3861 = vmatpush1.bf16.msra.mxu0 %v2764
        %3862 = vmatprep.subr.bf16.mxu0 %v2770
        %3863 = vmatpush1.bf16.msra.mxu0 %v2769
        %3864 = vmatprep.subr.bf16.mxu0 %v2775
        %3865 = vmatpush1.bf16.msra.mxu0 %v2774
        %3866 = vmatprep.subr.bf16.mxu0 %v2780
        %3867 = vmatpush1.bf16.msra.mxu0 %v2779
        %3868 = vmatprep.subr.bf16.mxu0 %v2785
        %3869 = vmatpush1.bf16.msra.mxu0 %v2784
        %3870 = vmatprep.subr.bf16.mxu0 %v2790
        %3871 = vmatpush1.bf16.msra.mxu0 %v2789
        %3872 = vmatprep.mubr.bf16.mxu0 %v644
        %3873 = vmatmul.mubr.bf16.gmra.mrb[0].mxu0 %v643
        %v3874 = vpop.f32.mrb[0].mxu0
        %v3875 = vadd.f32 %v3804, %v3874
        %v3876 = vpop.f32.mrb[0].mxu0
        %v3877 = vadd.f32 %v3806, %v3876
        %v3878 = vpop.f32.mrb[0].mxu0
        %v3879 = vadd.f32 %v3808, %v3878
        %v3880 = vpop.f32.mrb[0].mxu0
        %v3881 = vadd.f32 %v3810, %v3880
        %3882 = vmatprep.mubr.bf16.mxu0 %v654
        %3883 = vmatmul.mubr.bf16.gmra.mrb[0].mxu0 %v653
        %v3884 = vpop.f32.mrb[0].mxu0
        %v3885 = vadd.f32 %v3814, %v3884
        %v3886 = vpop.f32.mrb[0].mxu0
        %v3887 = vadd.f32 %v3816, %v3886
        %v3888 = vpop.f32.mrb[0].mxu0
        %v3889 = vadd.f32 %v3818, %v3888
        %v3890 = vpop.f32.mrb[0].mxu0
        %v3891 = vadd.f32 %v3820, %v3890
        %3892 = vmatprep.mubr.bf16.mxu0 %v664
        %3893 = vmatmul.mubr.bf16.gmra.mrb[0].mxu0 %v663
        %v3894 = vpop.f32.mrb[0].mxu0
        %v3895 = vadd.f32 %v3824, %v3894
        %v3896 = vpop.f32.mrb[0].mxu0
        %v3897 = vadd.f32 %v3826, %v3896
        %v3898 = vpop.f32.mrb[0].mxu0
        %v3899 = vadd.f32 %v3828, %v3898
        %v3900 = vpop.f32.mrb[0].mxu0
        %v3901 = vadd.f32 %v3830, %v3900
        %3902 = vmatprep.mubr.bf16.mxu0 %v674
        %3903 = vmatmul.mubr.bf16.gmra.mrb[0].mxu0 %v673
        %v3904 = vpop.f32.mrb[0].mxu0
        %v3905 = vadd.f32 %v3834, %v3904
        %v3906 = vpop.f32.mrb[0].mxu0
        %v3907 = vadd.f32 %v3836, %v3906
        %v3908 = vpop.f32.mrb[0].mxu0
        %v3909 = vpop.f32.mrb[0].mxu0
        %3910 = vdwg.mxu0
        %3911 = vmatprep.subr.bf16.mxu0 %v2795
        %3912 = vmatpush1.bf16.msra.mxu0 %v2794
        %3913 = vmatprep.subr.bf16.mxu0 %v2800
        %3914 = vmatpush1.bf16.msra.mxu0 %v2799
        %3915 = vmatprep.subr.bf16.mxu0 %v2805
        %3916 = vmatpush1.bf16.msra.mxu0 %v2804
        %3917 = vmatprep.subr.bf16.mxu0 %v2810
        %3918 = vmatpush1.bf16.msra.mxu0 %v2809
        %3919 = vmatprep.subr.bf16.mxu0 %v2815
        %3920 = vmatpush1.bf16.msra.mxu0 %v2814
        %3921 = vmatprep.subr.bf16.mxu0 %v2820
        %3922 = vmatpush1.bf16.msra.mxu0 %v2819
        %3923 = vmatprep.subr.bf16.mxu0 %v2825
        %3924 = vmatpush1.bf16.msra.mxu0 %v2824
        %3925 = vmatprep.subr.bf16.mxu0 %v2830
        %3926 = vmatpush1.bf16.msra.mxu0 %v2829
        %3927 = vmatprep.subr.bf16.mxu0 %v2835
        %3928 = vmatpush1.bf16.msra.mxu0 %v2834
        %3929 = vmatprep.subr.bf16.mxu0 %v2840
        %3930 = vmatpush1.bf16.msra.mxu0 %v2839
        %3931 = vmatprep.subr.bf16.mxu0 %v2845
        %3932 = vmatpush1.bf16.msra.mxu0 %v2844
        %3933 = vmatprep.subr.bf16.mxu0 %v2850
        %3934 = vmatpush1.bf16.msra.mxu0 %v2849
        %3935 = vmatprep.subr.bf16.mxu0 %v2855
        %3936 = vmatpush1.bf16.msra.mxu0 %v2854
        %3937 = vmatprep.subr.bf16.mxu0 %v2860
        %3938 = vmatpush1.bf16.msra.mxu0 %v2859
        %3939 = vmatprep.subr.bf16.mxu0 %v2865
        %3940 = vmatpush1.bf16.msra.mxu0 %v2864
        %3941 = vmatprep.subr.bf16.mxu0 %v2870
        %3942 = vmatpush1.bf16.msra.mxu0 %v2869
        %3943 = vmatprep.mubr.bf16.mxu0 %v646
        %3944 = vmatmul.mubr.bf16.gmra.mrb[0].mxu0 %v645
        %v3945 = vpop.f32.mrb[0].mxu0
        %v3946 = vadd.f32 %v3875, %v3945
        %v3947 = vpop.f32.mrb[0].mxu0
        %v3948 = vadd.f32 %v3877, %v3947
        %v3949 = vpop.f32.mrb[0].mxu0
        %v3950 = vadd.f32 %v3879, %v3949
        %v3951 = vpop.f32.mrb[0].mxu0
        %v3952 = vadd.f32 %v3881, %v3951
        %3953 = vmatprep.mubr.bf16.mxu0 %v656
        %3954 = vmatmul.mubr.bf16.gmra.mrb[0].mxu0 %v655
        %v3955 = vpop.f32.mrb[0].mxu0
        %v3956 = vadd.f32 %v3885, %v3955
        %v3957 = vpop.f32.mrb[0].mxu0
        %v3958 = vadd.f32 %v3887, %v3957
        %v3959 = vpop.f32.mrb[0].mxu0
        %v3960 = vadd.f32 %v3889, %v3959
        %v3961 = vpop.f32.mrb[0].mxu0
        %v3962 = vadd.f32 %v3891, %v3961
        %3963 = vmatprep.mubr.bf16.mxu0 %v666
        %3964 = vmatmul.mubr.bf16.gmra.mrb[0].mxu0 %v665
        %v3965 = vpop.f32.mrb[0].mxu0
        %v3966 = vadd.f32 %v3895, %v3965
        %v3967 = vpop.f32.mrb[0].mxu0
        %v3968 = vadd.f32 %v3897, %v3967
        %v3969 = vpop.f32.mrb[0].mxu0
        %v3970 = vadd.f32 %v3899, %v3969
        %v3971 = vpop.f32.mrb[0].mxu0
        %v3972 = vadd.f32 %v3901, %v3971
        %3973 = vmatprep.mubr.bf16.mxu0 %v676
        %3974 = vmatmul.mubr.bf16.gmra.mrb[0].mxu0 %v675
        %v3975 = vpop.f32.mrb[0].mxu0
        %v3976 = vadd.f32 %v3905, %v3975
        %v3977 = vpop.f32.mrb[0].mxu0
        %v3978 = vadd.f32 %v3907, %v3977
        %v3979 = vpop.f32.mrb[0].mxu0
        %v3980 = vpop.f32.mrb[0].mxu0
        %3981 = vdwg.mxu0
        %3982 = vmatprep.subr.bf16.mxu0 0
        %3983 = vmatpush1.bf16.msra.mxu0 %v2476
        %3984 = vmatprep.subr.bf16.mxu0 0
        %3985 = vmatpush1.bf16.msra.mxu0 %v2481
        %3986 = vmatprep.subr.bf16.mxu0 0
        %3987 = vmatpush1.bf16.msra.mxu0 %v2486
        %3988 = vmatprep.subr.bf16.mxu0 0
        %3989 = vmatpush1.bf16.msra.mxu0 %v2491
        %3990 = vmatprep.subr.bf16.mxu0 0
        %3991 = vmatpush1.bf16.msra.mxu0 %v2496
        %3992 = vmatprep.subr.bf16.mxu0 0
        %3993 = vmatpush1.bf16.msra.mxu0 %v2501
        %3994 = vmatprep.subr.bf16.mxu0 0
        %3995 = vmatpush1.bf16.msra.mxu0 %v2506
        %3996 = vmatprep.subr.bf16.mxu0 0
        %3997 = vmatpush1.bf16.msra.mxu0 %v2511
        %3998 = vmatprep.subr.bf16.mxu0 0
        %3999 = vmatpush1.bf16.msra.mxu0 %v2516
        %4000 = vmatprep.subr.bf16.mxu0 0
        %4001 = vmatpush1.bf16.msra.mxu0 %v2521
        %4002 = vmatprep.subr.bf16.mxu0 0
        %4003 = vmatpush1.bf16.msra.mxu0 %v2526
        %4004 = vmatprep.subr.bf16.mxu0 0
        %4005 = vmatpush1.bf16.msra.mxu0 %v2531
        %4006 = vmatprep.subr.bf16.mxu0 0
        %4007 = vmatpush1.bf16.msra.mxu0 %v2536
        %4008 = vmatprep.subr.bf16.mxu0 0
        %4009 = vmatpush1.bf16.msra.mxu0 %v2541
        %4010 = vmatprep.subr.bf16.mxu0 0
        %4011 = vmatpush1.bf16.msra.mxu0 %v2546
        %4012 = vmatprep.subr.bf16.mxu0 0
        %4013 = vmatpush1.bf16.msra.mxu0 %v2551
        %4014 = vmatprep.mubr.bf16.mxu0 %v638
        %4015 = vmatmul.mubr.bf16.gmra.mrb[0].mxu0 %v637
        %v4016 = vpop.f32.mrb[0].mxu0
        %v4017 = vadd.f32 0.0, %v4016
        %v4018 = vpop.f32.mrb[0].mxu0
        %v4019 = vpop.f32.mrb[0].mxu0
        %v4020 = vadd.f32 0.0, %v4019
        %v4021 = vpop.f32.mrb[0].mxu0
        %4022 = vmatprep.mubr.bf16.mxu0 %v648
        %4023 = vmatmul.mubr.bf16.gmra.mrb[0].mxu0 %v647
        %v4024 = vpop.f32.mrb[0].mxu0
        %v4025 = vadd.f32 0.0, %v4024
        %v4026 = vpop.f32.mrb[0].mxu0
        %v4027 = vpop.f32.mrb[0].mxu0
        %v4028 = vadd.f32 0.0, %v4027
        %v4029 = vpop.f32.mrb[0].mxu0
        %4030 = vmatprep.mubr.bf16.mxu0 %v658
        %4031 = vmatmul.mubr.bf16.gmra.mrb[0].mxu0 %v657
        %v4032 = vpop.f32.mrb[0].mxu0
        %v4033 = vadd.f32 0.0, %v4032
        %v4034 = vpop.f32.mrb[0].mxu0
        %v4035 = vpop.f32.mrb[0].mxu0
        %v4036 = vadd.f32 0.0, %v4035
        %v4037 = vpop.f32.mrb[0].mxu0
        %4038 = vmatprep.mubr.bf16.mxu0 %v668
        %4039 = vmatmul.mubr.bf16.gmra.mrb[0].mxu0 %v667
        %v4040 = vpop.f32.mrb[0].mxu0
        %v4041 = vadd.f32 0.0, %v4040
        %v4042 = vpop.f32.mrb[0].mxu0
        %v4043 = vpop.f32.mrb[0].mxu0
        %v4044 = vpop.f32.mrb[0].mxu0
        %4045 = vdwg.mxu0
        %4046 = vmatprep.subr.bf16.mxu0 0
        %4047 = vmatpush1.bf16.msra.mxu0 %v2556
        %4048 = vmatprep.subr.bf16.mxu0 0
        %4049 = vmatpush1.bf16.msra.mxu0 %v2561
        %4050 = vmatprep.subr.bf16.mxu0 0
        %4051 = vmatpush1.bf16.msra.mxu0 %v2566
        %4052 = vmatprep.subr.bf16.mxu0 0
        %4053 = vmatpush1.bf16.msra.mxu0 %v2571
        %4054 = vmatprep.subr.bf16.mxu0 0
        %4055 = vmatpush1.bf16.msra.mxu0 %v2576
        %4056 = vmatprep.subr.bf16.mxu0 0
        %4057 = vmatpush1.bf16.msra.mxu0 %v2581
        %4058 = vmatprep.subr.bf16.mxu0 0
        %4059 = vmatpush1.bf16.msra.mxu0 %v2586
        %4060 = vmatprep.subr.bf16.mxu0 0
        %4061 = vmatpush1.bf16.msra.mxu0 %v2591
        %4062 = vmatprep.subr.bf16.mxu0 0
        %4063 = vmatpush1.bf16.msra.mxu0 %v2596
        %4064 = vmatprep.subr.bf16.mxu0 0
        %4065 = vmatpush1.bf16.msra.mxu0 %v2601
        %4066 = vmatprep.subr.bf16.mxu0 0
        %4067 = vmatpush1.bf16.msra.mxu0 %v2606
        %4068 = vmatprep.subr.bf16.mxu0 0
        %4069 = vmatpush1.bf16.msra.mxu0 %v2611
        %4070 = vmatprep.subr.bf16.mxu0 0
        %4071 = vmatpush1.bf16.msra.mxu0 %v2616
        %4072 = vmatprep.subr.bf16.mxu0 0
        %4073 = vmatpush1.bf16.msra.mxu0 %v2621
        %4074 = vmatprep.subr.bf16.mxu0 0
        %4075 = vmatpush1.bf16.msra.mxu0 %v2626
        %4076 = vmatprep.subr.bf16.mxu0 0
        %4077 = vmatpush1.bf16.msra.mxu0 %v2631
        %4078 = vmatprep.mubr.bf16.mxu0 %v640
        %4079 = vmatmul.mubr.bf16.gmra.mrb[0].mxu0 %v639
        %v4080 = vpop.f32.mrb[0].mxu0
        %v4081 = vadd.f32 %v4017, %v4080
        %v4082 = vpop.f32.mrb[0].mxu0
        %v4083 = vpop.f32.mrb[0].mxu0
        %v4084 = vadd.f32 %v4020, %v4083
        %v4085 = vpop.f32.mrb[0].mxu0
        %4086 = vmatprep.mubr.bf16.mxu0 %v650
        %4087 = vmatmul.mubr.bf16.gmra.mrb[0].mxu0 %v649
        %v4088 = vpop.f32.mrb[0].mxu0
        %v4089 = vadd.f32 %v4025, %v4088
        %v4090 = vpop.f32.mrb[0].mxu0
        %v4091 = vpop.f32.mrb[0].mxu0
        %v4092 = vadd.f32 %v4028, %v4091
        %v4093 = vpop.f32.mrb[0].mxu0
        %4094 = vmatprep.mubr.bf16.mxu0 %v660
        %4095 = vmatmul.mubr.bf16.gmra.mrb[0].mxu0 %v659
        %v4096 = vpop.f32.mrb[0].mxu0
        %v4097 = vadd.f32 %v4033, %v4096
        %v4098 = vpop.f32.mrb[0].mxu0
        %v4099 = vpop.f32.mrb[0].mxu0
        %v4100 = vadd.f32 %v4036, %v4099
        %v4101 = vpop.f32.mrb[0].mxu0
        %4102 = vmatprep.mubr.bf16.mxu0 %v670
        %4103 = vmatmul.mubr.bf16.gmra.mrb[0].mxu0 %v669
        %v4104 = vpop.f32.mrb[0].mxu0
        %v4105 = vadd.f32 %v4041, %v4104
        %v4106 = vpop.f32.mrb[0].mxu0
        %v4107 = vpop.f32.mrb[0].mxu0
        %v4108 = vpop.f32.mrb[0].mxu0
        %4109 = vdwg.mxu0
        %4110 = vmatprep.subr.bf16.mxu0 0
        %4111 = vmatpush1.bf16.msra.mxu0 %v2636
        %4112 = vmatprep.subr.bf16.mxu0 0
        %4113 = vmatpush1.bf16.msra.mxu0 %v2641
        %4114 = vmatprep.subr.bf16.mxu0 0
        %4115 = vmatpush1.bf16.msra.mxu0 %v2646
        %4116 = vmatprep.subr.bf16.mxu0 0
        %4117 = vmatpush1.bf16.msra.mxu0 %v2651
        %4118 = vmatprep.subr.bf16.mxu0 0
        %4119 = vmatpush1.bf16.msra.mxu0 %v2656
        %4120 = vmatprep.subr.bf16.mxu0 0
        %4121 = vmatpush1.bf16.msra.mxu0 %v2661
        %4122 = vmatprep.subr.bf16.mxu0 0
        %4123 = vmatpush1.bf16.msra.mxu0 %v2666
        %4124 = vmatprep.subr.bf16.mxu0 0
        %4125 = vmatpush1.bf16.msra.mxu0 %v2671
        %4126 = vmatprep.subr.bf16.mxu0 0
        %4127 = vmatpush1.bf16.msra.mxu0 %v2676
        %4128 = vmatprep.subr.bf16.mxu0 0
        %4129 = vmatpush1.bf16.msra.mxu0 %v2681
        %4130 = vmatprep.subr.bf16.mxu0 0
        %4131 = vmatpush1.bf16.msra.mxu0 %v2686
        %4132 = vmatprep.subr.bf16.mxu0 0
        %4133 = vmatpush1.bf16.msra.mxu0 %v2691
        %4134 = vmatprep.subr.bf16.mxu0 0
        %4135 = vmatpush1.bf16.msra.mxu0 %v2696
        %4136 = vmatprep.subr.bf16.mxu0 0
        %4137 = vmatpush1.bf16.msra.mxu0 %v2701
        %4138 = vmatprep.subr.bf16.mxu0 0
        %4139 = vmatpush1.bf16.msra.mxu0 %v2706
        %4140 = vmatprep.subr.bf16.mxu0 0
        %4141 = vmatpush1.bf16.msra.mxu0 %v2711
        %4142 = vmatprep.mubr.bf16.mxu0 %v642
        %4143 = vmatmul.mubr.bf16.gmra.mrb[0].mxu0 %v641
        %v4144 = vpop.f32.mrb[0].mxu0
        %v4145 = vadd.f32 %v4081, %v4144
        %v4146 = vpop.f32.mrb[0].mxu0
        %v4147 = vpop.f32.mrb[0].mxu0
        %v4148 = vadd.f32 %v4084, %v4147
        %v4149 = vpop.f32.mrb[0].mxu0
        %4150 = vmatprep.mubr.bf16.mxu0 %v652
        %4151 = vmatmul.mubr.bf16.gmra.mrb[0].mxu0 %v651
        %v4152 = vpop.f32.mrb[0].mxu0
        %v4153 = vadd.f32 %v4089, %v4152
        %v4154 = vpop.f32.mrb[0].mxu0
        %v4155 = vpop.f32.mrb[0].mxu0
        %v4156 = vadd.f32 %v4092, %v4155
        %v4157 = vpop.f32.mrb[0].mxu0
        %4158 = vmatprep.mubr.bf16.mxu0 %v662
        %4159 = vmatmul.mubr.bf16.gmra.mrb[0].mxu0 %v661
        %v4160 = vpop.f32.mrb[0].mxu0
        %v4161 = vadd.f32 %v4097, %v4160
        %v4162 = vpop.f32.mrb[0].mxu0
        %v4163 = vpop.f32.mrb[0].mxu0
        %v4164 = vadd.f32 %v4100, %v4163
        %v4165 = vpop.f32.mrb[0].mxu0
        %4166 = vmatprep.mubr.bf16.mxu0 %v672
        %4167 = vmatmul.mubr.bf16.gmra.mrb[0].mxu0 %v671
        %v4168 = vpop.f32.mrb[0].mxu0
        %v4169 = vadd.f32 %v4105, %v4168
        %v4170 = vpop.f32.mrb[0].mxu0
        %v4171 = vpop.f32.mrb[0].mxu0
        %v4172 = vpop.f32.mrb[0].mxu0
        %4173 = vdwg.mxu0
        %4174 = vmatprep.subr.bf16.mxu0 0
        %4175 = vmatpush1.bf16.msra.mxu0 %v2716
        %4176 = vmatprep.subr.bf16.mxu0 0
        %4177 = vmatpush1.bf16.msra.mxu0 %v2721
        %4178 = vmatprep.subr.bf16.mxu0 0
        %4179 = vmatpush1.bf16.msra.mxu0 %v2726
        %4180 = vmatprep.subr.bf16.mxu0 0
        %4181 = vmatpush1.bf16.msra.mxu0 %v2731
        %4182 = vmatprep.subr.bf16.mxu0 0
        %4183 = vmatpush1.bf16.msra.mxu0 %v2736
        %4184 = vmatprep.subr.bf16.mxu0 0
        %4185 = vmatpush1.bf16.msra.mxu0 %v2741
        %4186 = vmatprep.subr.bf16.mxu0 0
        %4187 = vmatpush1.bf16.msra.mxu0 %v2746
        %4188 = vmatprep.subr.bf16.mxu0 0
        %4189 = vmatpush1.bf16.msra.mxu0 %v2751
        %4190 = vmatprep.subr.bf16.mxu0 0
        %4191 = vmatpush1.bf16.msra.mxu0 %v2756
        %4192 = vmatprep.subr.bf16.mxu0 0
        %4193 = vmatpush1.bf16.msra.mxu0 %v2761
        %4194 = vmatprep.subr.bf16.mxu0 0
        %4195 = vmatpush1.bf16.msra.mxu0 %v2766
        %4196 = vmatprep.subr.bf16.mxu0 0
        %4197 = vmatpush1.bf16.msra.mxu0 %v2771
        %4198 = vmatprep.subr.bf16.mxu0 0
        %4199 = vmatpush1.bf16.msra.mxu0 %v2776
        %4200 = vmatprep.subr.bf16.mxu0 0
        %4201 = vmatpush1.bf16.msra.mxu0 %v2781
        %4202 = vmatprep.subr.bf16.mxu0 0
        %4203 = vmatpush1.bf16.msra.mxu0 %v2786
        %4204 = vmatprep.subr.bf16.mxu0 0
        %4205 = vmatpush1.bf16.msra.mxu0 %v2791
        %4206 = vmatprep.mubr.bf16.mxu0 %v644
        %4207 = vmatmul.mubr.bf16.gmra.mrb[0].mxu0 %v643
        %v4208 = vpop.f32.mrb[0].mxu0
        %v4209 = vadd.f32 %v4145, %v4208
        %v4210 = vpop.f32.mrb[0].mxu0
        %v4211 = vpop.f32.mrb[0].mxu0
        %v4212 = vadd.f32 %v4148, %v4211
        %v4213 = vpop.f32.mrb[0].mxu0
        %4214 = vmatprep.mubr.bf16.mxu0 %v654
        %4215 = vmatmul.mubr.bf16.gmra.mrb[0].mxu0 %v653
        %v4216 = vpop.f32.mrb[0].mxu0
        %v4217 = vadd.f32 %v4153, %v4216
        %v4218 = vpop.f32.mrb[0].mxu0
        %v4219 = vpop.f32.mrb[0].mxu0
        %v4220 = vadd.f32 %v4156, %v4219
        %v4221 = vpop.f32.mrb[0].mxu0
        %4222 = vmatprep.mubr.bf16.mxu0 %v664
        %4223 = vmatmul.mubr.bf16.gmra.mrb[0].mxu0 %v663
        %v4224 = vpop.f32.mrb[0].mxu0
        %v4225 = vadd.f32 %v4161, %v4224
        %v4226 = vpop.f32.mrb[0].mxu0
        %v4227 = vpop.f32.mrb[0].mxu0
        %v4228 = vadd.f32 %v4164, %v4227
        %v4229 = vpop.f32.mrb[0].mxu0
        %4230 = vmatprep.mubr.bf16.mxu0 %v674
        %4231 = vmatmul.mubr.bf16.gmra.mrb[0].mxu0 %v673
        %v4232 = vpop.f32.mrb[0].mxu0
        %v4233 = vadd.f32 %v4169, %v4232
        %v4234 = vpop.f32.mrb[0].mxu0
        %v4235 = vpop.f32.mrb[0].mxu0
        %v4236 = vpop.f32.mrb[0].mxu0
        %4237 = vdwg.mxu0
        %4238 = vmatprep.subr.bf16.mxu0 0
        %4239 = vmatpush1.bf16.msra.mxu0 %v2796
        %4240 = vmatprep.subr.bf16.mxu0 0
        %4241 = vmatpush1.bf16.msra.mxu0 %v2801
        %4242 = vmatprep.subr.bf16.mxu0 0
        %4243 = vmatpush1.bf16.msra.mxu0 %v2806
        %4244 = vmatprep.subr.bf16.mxu0 0
        %4245 = vmatpush1.bf16.msra.mxu0 %v2811
        %4246 = vmatprep.subr.bf16.mxu0 0
        %4247 = vmatpush1.bf16.msra.mxu0 %v2816
        %4248 = vmatprep.subr.bf16.mxu0 0
        %4249 = vmatpush1.bf16.msra.mxu0 %v2821
        %4250 = vmatprep.subr.bf16.mxu0 0
        %4251 = vmatpush1.bf16.msra.mxu0 %v2826
        %4252 = vmatprep.subr.bf16.mxu0 0
        %4253 = vmatpush1.bf16.msra.mxu0 %v2831
        %4254 = vmatprep.subr.bf16.mxu0 0
        %4255 = vmatpush1.bf16.msra.mxu0 %v2836
        %4256 = vmatprep.subr.bf16.mxu0 0
        %4257 = vmatpush1.bf16.msra.mxu0 %v2841
        %4258 = vmatprep.subr.bf16.mxu0 0
        %4259 = vmatpush1.bf16.msra.mxu0 %v2846
        %4260 = vmatprep.subr.bf16.mxu0 0
        %4261 = vmatpush1.bf16.msra.mxu0 %v2851
        %4262 = vmatprep.subr.bf16.mxu0 0
        %4263 = vmatpush1.bf16.msra.mxu0 %v2856
        %4264 = vmatprep.subr.bf16.mxu0 0
        %4265 = vmatpush1.bf16.msra.mxu0 %v2861
        %4266 = vmatprep.subr.bf16.mxu0 0
        %4267 = vmatpush1.bf16.msra.mxu0 %v2866
        %4268 = vmatprep.subr.bf16.mxu0 0
        %4269 = vmatpush1.bf16.msra.mxu0 %v2871
        %4270 = vmatprep.mubr.bf16.mxu0 %v646
        %4271 = vmatmul.mubr.bf16.gmra.mrb[0].mxu0 %v645
        %v4272 = vpop.f32.mrb[0].mxu0
        %v4273 = vadd.f32 %v4209, %v4272
        %v4274 = vpop.f32.mrb[0].mxu0
        %v4275 = vpop.f32.mrb[0].mxu0
        %v4276 = vadd.f32 %v4212, %v4275
        %v4277 = vpop.f32.mrb[0].mxu0
        %4278 = vmatprep.mubr.bf16.mxu0 %v656
        %4279 = vmatmul.mubr.bf16.gmra.mrb[0].mxu0 %v655
        %v4280 = vpop.f32.mrb[0].mxu0
        %v4281 = vadd.f32 %v4217, %v4280
        %v4282 = vpop.f32.mrb[0].mxu0
        %v4283 = vpop.f32.mrb[0].mxu0
        %v4284 = vadd.f32 %v4220, %v4283
        %v4285 = vpop.f32.mrb[0].mxu0
        %4286 = vmatprep.mubr.bf16.mxu0 %v666
        %4287 = vmatmul.mubr.bf16.gmra.mrb[0].mxu0 %v665
        %v4288 = vpop.f32.mrb[0].mxu0
        %v4289 = vadd.f32 %v4225, %v4288
        %v4290 = vpop.f32.mrb[0].mxu0
        %v4291 = vpop.f32.mrb[0].mxu0
        %v4292 = vadd.f32 %v4228, %v4291
        %v4293 = vpop.f32.mrb[0].mxu0
        %4294 = vmatprep.mubr.bf16.mxu0 %v676
        %4295 = vmatmul.mubr.bf16.gmra.mrb[0].mxu0 %v675
        %v4296 = vpop.f32.mrb[0].mxu0
        %v4297 = vadd.f32 %v4233, %v4296
        %v4298 = vpop.f32.mrb[0].mxu0
        %v4299 = vpop.f32.mrb[0].mxu0
        %v4300 = vpop.f32.mrb[0].mxu0
        %4301 = vdwg.mxu0
        %v4302 = vadd.f32 %v677, %v3591
        %v4303 = vadd.f32 %v678, %v3593
        %v4304 = vadd.f32 %v679, %v3946
        %v4305 = vadd.f32 %v680, %v3948
        %v4306 = vadd.f32 %v681, %v4273
        %v4307 = vadd.f32 %v682, %v3595
        %v4308 = vadd.f32 %v683, %v3597
        %v4309 = vadd.f32 %v684, %v3950
        %v4310 = vadd.f32 %v685, %v3952
        %v4311 = vadd.f32 %v686, %v4276
        %v4312 = vadd.f32 %v687, %v3601
        %v4313 = vadd.f32 %v688, %v3603
        %v4314 = vadd.f32 %v689, %v3956
        %v4315 = vadd.f32 %v690, %v3958
        %v4316 = vadd.f32 %v691, %v4281
        %v4317 = vadd.f32 %v692, %v3605
        %v4318 = vadd.f32 %v693, %v3607
        %v4319 = vadd.f32 %v694, %v3960
        %v4320 = vadd.f32 %v695, %v3962
        %v4321 = vadd.f32 %v696, %v4284
        %v4322 = vadd.f32 %v697, %v3611
        %v4323 = vadd.f32 %v698, %v3613
        %v4324 = vadd.f32 %v699, %v3966
        %v4325 = vadd.f32 %v700, %v3968
        %v4326 = vadd.f32 %v701, %v4289
        %v4327 = vadd.f32 %v702, %v3615
        %v4328 = vadd.f32 %v703, %v3617
        %v4329 = vadd.f32 %v704, %v3970
        %v4330 = vadd.f32 %v705, %v3972
        %v4331 = vadd.f32 %v706, %v4292
        %v4332 = vadd.f32 %v707, %v3621
        %v4333 = vadd.f32 %v708, %v3623
        %v4334 = vadd.f32 %v709, %v3976
        %v4335 = vadd.f32 %v710, %v3978
        %v4336 = vadd.f32 %v711, %v4297
        %4337 = vst [vmem:[#allocation2] sm:$0xff] %v4302
        %4338 = vst [vmem:[#allocation2 + $0x8] sm:$0xff] %v4303
        %4339 = vst [vmem:[#allocation2 + $0x10] sm:$0xff] %v4304
        %4340 = vst [vmem:[#allocation2 + $0x18] sm:$0xff] %v4305
        %4341 = vst [vmem:[#allocation2 + $0x20] sm:$0xff] %v4306
        %4342 = vst [vmem:[#allocation2 + $0x28] sm:$0xff] %v4307
        %4343 = vst [vmem:[#allocation2 + $0x30] sm:$0xff] %v4308
        %4344 = vst [vmem:[#allocation2 + $0x38] sm:$0xff] %v4309
        %4345 = vst [vmem:[#allocation2 + $0x40] sm:$0xff] %v4310
        %4346 = vst [vmem:[#allocation2 + $0x48] sm:$0xff] %v4311
        %4347 = vst [vmem:[#allocation2 + $0x50] sm:$0xff] %v4312
        %4348 = vst [vmem:[#allocation2 + $0x58] sm:$0xff] %v4313
        %4349 = vst [vmem:[#allocation2 + $0x60] sm:$0xff] %v4314
        %4350 = vst [vmem:[#allocation2 + $0x68] sm:$0xff] %v4315
        %4351 = vst [vmem:[#allocation2 + $0x70] sm:$0xff] %v4316
        %4352 = vst [vmem:[#allocation2 + $0x78] sm:$0xff] %v4317
        %4353 = vst [vmem:[#allocation2 + $0x80] sm:$0xff] %v4318
        %4354 = vst [vmem:[#allocation2 + $0x88] sm:$0xff] %v4319
        %4355 = vst [vmem:[#allocation2 + $0x90] sm:$0xff] %v4320
        %4356 = vst [vmem:[#allocation2 + $0x98] sm:$0xff] %v4321
        %4357 = vst [vmem:[#allocation2 + $0xa0] sm:$0xff] %v4322
        %4358 = vst [vmem:[#allocation2 + $0xa8] sm:$0xff] %v4323
        %4359 = vst [vmem:[#allocation2 + $0xb0] sm:$0xff] %v4324
        %4360 = vst [vmem:[#allocation2 + $0xb8] sm:$0xff] %v4325
        %4361 = vst [vmem:[#allocation2 + $0xc0] sm:$0xff] %v4326
        %4362 = vst [vmem:[#allocation2 + $0xc8] sm:$0xff] %v4327
        %4363 = vst [vmem:[#allocation2 + $0xd0] sm:$0xff] %v4328
        %4364 = vst [vmem:[#allocation2 + $0xd8] sm:$0xff] %v4329
        %4365 = vst [vmem:[#allocation2 + $0xe0] sm:$0xff] %v4330
        %4366 = vst [vmem:[#allocation2 + $0xe8] sm:$0xff] %v4331
        %4367 = vst [vmem:[#allocation2 + $0xf0] sm:$0x1] %v4332
        %4368 = vst [vmem:[#allocation2 + $0xf8] sm:$0x1] %v4333
        %4369 = vst [vmem:[#allocation2 + $0x100] sm:$0x1] %v4334
        %4370 = vst [vmem:[#allocation2 + $0x108] sm:$0x1] %v4335
        %4371 = vst [vmem:[#allocation2 + $0x110] sm:$0x1] %v4336
        %p4372 = scmp.eq.s32.totalorder %s19, 2
        // Predicated region
        $region60: #{fused_mul_conv1x1.1} parent=50 // pred_check
          %p4373 = pneg %p4372
        $region61: #{fused_mul_conv1x1.1} parent=50 // pred_check_branch
          %4375 = sbr.rel (%p4373) target = $region63
        $region62: #{fused_mul_conv1x1.1} parent=50 // pred_region
          %v4376 = vld [vmem:[#allocation2] sm:$0xff]
          %v4377 = vld [vmem:[#allocation2 + $0x8] sm:$0xff]
          %v4378 = vld [vmem:[#allocation2 + $0x10] sm:$0xff]
          %v4379 = vld [vmem:[#allocation2 + $0x18] sm:$0xff]
          %v4380 = vld [vmem:[#allocation2 + $0x20] sm:$0xff]
          %v4381 = vld [vmem:[#allocation2 + $0x28] sm:$0xff]
          %v4382 = vld [vmem:[#allocation2 + $0x30] sm:$0xff]
          %v4383 = vld [vmem:[#allocation2 + $0x38] sm:$0xff]
          %v4384 = vld [vmem:[#allocation2 + $0x40] sm:$0xff]
          %v4385 = vld [vmem:[#allocation2 + $0x48] sm:$0xff]
          %v4386 = vld [vmem:[#allocation2 + $0x50] sm:$0xff]
          %v4387 = vld [vmem:[#allocation2 + $0x58] sm:$0xff]
          %v4388 = vld [vmem:[#allocation2 + $0x60] sm:$0xff]
          %v4389 = vld [vmem:[#allocation2 + $0x68] sm:$0xff]
          %v4390 = vld [vmem:[#allocation2 + $0x70] sm:$0xff]
          %v4391 = vld [vmem:[#allocation2 + $0x78] sm:$0xff]
          %v4392 = vld [vmem:[#allocation2 + $0x80] sm:$0xff]
          %v4393 = vld [vmem:[#allocation2 + $0x88] sm:$0xff]
          %v4394 = vld [vmem:[#allocation2 + $0x90] sm:$0xff]
          %v4395 = vld [vmem:[#allocation2 + $0x98] sm:$0xff]
          %v4396 = vld [vmem:[#allocation2 + $0xa0] sm:$0xff]
          %v4397 = vld [vmem:[#allocation2 + $0xa8] sm:$0xff]
          %v4398 = vld [vmem:[#allocation2 + $0xb0] sm:$0xff]
          %v4399 = vld [vmem:[#allocation2 + $0xb8] sm:$0xff]
          %v4400 = vld [vmem:[#allocation2 + $0xc0] sm:$0xff]
          %v4401 = vld [vmem:[#allocation2 + $0xc8] sm:$0xff]
          %v4402 = vld [vmem:[#allocation2 + $0xd0] sm:$0xff]
          %v4403 = vld [vmem:[#allocation2 + $0xd8] sm:$0xff]
          %v4404 = vld [vmem:[#allocation2 + $0xe0] sm:$0xff]
          %v4405 = vld [vmem:[#allocation2 + $0xe8] sm:$0xff]
          %v4406 = vld [vmem:[#allocation2 + $0xf0] sm:$0x1]
          %v4407 = vld [vmem:[#allocation2 + $0xf8] sm:$0x1]
          %v4408 = vld [vmem:[#allocation2 + $0x100] sm:$0x1]
          %v4409 = vld [vmem:[#allocation2 + $0x108] sm:$0x1]
          %v4410 = vld [vmem:[#allocation2 + $0x110] sm:$0x1]
          %4411 = vst [vmem:[%s401] sm:$0xff] %v4376
          %4412 = vst [vmem:[%s401 + $0x8] sm:$0xff] %v4377
          %4413 = vst [vmem:[%s401 + $0x10] sm:$0xff] %v4378
          %4414 = vst [vmem:[%s401 + $0x18] sm:$0xff] %v4379
          %4415 = vst [vmem:[%s401 + $0x20] sm:$0xff] %v4380
          %4416 = vst [vmem:[%s401 + $0x28] sm:$0xff] %v4381
          %4417 = vst [vmem:[%s401 + $0x30] sm:$0xff] %v4382
          %4418 = vst [vmem:[%s401 + $0x38] sm:$0xff] %v4383
          %4419 = vst [vmem:[%s401 + $0x40] sm:$0xff] %v4384
          %4420 = vst [vmem:[%s401 + $0x48] sm:$0xff] %v4385
          %4421 = vst [vmem:[%s401 + $0x50] sm:$0xff] %v4386
          %4422 = vst [vmem:[%s401 + $0x58] sm:$0xff] %v4387
          %4423 = vst [vmem:[%s401 + $0x60] sm:$0xff] %v4388
          %4424 = vst [vmem:[%s401 + $0x68] sm:$0xff] %v4389
          %4425 = vst [vmem:[%s401 + $0x70] sm:$0xff] %v4390
          %4426 = vst [vmem:[%s401 + $0x78] sm:$0xff] %v4391
          %4427 = vst [vmem:[%s401 + $0x80] sm:$0xff] %v4392
          %4428 = vst [vmem:[%s401 + $0x88] sm:$0xff] %v4393
          %4429 = vst [vmem:[%s401 + $0x90] sm:$0xff] %v4394
          %4430 = vst [vmem:[%s401 + $0x98] sm:$0xff] %v4395
          %4431 = vst [vmem:[%s401 + $0xa0] sm:$0xff] %v4396
          %4432 = vst [vmem:[%s401 + $0xa8] sm:$0xff] %v4397
          %4433 = vst [vmem:[%s401 + $0xb0] sm:$0xff] %v4398
          %4434 = vst [vmem:[%s401 + $0xb8] sm:$0xff] %v4399
          %4435 = vst [vmem:[%s401 + $0xc0] sm:$0xff] %v4400
          %4436 = vst [vmem:[%s401 + $0xc8] sm:$0xff] %v4401
          %4437 = vst [vmem:[%s401 + $0xd0] sm:$0xff] %v4402
          %4438 = vst [vmem:[%s401 + $0xd8] sm:$0xff] %v4403
          %4439 = vst [vmem:[%s401 + $0xe0] sm:$0xff] %v4404
          %4440 = vst [vmem:[%s401 + $0xe8] sm:$0xff] %v4405
          %4441 = vst [vmem:[%s401 + $0xf0] sm:$0x1] %v4406
          %4442 = vst [vmem:[%s401 + $0xf8] sm:$0x1] %v4407
          %4443 = vst [vmem:[%s401 + $0x100] sm:$0x1] %v4408
          %4444 = vst [vmem:[%s401 + $0x108] sm:$0x1] %v4409
          %4445 = vst [vmem:[%s401 + $0x110] sm:$0x1] %v4410
        $region63: #{fused_mul_conv1x1.1} parent=50 // pred_fallthru
          _
        %s4446 = smul.u32 5, %s18
        %p4447 = scmp.lt.s32.totalorder %s4446, 4
        %s4448 = scalar_select %p4447, %s4446, 4
        %s4449 = smul.addr %s4448, 8
        %s4450 = scalar_lea.vmem %s3, %s4449
        // Predicated region
        $region64: #{fused_mul_conv1x1.1} parent=50 // pred_check
          %p4451 = pneg %p124
        $region65: #{fused_mul_conv1x1.1} parent=50 // pred_check_branch
          %4453 = sbr.rel (%p4451) target = $region67
        $region66: #{fused_mul_conv1x1.1} parent=50 // pred_region
          %s4454 = smul.u32 5, %s18
        $region67: #{fused_mul_conv1x1.1} parent=50 // pred_fallthru
          _
        // Predicated region
        $region68: #{fused_mul_conv1x1.1} parent=50 // pred_check
          %p4455 = pneg %p124
        $region69: #{fused_mul_conv1x1.1} parent=50 // pred_check_branch
          %4457 = sbr.rel (%p4455) target = $region71
        $region70: #{fused_mul_conv1x1.1} parent=50 // pred_region
          %s4458 = smul.u32 5, %s18
          %p4459 = scmp.lt.s32.totalorder %s4458, 4
          %s4460 = scalar_select %p4459, %s4458, 4
          %s4461 = smul.addr %s4460, 8
          %s4462 = scalar_lea.vmem %s3, %s4461
        $region71: #{fused_mul_conv1x1.1} parent=50 // pred_fallthru
          _
      $region51: #{fused_mul_conv1x1.1} parent=5 // pred_fallthru
        _
      %p4463 = scmp.le.s32.totalorder 2, %s9
      // Predicated region
      $region72: #{fused_mul_conv1x1.1} parent=5 // pred_check
        %p4464 = pneg %p4463
      $region73: #{fused_mul_conv1x1.1} parent=5 // pred_check_branch
        %4466 = sbr.rel (%p4464) target = $region75
      $region74: #{fused_mul_conv1x1.1} parent=5 // pred_region
        %s4467 = ssub.s32 %s9, 2
      $region75: #{fused_mul_conv1x1.1} parent=5 // pred_fallthru
        _
    $region6: #{fused_mul_conv1x1.1} parent=1 // loop_footer
      %s13 = sadd.s32 1, %s9
    $region7: #{fused_mul_conv1x1.1} parent=1 // loop_footer_branch
      %8 = sbr.rel target = $region3
    $region8: #{fused_mul_conv1x1.1} parent=1 // loop_exit
      _

</llo_original>
